<compile_context>
chip_gen: v7x
topology: tpu7x:2x2x1
jax: 0.10.0
libtpu: 0.0.40
codegen_flags: <defaults>
</compile_context>

<pallas_src>
import math
import jax
import jax.numpy as jnp
from jax import lax
from jax.experimental import pallas as pl
from jax.experimental.pallas import tpu as pltpu

# ---- config (small synthetic shapes consistent with the module) ----
B = 2              # batch
M = 16             # sequence length
D_IN = 16          # input feature size
H = 4              # num heads
SIZE = 32          # model size
HD = SIZE // H     # head size = 8
NUM_BUCKETS = 300
NEG_BIG = 1e30     # magnitude of the additive key mask (finite -> no NaN)

LOG_M = M.bit_length() - 1      # 4
LOG_HD = HD.bit_length() - 1    # 3
assert (1 << LOG_M) == M and (1 << LOG_HD) == HD


# ---------------- fused Pallas kernel (one grid step per block of Bt batches) ----------------

def _make_kernel(Bt):
    BM = Bt * M          # rows per grid step
    PT = Bt * M * M      # flattened (batch, i, j) pairs per grid step
    f32 = jnp.float32
    bf16 = jnp.bfloat16
    dn_nt = (((1,), (1,)), ((), ()))   # contract last dims of both operands (no transposes)

    def kernel(xk_ref, xv_ref, xq_ref, amask_ref, s_ref,
               wk_ref, bk_ref, wv_ref, bv_ref, wq_ref, bq_ref,
               wo_ref, bo_ref, rtexp_ref, o_ref):
        xk = xk_ref[...]                 # [BM, D_IN]  raw inputs (batch-flattened)
        xv = xv_ref[...]
        xq = xq_ref[...]
        s_rep = s_ref[...]               # [BM, SIZE]  S tiled over heads & batches

        # ---- QKV projections, merged over the whole batch block -------------------
        kp = jnp.dot(xk, wk_ref[...], preferred_element_type=f32) + bk_ref[...]
        vp = jnp.dot(xv, wv_ref[...], preferred_element_type=f32) + bv_ref[...]
        qp = (jnp.dot(xq, wq_ref[...], preferred_element_type=f32) + bq_ref[...]) \
             * (1.0 / math.sqrt(HD))
        kSp = kp + s_rep                 # fold S into keys
        vSp = vp + s_rep                 # fold S into values

        # ---- relative-distance bias for all batches & heads at once ---------------
        # pair index g = b*M*M + i*M + j ; global row r = b*M + i = g >> LOG_M ; j = g & (M-1)
        g_p = lax.broadcasted_iota(jnp.int32, (PT, BM), 0)
        r_p = lax.broadcasted_iota(jnp.int32, (PT, BM), 1)
        sel_i = ((g_p >> LOG_M) == r_p).astype(f32)                               # [PT, BM]
        sel_j = (((g_p >> (2 * LOG_M)) * M + (g_p & (M - 1))) == r_p).astype(f32)  # [PT, BM]
        vi = jnp.dot(sel_i, xv, preferred_element_type=f32)                       # v_{b,i(p)}
        vj = jnp.dot(sel_j, xv, preferred_element_type=f32)                       # v_{b,j(p)}
        diff = vi - vj
        d2 = jnp.sum(diff * diff, axis=-1, keepdims=True)                         # [PT, 1]
        bucket = jnp.clip(d2.astype(jnp.int32), 0, NUM_BUCKETS - 1)               # trunc == .long()
        t_iota = lax.broadcasted_iota(jnp.int32, (PT, NUM_BUCKETS), 1)
        onehot = (bucket == t_iota).astype(bf16)                                  # [PT, 300] (exact 0/1)
        # rtexp[t, h*M + j] = r_table[t, h]  (lane-expanded in the wrapper, bf16)
        r_emb = jnp.dot(onehot, rtexp_ref[...], preferred_element_type=f32)       # [PT, H*M]
        g_r = lax.broadcasted_iota(jnp.int32, (PT, H * M), 0)
        c_c = lax.broadcasted_iota(jnp.int32, (PT, H * M), 1)
        keep_j = ((g_r & (M - 1)) == (c_c & (M - 1))).astype(f32)                 # j(pair)==j(lane)
        c_all = (r_emb * keep_j).astype(bf16)                                     # exact in bf16
        at_r = lax.broadcasted_iota(jnp.int32, (BM, PT), 0)
        at_g = lax.broadcasted_iota(jnp.int32, (BM, PT), 1)
        at_sel = ((at_g >> LOG_M) == at_r).astype(bf16)                           # [BM, PT]
        # rb_all[b*M+i, h*M+j] = r_table[bucket_b[i,j], h]   (one wide scatter matmul)
        rb_all = jnp.dot(at_sel, c_all, preferred_element_type=f32)               # [BM, H*M]

        # ---- block-diagonal head mask: row head-group == col head-group ------------
        bm_r = lax.broadcasted_iota(jnp.int32, (H * M, SIZE), 0)
        bm_c = lax.broadcasted_iota(jnp.int32, (H * M, SIZE), 1)
        head_block = ((bm_r >> LOG_M) == (bm_c >> LOG_HD)).astype(f32)            # [H*M, SIZE]

        amask = amask_ref[...]                                                    # [Bt, H*M] additive

        ctx_parts = []
        for b in range(Bt):                                                       # small static loop
            r0 = b * M
            qp_b = qp[r0:r0 + M, :]                                               # [M, SIZE]
            kS_b = kSp[r0:r0 + M, :]
            vS_b = vSp[r0:r0 + M, :]
            kS_stack = jnp.concatenate([kS_b] * H, axis=0) * head_block           # [H*M, SIZE]
            vS_stack = jnp.concatenate([vS_b] * H, axis=0) * head_block           # [H*M, SIZE]
            # scores[i, h*M+j] = sum_d q[i, h*HD+d] * (k+S)[j, h*HD+d]   (all heads, one push)
            scores = lax.dot_general(qp_b, kS_stack, dn_nt, preferred_element_type=f32)  # [M, H*M]
            scores = scores + rb_all[r0:r0 + M, :] + amask[b:b + 1, :]
            # per-head softmax over each 16-lane key group (VPU/XLU only, no MXU)
            attn_parts = []
            for h in range(H):
                sh = scores[:, h * M:(h + 1) * M]
                mx = jnp.max(sh, axis=-1, keepdims=True)
                e = jnp.exp(sh - mx)
                attn_parts.append(
                    e * pl.reciprocal(jnp.sum(e, axis=-1, keepdims=True), approx=True))
            attn_wide = jnp.concatenate(attn_parts, axis=-1)                      # [M, H*M]
            # TODO(synk): nn.Dropout on the attention map is identity in eval mode;
            # training-time dropout not implemented.
            # ctx[i, h*HD+d] = sum_j attn_h[i,j] * (v+S)[j, h*HD+d]  (all heads, one push)
            ctx_parts.append(jnp.dot(attn_wide, vS_stack, preferred_element_type=f32))  # [M, SIZE]

        ctx = jnp.concatenate(ctx_parts, axis=0)                                  # [BM, SIZE]
        o_ref[...] = jnp.dot(ctx, wo_ref[...], preferred_element_type=f32) + bo_ref[...]

    return kernel


# ---------------- wrapper ----------------

def multi_headed_graph_attention_r(params, k, v, q, mask=None, shared_rl_pe=None,
                                   block_batches=None):
    Bb, Mm, Din = k.shape
    assert Mm == M and Din == D_IN

    Bt = (Bb if Bb <= 8 else 8) if block_batches is None else block_batches
    assert Bb % Bt == 0
    assert Bt == Bb or Bt % 8 == 0          # keep BlockSpec (8,128) rule satisfied
    nb = Bb // Bt
    BM = Bt * Mm

    # ---- cheap host/XLA-side prep ----
    xk = k.reshape(Bb * Mm, Din).astype(jnp.float32)
    xv = v.reshape(Bb * Mm, Din).astype(jnp.float32)
    xq = q.reshape(Bb * Mm, Din).astype(jnp.float32)

    if mask is None:
        mask_f = jnp.ones((Bb, Mm), jnp.float32)
    else:
        mask_f = mask.reshape(Bb, Mm).astype(jnp.float32)
    amask = jnp.tile((mask_f - 1.0) * NEG_BIG, (1, H))             # [B, H*M] additive key mask

    if shared_rl_pe is not None:
        s_pe = jnp.sum(shared_rl_pe, axis=0).astype(jnp.float32)   # S = sum_i pe[i]  [M, HD]
    else:
        s_pe = jnp.zeros((Mm, HD), jnp.float32)
    s_rep = jnp.tile(s_pe, (Bt, H))                                # [Bt*M, SIZE]

    # r_table expanded so the one-hot lookup lands directly in the [., h*M+j] layout
    rtexp = jnp.repeat(params["r_table"], Mm, axis=1).astype(jnp.bfloat16)   # [300, H*M]

    kernel = _make_kernel(Bt)

    def fullspec(arr):
        r, c = arr.shape
        return pl.BlockSpec((r, c), lambda i: (0, 0))

    out2d = pl.pallas_call(
        kernel,
        out_shape=jax.ShapeDtypeStruct((Bb * Mm, SIZE), jnp.float32),
        grid=(nb,),
        in_specs=[pl.BlockSpec((BM, Din), lambda i: (i, 0)),
                  pl.BlockSpec((BM, Din), lambda i: (i, 0)),
                  pl.BlockSpec((BM, Din), lambda i: (i, 0)),
                  pl.BlockSpec((Bt, H * Mm), lambda i: (i, 0)),
                  fullspec(s_rep),
                  fullspec(params["k_wt"]), fullspec(params["k_b"]),
                  fullspec(params["v_wt"]), fullspec(params["v_b"]),
                  fullspec(params["q_wt"]), fullspec(params["q_b"]),
                  fullspec(params["o_wt"]), fullspec(params["o_b"]),
                  fullspec(rtexp)],
        out_specs=pl.BlockSpec((BM, SIZE), lambda i: (i, 0)),
        # "parallel" pays off on v7x only when nb > 1; with the batch block folded
        # (nb == 1 here) a single step amortizes all fixed overhead.
        compiler_params=pltpu.CompilerParams(dimension_semantics=("parallel",)),
    )(xk, xv, xq, amask, s_rep,
      params["k_wt"], params["k_b"], params["v_wt"], params["v_b"],
      params["q_wt"], params["q_b"], params["o_wt"], params["o_b"],
      rtexp)
    return out2d.reshape(Bb, Mm, SIZE)


# ---------------- parameter init (deterministic, kernel-ready layout) ----------------

def init_params(key):
    ks = jax.random.split(key, 9)

    def lin(kw, kb, in_dim, out_dim):
        bound = 1.0 / math.sqrt(in_dim)
        wt = jax.random.uniform(kw, (in_dim, out_dim), jnp.float32, -bound, bound)  # pre-transposed
        b = jax.random.uniform(kb, (1, out_dim), jnp.float32, -bound, bound)
        return wt, b

    p = {}
    p["k_wt"], p["k_b"] = lin(ks[0], ks[1], D_IN, SIZE)
    p["v_wt"], p["v_b"] = lin(ks[2], ks[3], D_IN, SIZE)
    p["q_wt"], p["q_b"] = lin(ks[4], ks[5], D_IN, SIZE)
    p["o_wt"], p["o_b"] = lin(ks[6], ks[7], SIZE, SIZE)
    p["r_table"] = jax.random.normal(ks[8], (NUM_BUCKETS, H), jnp.float32)  # nn.Embedding(300, H)
    return p


# ---------------- pure-JAX reference (eval-mode forward) ----------------

def reference_forward(params, k, v, q, mask, shared_rl_pe):
    # r_table rounded to bf16 to match the kernel's embedding-table precision
    r_table = params["r_table"].astype(jnp.bfloat16).astype(jnp.float32)
    Bb = k.shape[0]
    diff = v[:, :, None, :] - v[:, None, :, :]
    d2 = jnp.sum(diff * diff, axis=-1)
    bucket = jnp.clip(d2.astype(jnp.int32), 0, NUM_BUCKETS - 1)
    r_emb = r_table[bucket]                                        # [B, M, M, H]

    kp = k @ params["k_wt"] + params["k_b"]
    vp = v @ params["v_wt"] + params["v_b"]
    qp = q @ params["q_wt"] + params["q_b"]

    def split(x):                                                  # [B,M,SIZE] -> [B,H,M,HD]
        return x.reshape(Bb, M, H, HD).transpose(0, 2, 1, 3)

    kh, vh, qh = split(kp), split(vp), split(qp)
    qh = qh / math.sqrt(HD)
    S = jnp.sum(shared_rl_pe, axis=0)                              # [M, HD]

    scores = jnp.einsum("bhid,bhjd->bhij", qh, kh) + jnp.einsum("bhid,jd->bhij", qh, S)
    scores = scores + r_emb.transpose(0, 3, 1, 2)
    amask = (mask.astype(jnp.float32).reshape(Bb, 1, 1, M) - 1.0) * NEG_BIG
    scores = scores + amask
    attn = jax.nn.softmax(scores, axis=-1)
    ctx = jnp.einsum("bhij,bhjd->bhid", attn, vh) + jnp.einsum("bhij,jd->bhid", attn, S)
    ctx = ctx.transpose(0, 2, 1, 3).reshape(Bb, M, SIZE)
    return ctx @ params["o_wt"] + params["o_b"]


if __name__ == "__main__":
    key = jax.random.PRNGKey(0)
    kp_, kk_, kv_, kq_, kpe_ = jax.random.split(key, 5)
    params = init_params(kp_)

    k_in = jax.random.normal(kk_, (B, M, D_IN), jnp.float32)
    v_in = jax.random.normal(kv_, (B, M, D_IN), jnp.float32)
    q_in = jax.random.normal(kq_, (B, M, D_IN), jnp.float32)
    shared_rl_pe = 0.1 * jax.random.normal(kpe_, (M, M, HD), jnp.float32)
    mask = jnp.ones((B, 1, M), dtype=bool).at[1, 0, M - 3:].set(False)

    fwd = jax.jit(lambda p, k, v, q, m, pe:
                  multi_headed_graph_attention_r(p, k, v, q, mask=m, shared_rl_pe=pe))
    out = fwd(params, k_in, v_in, q_in, mask, shared_rl_pe)
    out = jax.block_until_ready(out)

    assert out.shape == (B, M, SIZE)
    assert bool(jnp.all(jnp.isfinite(out)))

    # correctness vs. pure-JAX reference (tolerates approx reciprocal / bf16 table /
    # rare bucket-boundary disagreements)
    ref = reference_forward(params, k_in, v_in, q_in, mask, shared_rl_pe)
    err = jnp.abs(out - ref)
    tol = 3e-2 + 3e-2 * jnp.abs(ref)
    frac_bad = float(jnp.mean((err > tol).astype(jnp.float32)))
    assert frac_bad < 0.01, f"mismatch fraction {frac_bad}"

    print("KERNEL_OK")
</pallas_src>

<mosaic_0001>
module attributes {stable_mosaic.version = 11 : i64} {
  func.func @kernel(%arg0: i32, %arg1: memref<32x16xf32, #tpu.memory_space<vmem>>, %arg2: memref<32x16xf32, #tpu.memory_space<vmem>>, %arg3: memref<32x16xf32, #tpu.memory_space<vmem>>, %arg4: memref<2x64xf32, #tpu.memory_space<vmem>>, %arg5: memref<32x32xf32, #tpu.memory_space<vmem>>, %arg6: memref<16x32xf32, #tpu.memory_space<vmem>>, %arg7: memref<1x32xf32, #tpu.memory_space<vmem>>, %arg8: memref<16x32xf32, #tpu.memory_space<vmem>>, %arg9: memref<1x32xf32, #tpu.memory_space<vmem>>, %arg10: memref<16x32xf32, #tpu.memory_space<vmem>>, %arg11: memref<1x32xf32, #tpu.memory_space<vmem>>, %arg12: memref<32x32xf32, #tpu.memory_space<vmem>>, %arg13: memref<1x32xf32, #tpu.memory_space<vmem>>, %arg14: memref<300x64xbf16, #tpu.memory_space<vmem>>, %arg15: memref<32x32xf32, #tpu.memory_space<vmem>>) attributes {dimension_semantics = [#tpu.dimension_semantics<parallel>], iteration_bounds = array<i64: 1>, scalar_prefetch = 0 : i64, scratch_operands = 0 : i64, tpu.core_type = #tpu.core_type<tc>, window_params = [{transform_indices = @transform_0, window_bounds = array<i64: 32, 16>}, {transform_indices = @transform_1, window_bounds = array<i64: 32, 16>}, {transform_indices = @transform_2, window_bounds = array<i64: 32, 16>}, {transform_indices = @transform_3, window_bounds = array<i64: 2, 64>}, {pipeline_mode = #tpu.pipeline_mode<synchronous>, transform_indices = @transform_4, window_bounds = array<i64: 32, 32>}, {pipeline_mode = #tpu.pipeline_mode<synchronous>, transform_indices = @transform_5, window_bounds = array<i64: 16, 32>}, {pipeline_mode = #tpu.pipeline_mode<synchronous>, transform_indices = @transform_6, window_bounds = array<i64: 1, 32>}, {pipeline_mode = #tpu.pipeline_mode<synchronous>, transform_indices = @transform_7, window_bounds = array<i64: 16, 32>}, {pipeline_mode = #tpu.pipeline_mode<synchronous>, transform_indices = @transform_8, window_bounds = array<i64: 1, 32>}, {pipeline_mode = #tpu.pipeline_mode<synchronous>, transform_indices = @transform_9, window_bounds = array<i64: 16, 32>}, {pipeline_mode = #tpu.pipeline_mode<synchronous>, transform_indices = @transform_10, window_bounds = array<i64: 1, 32>}, {pipeline_mode = #tpu.pipeline_mode<synchronous>, transform_indices = @transform_11, window_bounds = array<i64: 32, 32>}, {pipeline_mode = #tpu.pipeline_mode<synchronous>, transform_indices = @transform_12, window_bounds = array<i64: 1, 32>}, {pipeline_mode = #tpu.pipeline_mode<synchronous>, transform_indices = @transform_13, window_bounds = array<i64: 300, 64>}, {transform_indices = @transform_14, window_bounds = array<i64: 32, 32>}]} {
    %c0 = arith.constant 0 : index
    %c0_0 = arith.constant 0 : index
    %0 = vector.load %arg1[%c0, %c0_0] : memref<32x16xf32, #tpu.memory_space<vmem>>, vector<32x16xf32>
    %c0_1 = arith.constant 0 : index
    %c0_2 = arith.constant 0 : index
    %1 = vector.load %arg2[%c0_1, %c0_2] : memref<32x16xf32, #tpu.memory_space<vmem>>, vector<32x16xf32>
    %c0_3 = arith.constant 0 : index
    %c0_4 = arith.constant 0 : index
    %2 = vector.load %arg3[%c0_3, %c0_4] : memref<32x16xf32, #tpu.memory_space<vmem>>, vector<32x16xf32>
    %c0_5 = arith.constant 0 : index
    %c0_6 = arith.constant 0 : index
    %3 = vector.load %arg5[%c0_5, %c0_6] : memref<32x32xf32, #tpu.memory_space<vmem>>, vector<32x32xf32>
    %c0_7 = arith.constant 0 : index
    %c0_8 = arith.constant 0 : index
    %4 = vector.load %arg6[%c0_7, %c0_8] : memref<16x32xf32, #tpu.memory_space<vmem>>, vector<16x32xf32>
    %cst = arith.constant dense<0.000000e+00> : vector<32x32xf32>
    %5 = tpu.matmul %0, %4, %cst {dimension_numbers = #tpu.dot_dimension_numbers<[1], [0], [0], [1], [0, 0, 1, 1], [], []>} : vector<32x16xf32>, vector<16x32xf32>, vector<32x32xf32> -> vector<32x32xf32>
    %c0_9 = arith.constant 0 : index
    %c0_10 = arith.constant 0 : index
    %6 = vector.load %arg7[%c0_9, %c0_10] : memref<1x32xf32, #tpu.memory_space<vmem>>, vector<1x32xf32>
    %7 = vector.broadcast %6 : vector<1x32xf32> to vector<32x32xf32>
    %8 = arith.addf %5, %7 : vector<32x32xf32>
    %c0_11 = arith.constant 0 : index
    %c0_12 = arith.constant 0 : index
    %9 = vector.load %arg8[%c0_11, %c0_12] : memref<16x32xf32, #tpu.memory_space<vmem>>, vector<16x32xf32>
    %cst_13 = arith.constant dense<0.000000e+00> : vector<32x32xf32>
    %10 = tpu.matmul %1, %9, %cst_13 {dimension_numbers = #tpu.dot_dimension_numbers<[1], [0], [0], [1], [0, 0, 1, 1], [], []>} : vector<32x16xf32>, vector<16x32xf32>, vector<32x32xf32> -> vector<32x32xf32>
    %c0_14 = arith.constant 0 : index
    %c0_15 = arith.constant 0 : index
    %11 = vector.load %arg9[%c0_14, %c0_15] : memref<1x32xf32, #tpu.memory_space<vmem>>, vector<1x32xf32>
    %12 = vector.broadcast %11 : vector<1x32xf32> to vector<32x32xf32>
    %13 = arith.addf %10, %12 : vector<32x32xf32>
    %c0_16 = arith.constant 0 : index
    %c0_17 = arith.constant 0 : index
    %14 = vector.load %arg10[%c0_16, %c0_17] : memref<16x32xf32, #tpu.memory_space<vmem>>, vector<16x32xf32>
    %cst_18 = arith.constant dense<0.000000e+00> : vector<32x32xf32>
    %15 = tpu.matmul %2, %14, %cst_18 {dimension_numbers = #tpu.dot_dimension_numbers<[1], [0], [0], [1], [0, 0, 1, 1], [], []>} : vector<32x16xf32>, vector<16x32xf32>, vector<32x32xf32> -> vector<32x32xf32>
    %c0_19 = arith.constant 0 : index
    %c0_20 = arith.constant 0 : index
    %16 = vector.load %arg11[%c0_19, %c0_20] : memref<1x32xf32, #tpu.memory_space<vmem>>, vector<1x32xf32>
    %17 = vector.broadcast %16 : vector<1x32xf32> to vector<32x32xf32>
    %18 = arith.addf %15, %17 : vector<32x32xf32>
    %cst_21 = arith.constant 0.353553385 : f32
    %19 = vector.broadcast %cst_21 : f32 to vector<32x32xf32>
    %20 = arith.mulf %18, %19 : vector<32x32xf32>
    %21 = arith.addf %8, %3 : vector<32x32xf32>
    %22 = arith.addf %13, %3 : vector<32x32xf32>
    %23 = tpu.iota {dimensions = array<i32: 0>} : vector<512x32xi32>
    %24 = tpu.iota {dimensions = array<i32: 1>} : vector<512x32xi32>
    %c4_i32 = arith.constant 4 : i32
    %25 = vector.broadcast %c4_i32 : i32 to vector<512x32xi32>
    %26 = arith.shrsi %23, %25 : vector<512x32xi32>
    %27 = arith.cmpi eq, %26, %24 : vector<512x32xi32>
    %28 = arith.extui %27 : vector<512x32xi1> to vector<512x32xi32>
    %29 = arith.sitofp %28 : vector<512x32xi32> to vector<512x32xf32>
    %c8_i32 = arith.constant 8 : i32
    %30 = vector.broadcast %c8_i32 : i32 to vector<512x32xi32>
    %31 = arith.shrsi %23, %30 : vector<512x32xi32>
    %c16_i32 = arith.constant 16 : i32
    %32 = vector.broadcast %c16_i32 : i32 to vector<512x32xi32>
    %33 = arith.muli %31, %32 : vector<512x32xi32>
    %c15_i32 = arith.constant 15 : i32
    %34 = vector.broadcast %c15_i32 : i32 to vector<512x32xi32>
    %35 = arith.andi %23, %34 : vector<512x32xi32>
    %36 = arith.addi %33, %35 : vector<512x32xi32>
    %37 = arith.cmpi eq, %36, %24 : vector<512x32xi32>
    %38 = arith.extui %37 : vector<512x32xi1> to vector<512x32xi32>
    %39 = arith.sitofp %38 : vector<512x32xi32> to vector<512x32xf32>
    %cst_22 = arith.constant dense<0.000000e+00> : vector<512x16xf32>
    %40 = tpu.matmul %29, %1, %cst_22 {dimension_numbers = #tpu.dot_dimension_numbers<[1], [0], [0], [1], [0, 0, 1, 1], [], []>} : vector<512x32xf32>, vector<32x16xf32>, vector<512x16xf32> -> vector<512x16xf32>
    %cst_23 = arith.constant dense<0.000000e+00> : vector<512x16xf32>
    %41 = tpu.matmul %39, %1, %cst_23 {dimension_numbers = #tpu.dot_dimension_numbers<[1], [0], [0], [1], [0, 0, 1, 1], [], []>} : vector<512x32xf32>, vector<32x16xf32>, vector<512x16xf32> -> vector<512x16xf32>
    %42 = arith.subf %40, %41 : vector<512x16xf32>
    %43 = arith.mulf %42, %42 : vector<512x16xf32>
    %cst_24 = arith.constant dense<0.000000e+00> : vector<512xf32>
    %44 = vector.multi_reduction <add>, %43, %cst_24 [1] : vector<512x16xf32> to vector<512xf32>
    %45 = vector.shape_cast %44 : vector<512xf32> to vector<512x1xf32>
    %46 = arith.fptosi %45 : vector<512x1xf32> to vector<512x1xi32>
    %c0_i32 = arith.constant 0 : i32
    %c299_i32 = arith.constant 299 : i32
    %47 = vector.broadcast %c0_i32 : i32 to vector<512x1xi32>
    %48 = arith.maxsi %47, %46 : vector<512x1xi32>
    %49 = vector.broadcast %c299_i32 : i32 to vector<512x1xi32>
    %50 = arith.minsi %49, %48 : vector<512x1xi32>
    %51 = tpu.iota {dimensions = array<i32: 1>} : vector<512x300xi32>
    %52 = vector.broadcast %50 : vector<512x1xi32> to vector<512x300xi32>
    %53 = arith.cmpi eq, %52, %51 : vector<512x300xi32>
    %54 = arith.extui %53 : vector<512x300xi1> to vector<512x300xi32>
    %55 = arith.sitofp %54 : vector<512x300xi32> to vector<512x300xf32>
    %56 = arith.truncf %55 : vector<512x300xf32> to vector<512x300xbf16>
    %c0_25 = arith.constant 0 : index
    %c0_26 = arith.constant 0 : index
    %57 = vector.load %arg14[%c0_25, %c0_26] : memref<300x64xbf16, #tpu.memory_space<vmem>>, vector<300x64xbf16>
    %cst_27 = arith.constant dense<0.000000e+00> : vector<512x64xf32>
    %58 = tpu.matmul %56, %57, %cst_27 {dimension_numbers = #tpu.dot_dimension_numbers<[1], [0], [0], [1], [0, 0, 1, 1], [], []>} : vector<512x300xbf16>, vector<300x64xbf16>, vector<512x64xf32> -> vector<512x64xf32>
    %59 = tpu.iota {dimensions = array<i32: 0>} : vector<512x64xi32>
    %60 = tpu.iota {dimensions = array<i32: 1>} : vector<512x64xi32>
    %c15_i32_28 = arith.constant 15 : i32
    %61 = vector.broadcast %c15_i32_28 : i32 to vector<512x64xi32>
    %62 = arith.andi %59, %61 : vector<512x64xi32>
    %c15_i32_29 = arith.constant 15 : i32
    %63 = vector.broadcast %c15_i32_29 : i32 to vector<512x64xi32>
    %64 = arith.andi %60, %63 : vector<512x64xi32>
    %65 = arith.cmpi eq, %62, %64 : vector<512x64xi32>
    %66 = arith.extui %65 : vector<512x64xi1> to vector<512x64xi32>
    %67 = arith.sitofp %66 : vector<512x64xi32> to vector<512x64xf32>
    %68 = arith.mulf %58, %67 : vector<512x64xf32>
    %69 = arith.truncf %68 : vector<512x64xf32> to vector<512x64xbf16>
    %70 = tpu.iota {dimensions = array<i32: 0>} : vector<32x512xi32>
    %71 = tpu.iota {dimensions = array<i32: 1>} : vector<32x512xi32>
    %c4_i32_30 = arith.constant 4 : i32
    %72 = vector.broadcast %c4_i32_30 : i32 to vector<32x512xi32>
    %73 = arith.shrsi %71, %72 : vector<32x512xi32>
    %74 = arith.cmpi eq, %73, %70 : vector<32x512xi32>
    %75 = arith.extui %74 : vector<32x512xi1> to vector<32x512xi32>
    %76 = arith.sitofp %75 : vector<32x512xi32> to vector<32x512xf32>
    %77 = arith.truncf %76 : vector<32x512xf32> to vector<32x512xbf16>
    %cst_31 = arith.constant dense<0.000000e+00> : vector<32x64xf32>
    %78 = tpu.matmul %77, %69, %cst_31 {dimension_numbers = #tpu.dot_dimension_numbers<[1], [0], [0], [1], [0, 0, 1, 1], [], []>} : vector<32x512xbf16>, vector<512x64xbf16>, vector<32x64xf32> -> vector<32x64xf32>
    %79 = tpu.iota {dimensions = array<i32: 0>} : vector<64x32xi32>
    %80 = tpu.iota {dimensions = array<i32: 1>} : vector<64x32xi32>
    %c4_i32_32 = arith.constant 4 : i32
    %81 = vector.broadcast %c4_i32_32 : i32 to vector<64x32xi32>
    %82 = arith.shrsi %79, %81 : vector<64x32xi32>
    %c3_i32 = arith.constant 3 : i32
    %83 = vector.broadcast %c3_i32 : i32 to vector<64x32xi32>
    %84 = arith.shrsi %80, %83 : vector<64x32xi32>
    %85 = arith.cmpi eq, %82, %84 : vector<64x32xi32>
    %86 = arith.extui %85 : vector<64x32xi1> to vector<64x32xi32>
    %87 = arith.sitofp %86 : vector<64x32xi32> to vector<64x32xf32>
    %c0_33 = arith.constant 0 : index
    %c0_34 = arith.constant 0 : index
    %88 = vector.load %arg4[%c0_33, %c0_34] : memref<2x64xf32, #tpu.memory_space<vmem>>, vector<2x64xf32>
    %89 = vector.extract_strided_slice %20 {offsets = [0, 0], sizes = [16, 32], strides = [1, 1]} : vector<32x32xf32> to vector<16x32xf32>
    %90 = vector.extract_strided_slice %21 {offsets = [0, 0], sizes = [16, 32], strides = [1, 1]} : vector<32x32xf32> to vector<16x32xf32>
    %91 = vector.extract_strided_slice %22 {offsets = [0, 0], sizes = [16, 32], strides = [1, 1]} : vector<32x32xf32> to vector<16x32xf32>
    %92 = tpu.concatenate %90, %90, %90, %90 in 0 : vector<16x32xf32>, vector<16x32xf32>, vector<16x32xf32>, vector<16x32xf32> -> vector<64x32xf32>
    %93 = arith.mulf %92, %87 : vector<64x32xf32>
    %94 = tpu.concatenate %91, %91, %91, %91 in 0 : vector<16x32xf32>, vector<16x32xf32>, vector<16x32xf32>, vector<16x32xf32> -> vector<64x32xf32>
    %95 = arith.mulf %94, %87 : vector<64x32xf32>
    %cst_35 = arith.constant dense<0.000000e+00> : vector<16x64xf32>
    %96 = tpu.matmul %89, %93, %cst_35 {dimension_numbers = #tpu.dot_dimension_numbers<[1], [1], [0], [0], [0, 0, 1, 0], [], []>} : vector<16x32xf32>, vector<64x32xf32>, vector<16x64xf32> -> vector<16x64xf32>
    %97 = vector.extract_strided_slice %78 {offsets = [0, 0], sizes = [16, 64], strides = [1, 1]} : vector<32x64xf32> to vector<16x64xf32>
    %98 = arith.addf %96, %97 : vector<16x64xf32>
    %99 = vector.extract_strided_slice %88 {offsets = [0, 0], sizes = [1, 64], strides = [1, 1]} : vector<2x64xf32> to vector<1x64xf32>
    %100 = vector.broadcast %99 : vector<1x64xf32> to vector<16x64xf32>
    %101 = arith.addf %98, %100 : vector<16x64xf32>
    %102 = vector.extract_strided_slice %101 {offsets = [0, 0], sizes = [16, 16], strides = [1, 1]} : vector<16x64xf32> to vector<16x16xf32>
    %cst_36 = arith.constant dense<0xFF800000> : vector<16xf32>
    %103 = vector.multi_reduction <maximumf>, %102, %cst_36 [1] : vector<16x16xf32> to vector<16xf32>
    %104 = vector.shape_cast %103 : vector<16xf32> to vector<16x1xf32>
    %105 = vector.broadcast %104 : vector<16x1xf32> to vector<16x16xf32>
    %106 = arith.subf %102, %105 : vector<16x16xf32>
    %107 = math.exp %106 : vector<16x16xf32>
    %cst_37 = arith.constant dense<0.000000e+00> : vector<16xf32>
    %108 = vector.multi_reduction <add>, %107, %cst_37 [1] : vector<16x16xf32> to vector<16xf32>
    %109 = vector.shape_cast %108 : vector<16xf32> to vector<16x1xf32>
    %110 = tpu.reciprocal %109 {approx = true} : vector<16x1xf32> -> vector<16x1xf32>
    %111 = vector.broadcast %110 : vector<16x1xf32> to vector<16x16xf32>
    %112 = arith.mulf %107, %111 : vector<16x16xf32>
    %113 = vector.extract_strided_slice %101 {offsets = [0, 16], sizes = [16, 16], strides = [1, 1]} : vector<16x64xf32> to vector<16x16xf32>
    %cst_38 = arith.constant dense<0xFF800000> : vector<16xf32>
    %114 = vector.multi_reduction <maximumf>, %113, %cst_38 [1] : vector<16x16xf32> to vector<16xf32>
    %115 = vector.shape_cast %114 : vector<16xf32> to vector<16x1xf32>
    %116 = vector.broadcast %115 : vector<16x1xf32> to vector<16x16xf32>
    %117 = arith.subf %113, %116 : vector<16x16xf32>
    %118 = math.exp %117 : vector<16x16xf32>
    %cst_39 = arith.constant dense<0.000000e+00> : vector<16xf32>
    %119 = vector.multi_reduction <add>, %118, %cst_39 [1] : vector<16x16xf32> to vector<16xf32>
    %120 = vector.shape_cast %119 : vector<16xf32> to vector<16x1xf32>
    %121 = tpu.reciprocal %120 {approx = true} : vector<16x1xf32> -> vector<16x1xf32>
    %122 = vector.broadcast %121 : vector<16x1xf32> to vector<16x16xf32>
    %123 = arith.mulf %118, %122 : vector<16x16xf32>
    %124 = vector.extract_strided_slice %101 {offsets = [0, 32], sizes = [16, 16], strides = [1, 1]} : vector<16x64xf32> to vector<16x16xf32>
    %cst_40 = arith.constant dense<0xFF800000> : vector<16xf32>
    %125 = vector.multi_reduction <maximumf>, %124, %cst_40 [1] : vector<16x16xf32> to vector<16xf32>
    %126 = vector.shape_cast %125 : vector<16xf32> to vector<16x1xf32>
    %127 = vector.broadcast %126 : vector<16x1xf32> to vector<16x16xf32>
    %128 = arith.subf %124, %127 : vector<16x16xf32>
    %129 = math.exp %128 : vector<16x16xf32>
    %cst_41 = arith.constant dense<0.000000e+00> : vector<16xf32>
    %130 = vector.multi_reduction <add>, %129, %cst_41 [1] : vector<16x16xf32> to vector<16xf32>
    %131 = vector.shape_cast %130 : vector<16xf32> to vector<16x1xf32>
    %132 = tpu.reciprocal %131 {approx = true} : vector<16x1xf32> -> vector<16x1xf32>
    %133 = vector.broadcast %132 : vector<16x1xf32> to vector<16x16xf32>
    %134 = arith.mulf %129, %133 : vector<16x16xf32>
    %135 = vector.extract_strided_slice %101 {offsets = [0, 48], sizes = [16, 16], strides = [1, 1]} : vector<16x64xf32> to vector<16x16xf32>
    %cst_42 = arith.constant dense<0xFF800000> : vector<16xf32>
    %136 = vector.multi_reduction <maximumf>, %135, %cst_42 [1] : vector<16x16xf32> to vector<16xf32>
    %137 = vector.shape_cast %136 : vector<16xf32> to vector<16x1xf32>
    %138 = vector.broadcast %137 : vector<16x1xf32> to vector<16x16xf32>
    %139 = arith.subf %135, %138 : vector<16x16xf32>
    %140 = math.exp %139 : vector<16x16xf32>
    %cst_43 = arith.constant dense<0.000000e+00> : vector<16xf32>
    %141 = vector.multi_reduction <add>, %140, %cst_43 [1] : vector<16x16xf32> to vector<16xf32>
    %142 = vector.shape_cast %141 : vector<16xf32> to vector<16x1xf32>
    %143 = tpu.reciprocal %142 {approx = true} : vector<16x1xf32> -> vector<16x1xf32>
    %144 = vector.broadcast %143 : vector<16x1xf32> to vector<16x16xf32>
    %145 = arith.mulf %140, %144 : vector<16x16xf32>
    %146 = tpu.concatenate %112, %123, %134, %145 in 1 : vector<16x16xf32>, vector<16x16xf32>, vector<16x16xf32>, vector<16x16xf32> -> vector<16x64xf32>
    %cst_44 = arith.constant dense<0.000000e+00> : vector<16x32xf32>
    %147 = tpu.matmul %146, %95, %cst_44 {dimension_numbers = #tpu.dot_dimension_numbers<[1], [0], [0], [1], [0, 0, 1, 1], [], []>} : vector<16x64xf32>, vector<64x32xf32>, vector<16x32xf32> -> vector<16x32xf32>
    %148 = vector.extract_strided_slice %20 {offsets = [16, 0], sizes = [16, 32], strides = [1, 1]} : vector<32x32xf32> to vector<16x32xf32>
    %149 = vector.extract_strided_slice %21 {offsets = [16, 0], sizes = [16, 32], strides = [1, 1]} : vector<32x32xf32> to vector<16x32xf32>
    %150 = vector.extract_strided_slice %22 {offsets = [16, 0], sizes = [16, 32], strides = [1, 1]} : vector<32x32xf32> to vector<16x32xf32>
    %151 = tpu.concatenate %149, %149, %149, %149 in 0 : vector<16x32xf32>, vector<16x32xf32>, vector<16x32xf32>, vector<16x32xf32> -> vector<64x32xf32>
    %152 = arith.mulf %151, %87 : vector<64x32xf32>
    %153 = tpu.concatenate %150, %150, %150, %150 in 0 : vector<16x32xf32>, vector<16x32xf32>, vector<16x32xf32>, vector<16x32xf32> -> vector<64x32xf32>
    %154 = arith.mulf %153, %87 : vector<64x32xf32>
    %cst_45 = arith.constant dense<0.000000e+00> : vector<16x64xf32>
    %155 = tpu.matmul %148, %152, %cst_45 {dimension_numbers = #tpu.dot_dimension_numbers<[1], [1], [0], [0], [0, 0, 1, 0], [], []>} : vector<16x32xf32>, vector<64x32xf32>, vector<16x64xf32> -> vector<16x64xf32>
    %156 = vector.extract_strided_slice %78 {offsets = [16, 0], sizes = [16, 64], strides = [1, 1]} : vector<32x64xf32> to vector<16x64xf32>
    %157 = arith.addf %155, %156 : vector<16x64xf32>
    %158 = vector.extract_strided_slice %88 {offsets = [1, 0], sizes = [1, 64], strides = [1, 1]} : vector<2x64xf32> to vector<1x64xf32>
    %159 = vector.broadcast %158 : vector<1x64xf32> to vector<16x64xf32>
    %160 = arith.addf %157, %159 : vector<16x64xf32>
    %161 = vector.extract_strided_slice %160 {offsets = [0, 0], sizes = [16, 16], strides = [1, 1]} : vector<16x64xf32> to vector<16x16xf32>
    %cst_46 = arith.constant dense<0xFF800000> : vector<16xf32>
    %162 = vector.multi_reduction <maximumf>, %161, %cst_46 [1] : vector<16x16xf32> to vector<16xf32>
    %163 = vector.shape_cast %162 : vector<16xf32> to vector<16x1xf32>
    %164 = vector.broadcast %163 : vector<16x1xf32> to vector<16x16xf32>
    %165 = arith.subf %161, %164 : vector<16x16xf32>
    %166 = math.exp %165 : vector<16x16xf32>
    %cst_47 = arith.constant dense<0.000000e+00> : vector<16xf32>
    %167 = vector.multi_reduction <add>, %166, %cst_47 [1] : vector<16x16xf32> to vector<16xf32>
    %168 = vector.shape_cast %167 : vector<16xf32> to vector<16x1xf32>
    %169 = tpu.reciprocal %168 {approx = true} : vector<16x1xf32> -> vector<16x1xf32>
    %170 = vector.broadcast %169 : vector<16x1xf32> to vector<16x16xf32>
    %171 = arith.mulf %166, %170 : vector<16x16xf32>
    %172 = vector.extract_strided_slice %160 {offsets = [0, 16], sizes = [16, 16], strides = [1, 1]} : vector<16x64xf32> to vector<16x16xf32>
    %cst_48 = arith.constant dense<0xFF800000> : vector<16xf32>
    %173 = vector.multi_reduction <maximumf>, %172, %cst_48 [1] : vector<16x16xf32> to vector<16xf32>
    %174 = vector.shape_cast %173 : vector<16xf32> to vector<16x1xf32>
    %175 = vector.broadcast %174 : vector<16x1xf32> to vector<16x16xf32>
    %176 = arith.subf %172, %175 : vector<16x16xf32>
    %177 = math.exp %176 : vector<16x16xf32>
    %cst_49 = arith.constant dense<0.000000e+00> : vector<16xf32>
    %178 = vector.multi_reduction <add>, %177, %cst_49 [1] : vector<16x16xf32> to vector<16xf32>
    %179 = vector.shape_cast %178 : vector<16xf32> to vector<16x1xf32>
    %180 = tpu.reciprocal %179 {approx = true} : vector<16x1xf32> -> vector<16x1xf32>
    %181 = vector.broadcast %180 : vector<16x1xf32> to vector<16x16xf32>
    %182 = arith.mulf %177, %181 : vector<16x16xf32>
    %183 = vector.extract_strided_slice %160 {offsets = [0, 32], sizes = [16, 16], strides = [1, 1]} : vector<16x64xf32> to vector<16x16xf32>
    %cst_50 = arith.constant dense<0xFF800000> : vector<16xf32>
    %184 = vector.multi_reduction <maximumf>, %183, %cst_50 [1] : vector<16x16xf32> to vector<16xf32>
    %185 = vector.shape_cast %184 : vector<16xf32> to vector<16x1xf32>
    %186 = vector.broadcast %185 : vector<16x1xf32> to vector<16x16xf32>
    %187 = arith.subf %183, %186 : vector<16x16xf32>
    %188 = math.exp %187 : vector<16x16xf32>
    %cst_51 = arith.constant dense<0.000000e+00> : vector<16xf32>
    %189 = vector.multi_reduction <add>, %188, %cst_51 [1] : vector<16x16xf32> to vector<16xf32>
    %190 = vector.shape_cast %189 : vector<16xf32> to vector<16x1xf32>
    %191 = tpu.reciprocal %190 {approx = true} : vector<16x1xf32> -> vector<16x1xf32>
    %192 = vector.broadcast %191 : vector<16x1xf32> to vector<16x16xf32>
    %193 = arith.mulf %188, %192 : vector<16x16xf32>
    %194 = vector.extract_strided_slice %160 {offsets = [0, 48], sizes = [16, 16], strides = [1, 1]} : vector<16x64xf32> to vector<16x16xf32>
    %cst_52 = arith.constant dense<0xFF800000> : vector<16xf32>
    %195 = vector.multi_reduction <maximumf>, %194, %cst_52 [1] : vector<16x16xf32> to vector<16xf32>
    %196 = vector.shape_cast %195 : vector<16xf32> to vector<16x1xf32>
    %197 = vector.broadcast %196 : vector<16x1xf32> to vector<16x16xf32>
    %198 = arith.subf %194, %197 : vector<16x16xf32>
    %199 = math.exp %198 : vector<16x16xf32>
    %cst_53 = arith.constant dense<0.000000e+00> : vector<16xf32>
    %200 = vector.multi_reduction <add>, %199, %cst_53 [1] : vector<16x16xf32> to vector<16xf32>
    %201 = vector.shape_cast %200 : vector<16xf32> to vector<16x1xf32>
    %202 = tpu.reciprocal %201 {approx = true} : vector<16x1xf32> -> vector<16x1xf32>
    %203 = vector.broadcast %202 : vector<16x1xf32> to vector<16x16xf32>
    %204 = arith.mulf %199, %203 : vector<16x16xf32>
    %205 = tpu.concatenate %171, %182, %193, %204 in 1 : vector<16x16xf32>, vector<16x16xf32>, vector<16x16xf32>, vector<16x16xf32> -> vector<16x64xf32>
    %cst_54 = arith.constant dense<0.000000e+00> : vector<16x32xf32>
    %206 = tpu.matmul %205, %154, %cst_54 {dimension_numbers = #tpu.dot_dimension_numbers<[1], [0], [0], [1], [0, 0, 1, 1], [], []>} : vector<16x64xf32>, vector<64x32xf32>, vector<16x32xf32> -> vector<16x32xf32>
    %207 = tpu.concatenate %147, %206 in 0 : vector<16x32xf32>, vector<16x32xf32> -> vector<32x32xf32>
    %c0_55 = arith.constant 0 : index
    %c0_56 = arith.constant 0 : index
    %208 = vector.load %arg12[%c0_55, %c0_56] : memref<32x32xf32, #tpu.memory_space<vmem>>, vector<32x32xf32>
    %cst_57 = arith.constant dense<0.000000e+00> : vector<32x32xf32>
    %209 = tpu.matmul %207, %208, %cst_57 {dimension_numbers = #tpu.dot_dimension_numbers<[1], [0], [0], [1], [0, 0, 1, 1], [], []>} : vector<32x32xf32>, vector<32x32xf32>, vector<32x32xf32> -> vector<32x32xf32>
    %c0_58 = arith.constant 0 : index
    %c0_59 = arith.constant 0 : index
    %210 = vector.load %arg13[%c0_58, %c0_59] : memref<1x32xf32, #tpu.memory_space<vmem>>, vector<1x32xf32>
    %211 = vector.broadcast %210 : vector<1x32xf32> to vector<32x32xf32>
    %212 = arith.addf %209, %211 : vector<32x32xf32>
    %c0_60 = arith.constant 0 : index
    %c0_61 = arith.constant 0 : index
    %213 = vector.load %arg15[%c0_60, %c0_61] : memref<32x32xf32, #tpu.memory_space<vmem>>, vector<32x32xf32>
    tpu.vector_store %arg15[%c0_60, %c0_61], %212 {strides = array<i32>} : memref<32x32xf32, #tpu.memory_space<vmem>>, vector<32x32xf32>,
    return
  }
  func.func @transform_0(%arg0: i32) -> (i32, i32) {
    %c0_i32 = arith.constant 0 : i32
    %c0_i32_0 = arith.constant 0 : i32
    return %arg0, %c0_i32 : i32, i32
  }
  func.func @transform_1(%arg0: i32) -> (i32, i32) {
    %c0_i32 = arith.constant 0 : i32
    %c0_i32_0 = arith.constant 0 : i32
    return %arg0, %c0_i32 : i32, i32
  }
  func.func @transform_2(%arg0: i32) -> (i32, i32) {
    %c0_i32 = arith.constant 0 : i32
    %c0_i32_0 = arith.constant 0 : i32
    return %arg0, %c0_i32 : i32, i32
  }
  func.func @transform_3(%arg0: i32) -> (i32, i32) {
    %c0_i32 = arith.constant 0 : i32
    %c0_i32_0 = arith.constant 0 : i32
    return %arg0, %c0_i32 : i32, i32
  }
  func.func @transform_4(%arg0: i32) -> (i32, i32) {
    %c0_i32 = arith.constant 0 : i32
    %c0_i32_0 = arith.constant 0 : i32
    %c0_i32_1 = arith.constant 0 : i32
    return %c0_i32, %c0_i32_0 : i32, i32
  }
  func.func @transform_5(%arg0: i32) -> (i32, i32) {
    %c0_i32 = arith.constant 0 : i32
    %c0_i32_0 = arith.constant 0 : i32
    %c0_i32_1 = arith.constant 0 : i32
    return %c0_i32, %c0_i32_0 : i32, i32
  }
  func.func @transform_6(%arg0: i32) -> (i32, i32) {
    %c0_i32 = arith.constant 0 : i32
    %c0_i32_0 = arith.constant 0 : i32
    %c0_i32_1 = arith.constant 0 : i32
    return %c0_i32, %c0_i32_0 : i32, i32
  }
  func.func @transform_7(%arg0: i32) -> (i32, i32) {
    %c0_i32 = arith.constant 0 : i32
    %c0_i32_0 = arith.constant 0 : i32
    %c0_i32_1 = arith.constant 0 : i32
    return %c0_i32, %c0_i32_0 : i32, i32
  }
  func.func @transform_8(%arg0: i32) -> (i32, i32) {
    %c0_i32 = arith.constant 0 : i32
    %c0_i32_0 = arith.constant 0 : i32
    %c0_i32_1 = arith.constant 0 : i32
    return %c0_i32, %c0_i32_0 : i32, i32
  }
  func.func @transform_9(%arg0: i32) -> (i32, i32) {
    %c0_i32 = arith.constant 0 : i32
    %c0_i32_0 = arith.constant 0 : i32
    %c0_i32_1 = arith.constant 0 : i32
    return %c0_i32, %c0_i32_0 : i32, i32
  }
  func.func @transform_10(%arg0: i32) -> (i32, i32) {
    %c0_i32 = arith.constant 0 : i32
    %c0_i32_0 = arith.constant 0 : i32
    %c0_i32_1 = arith.constant 0 : i32
    return %c0_i32, %c0_i32_0 : i32, i32
  }
  func.func @transform_11(%arg0: i32) -> (i32, i32) {
    %c0_i32 = arith.constant 0 : i32
    %c0_i32_0 = arith.constant 0 : i32
    %c0_i32_1 = arith.constant 0 : i32
    return %c0_i32, %c0_i32_0 : i32, i32
  }
  func.func @transform_12(%arg0: i32) -> (i32, i32) {
    %c0_i32 = arith.constant 0 : i32
    %c0_i32_0 = arith.constant 0 : i32
    %c0_i32_1 = arith.constant 0 : i32
    return %c0_i32, %c0_i32_0 : i32, i32
  }
  func.func @transform_13(%arg0: i32) -> (i32, i32) {
    %c0_i32 = arith.constant 0 : i32
    %c0_i32_0 = arith.constant 0 : i32
    %c0_i32_1 = arith.constant 0 : i32
    return %c0_i32, %c0_i32_0 : i32, i32
  }
  func.func @transform_14(%arg0: i32) -> (i32, i32) {
    %c0_i32 = arith.constant 0 : i32
    %c0_i32_0 = arith.constant 0 : i32
    return %arg0, %c0_i32 : i32, i32
  }
}

</mosaic_0001>

<llo_original>
// kernel: tile.18
$region0: #{tile.18}
  #allocation0 [shape = 's32[1]{0}', space=sflag, size = 0x4, scoped, tag = 'scoped memory for tile.18']
  %s0 = inlined_call_operand.vmem [shape: f32[16,8], index: 0, kind: input, shape index: {}]
  %s1 = inlined_call_operand.vmem [shape: f32[2,16,4,8], index: 1, kind: output, shape index: {}]
  // Predicated region
  $region2: #{tile.18} parent=0 // pred_check
    _
  $region3: #{tile.18} parent=0 // pred_check_branch
    %3 = sbr.rel (0) target = $region5
  $region4: #{tile.18} parent=0 // pred_region
    _
  $region5: #{tile.18} parent=0 // pred_fallthru
    _
  %v4 = vld [vmem:[%s0] ss:$0 sm:$0xff]
  %5 = vst [vmem:[%s1] sm:$0x3] %v4
  %s6 = scalar_lea.vmem %s1, 16
  %7 = vst [vmem:[%s6] sm:$0x3] %v4
  %s8 = scalar_lea.vmem %s1, 32
  %9 = vst [vmem:[%s8] sm:$0x3] %v4
  %s10 = scalar_lea.vmem %s1, 48
  %11 = vst [vmem:[%s10] sm:$0x3] %v4
  %s12 = scalar_lea.vmem %s0, 1
  %v13 = vld [vmem:[%s12] ss:$0 sm:$0xff]
  %s14 = scalar_lea.vmem %s1, 2
  %15 = vst [vmem:[%s14] sm:$0x3] %v13
  %s16 = scalar_lea.vmem %s1, 18
  %17 = vst [vmem:[%s16] sm:$0x3] %v13
  %s18 = scalar_lea.vmem %s1, 34
  %19 = vst [vmem:[%s18] sm:$0x3] %v13
  %s20 = scalar_lea.vmem %s1, 50
  %21 = vst [vmem:[%s20] sm:$0x3] %v13
  %s22 = scalar_lea.vmem %s0, 2
  %v23 = vld [vmem:[%s22] ss:$0 sm:$0xff]
  %s24 = scalar_lea.vmem %s1, 4
  %25 = vst [vmem:[%s24] sm:$0x3] %v23
  %s26 = scalar_lea.vmem %s1, 20
  %27 = vst [vmem:[%s26] sm:$0x3] %v23
  %s28 = scalar_lea.vmem %s1, 36
  %29 = vst [vmem:[%s28] sm:$0x3] %v23
  %s30 = scalar_lea.vmem %s1, 52
  %31 = vst [vmem:[%s30] sm:$0x3] %v23
  %s32 = scalar_lea.vmem %s0, 3
  %v33 = vld [vmem:[%s32] ss:$0 sm:$0xff]
  %s34 = scalar_lea.vmem %s1, 6
  %35 = vst [vmem:[%s34] sm:$0x3] %v33
  %s36 = scalar_lea.vmem %s1, 22
  %37 = vst [vmem:[%s36] sm:$0x3] %v33
  %s38 = scalar_lea.vmem %s1, 38
  %39 = vst [vmem:[%s38] sm:$0x3] %v33
  %s40 = scalar_lea.vmem %s1, 54
  %41 = vst [vmem:[%s40] sm:$0x3] %v33
  %s42 = scalar_lea.vmem %s0, 4
  %v43 = vld [vmem:[%s42] ss:$0 sm:$0xff]
  %s44 = scalar_lea.vmem %s1, 8
  %45 = vst [vmem:[%s44] sm:$0x3] %v43
  %s46 = scalar_lea.vmem %s1, 24
  %47 = vst [vmem:[%s46] sm:$0x3] %v43
  %s48 = scalar_lea.vmem %s1, 40
  %49 = vst [vmem:[%s48] sm:$0x3] %v43
  %s50 = scalar_lea.vmem %s1, 56
  %51 = vst [vmem:[%s50] sm:$0x3] %v43
  %s52 = scalar_lea.vmem %s0, 5
  %v53 = vld [vmem:[%s52] ss:$0 sm:$0xff]
  %s54 = scalar_lea.vmem %s1, 10
  %55 = vst [vmem:[%s54] sm:$0x3] %v53
  %s56 = scalar_lea.vmem %s1, 26
  %57 = vst [vmem:[%s56] sm:$0x3] %v53
  %s58 = scalar_lea.vmem %s1, 42
  %59 = vst [vmem:[%s58] sm:$0x3] %v53
  %s60 = scalar_lea.vmem %s1, 58
  %61 = vst [vmem:[%s60] sm:$0x3] %v53
  %s62 = scalar_lea.vmem %s0, 6
  %v63 = vld [vmem:[%s62] ss:$0 sm:$0xff]
  %s64 = scalar_lea.vmem %s1, 12
  %65 = vst [vmem:[%s64] sm:$0x3] %v63
  %s66 = scalar_lea.vmem %s1, 28
  %67 = vst [vmem:[%s66] sm:$0x3] %v63
  %s68 = scalar_lea.vmem %s1, 44
  %69 = vst [vmem:[%s68] sm:$0x3] %v63
  %s70 = scalar_lea.vmem %s1, 60
  %71 = vst [vmem:[%s70] sm:$0x3] %v63
  %s72 = scalar_lea.vmem %s0, 7
  %v73 = vld [vmem:[%s72] ss:$0 sm:$0xff]
  %s74 = scalar_lea.vmem %s1, 14
  %75 = vst [vmem:[%s74] sm:$0x3] %v73
  %s76 = scalar_lea.vmem %s1, 30
  %77 = vst [vmem:[%s76] sm:$0x3] %v73
  %s78 = scalar_lea.vmem %s1, 46
  %79 = vst [vmem:[%s78] sm:$0x3] %v73
  %s80 = scalar_lea.vmem %s1, 62
  %81 = vst [vmem:[%s80] sm:$0x3] %v73

// kernel: tile.19
$region0: #{tile.19}
  %s0 = inlined_call_operand.vmem [shape: f32[2,16,4,8], index: 0, kind: input, shape index: {}]
  %s1 = inlined_call_operand.vmem [shape: f32[32,32], index: 1, kind: output, shape index: {}]
  $region1: #{tile.19} parent=0
    #allocation0 [shape = 'u8[131072]{0}', space=vmem, size = 0x20000, scoped, tag = 'scoped mem for input reshape']
    %s3 = sshllo.u32 0, 2
    %s4 = smul.addr 2, 31
    %s5 = scalar_lea.vmem %s0, %s4
    %v6 = vld [vmem:[%s5] sm:%s3]
    %s7 = scalar_lea.vmem [#allocation0], 248
    %8 = vst [vmem:[%s7] sm:%s3] %v6
    %s9 = smul.addr 2, 30
    %s10 = scalar_lea.vmem %s0, %s9
    %v11 = vld [vmem:[%s10] sm:%s3]
    %s12 = scalar_lea.vmem [#allocation0], 240
    %13 = vst [vmem:[%s12] sm:%s3] %v11
    %s14 = smul.addr 2, 29
    %s15 = scalar_lea.vmem %s0, %s14
    %v16 = vld [vmem:[%s15] sm:%s3]
    %s17 = scalar_lea.vmem [#allocation0], 232
    %18 = vst [vmem:[%s17] sm:%s3] %v16
    %s19 = smul.addr 2, 28
    %s20 = scalar_lea.vmem %s0, %s19
    %v21 = vld [vmem:[%s20] sm:%s3]
    %s22 = scalar_lea.vmem [#allocation0], 224
    %23 = vst [vmem:[%s22] sm:%s3] %v21
    %s24 = smul.addr 2, 27
    %s25 = scalar_lea.vmem %s0, %s24
    %v26 = vld [vmem:[%s25] sm:%s3]
    %s27 = scalar_lea.vmem [#allocation0], 216
    %28 = vst [vmem:[%s27] sm:%s3] %v26
    %s29 = smul.addr 2, 26
    %s30 = scalar_lea.vmem %s0, %s29
    %v31 = vld [vmem:[%s30] sm:%s3]
    %s32 = scalar_lea.vmem [#allocation0], 208
    %33 = vst [vmem:[%s32] sm:%s3] %v31
    %s34 = smul.addr 2, 25
    %s35 = scalar_lea.vmem %s0, %s34
    %v36 = vld [vmem:[%s35] sm:%s3]
    %s37 = scalar_lea.vmem [#allocation0], 200
    %38 = vst [vmem:[%s37] sm:%s3] %v36
    %s39 = smul.addr 2, 24
    %s40 = scalar_lea.vmem %s0, %s39
    %v41 = vld [vmem:[%s40] sm:%s3]
    %s42 = scalar_lea.vmem [#allocation0], 192
    %43 = vst [vmem:[%s42] sm:%s3] %v41
    %s44 = smul.addr 2, 23
    %s45 = scalar_lea.vmem %s0, %s44
    %v46 = vld [vmem:[%s45] sm:%s3]
    %s47 = scalar_lea.vmem [#allocation0], 184
    %48 = vst [vmem:[%s47] sm:%s3] %v46
    %s49 = smul.addr 2, 22
    %s50 = scalar_lea.vmem %s0, %s49
    %v51 = vld [vmem:[%s50] sm:%s3]
    %s52 = scalar_lea.vmem [#allocation0], 176
    %53 = vst [vmem:[%s52] sm:%s3] %v51
    %s54 = smul.addr 2, 21
    %s55 = scalar_lea.vmem %s0, %s54
    %v56 = vld [vmem:[%s55] sm:%s3]
    %s57 = scalar_lea.vmem [#allocation0], 168
    %58 = vst [vmem:[%s57] sm:%s3] %v56
    %s59 = smul.addr 2, 20
    %s60 = scalar_lea.vmem %s0, %s59
    %v61 = vld [vmem:[%s60] sm:%s3]
    %s62 = scalar_lea.vmem [#allocation0], 160
    %63 = vst [vmem:[%s62] sm:%s3] %v61
    %s64 = smul.addr 2, 19
    %s65 = scalar_lea.vmem %s0, %s64
    %v66 = vld [vmem:[%s65] sm:%s3]
    %s67 = scalar_lea.vmem [#allocation0], 152
    %68 = vst [vmem:[%s67] sm:%s3] %v66
    %s69 = smul.addr 2, 18
    %s70 = scalar_lea.vmem %s0, %s69
    %v71 = vld [vmem:[%s70] sm:%s3]
    %s72 = scalar_lea.vmem [#allocation0], 144
    %73 = vst [vmem:[%s72] sm:%s3] %v71
    %s74 = smul.addr 2, 17
    %s75 = scalar_lea.vmem %s0, %s74
    %v76 = vld [vmem:[%s75] sm:%s3]
    %s77 = scalar_lea.vmem [#allocation0], 136
    %78 = vst [vmem:[%s77] sm:%s3] %v76
    %s79 = smul.addr 2, 16
    %s80 = scalar_lea.vmem %s0, %s79
    %v81 = vld [vmem:[%s80] sm:%s3]
    %s82 = scalar_lea.vmem [#allocation0], 128
    %83 = vst [vmem:[%s82] sm:%s3] %v81
    %s84 = smul.addr 2, 15
    %s85 = scalar_lea.vmem %s0, %s84
    %v86 = vld [vmem:[%s85] sm:%s3]
    %s87 = scalar_lea.vmem [#allocation0], 120
    %88 = vst [vmem:[%s87] sm:%s3] %v86
    %s89 = smul.addr 2, 14
    %s90 = scalar_lea.vmem %s0, %s89
    %v91 = vld [vmem:[%s90] sm:%s3]
    %s92 = scalar_lea.vmem [#allocation0], 112
    %93 = vst [vmem:[%s92] sm:%s3] %v91
    %s94 = smul.addr 2, 13
    %s95 = scalar_lea.vmem %s0, %s94
    %v96 = vld [vmem:[%s95] sm:%s3]
    %s97 = scalar_lea.vmem [#allocation0], 104
    %98 = vst [vmem:[%s97] sm:%s3] %v96
    %s99 = smul.addr 2, 12
    %s100 = scalar_lea.vmem %s0, %s99
    %v101 = vld [vmem:[%s100] sm:%s3]
    %s102 = scalar_lea.vmem [#allocation0], 96
    %103 = vst [vmem:[%s102] sm:%s3] %v101
    %s104 = smul.addr 2, 11
    %s105 = scalar_lea.vmem %s0, %s104
    %v106 = vld [vmem:[%s105] sm:%s3]
    %s107 = scalar_lea.vmem [#allocation0], 88
    %108 = vst [vmem:[%s107] sm:%s3] %v106
    %s109 = smul.addr 2, 10
    %s110 = scalar_lea.vmem %s0, %s109
    %v111 = vld [vmem:[%s110] sm:%s3]
    %s112 = scalar_lea.vmem [#allocation0], 80
    %113 = vst [vmem:[%s112] sm:%s3] %v111
    %s114 = smul.addr 2, 9
    %s115 = scalar_lea.vmem %s0, %s114
    %v116 = vld [vmem:[%s115] sm:%s3]
    %s117 = scalar_lea.vmem [#allocation0], 72
    %118 = vst [vmem:[%s117] sm:%s3] %v116
    %s119 = smul.addr 2, 8
    %s120 = scalar_lea.vmem %s0, %s119
    %v121 = vld [vmem:[%s120] sm:%s3]
    %s122 = scalar_lea.vmem [#allocation0], 64
    %123 = vst [vmem:[%s122] sm:%s3] %v121
    %s124 = smul.addr 2, 7
    %s125 = scalar_lea.vmem %s0, %s124
    %v126 = vld [vmem:[%s125] sm:%s3]
    %s127 = scalar_lea.vmem [#allocation0], 56
    %128 = vst [vmem:[%s127] sm:%s3] %v126
    %s129 = smul.addr 2, 6
    %s130 = scalar_lea.vmem %s0, %s129
    %v131 = vld [vmem:[%s130] sm:%s3]
    %s132 = scalar_lea.vmem [#allocation0], 48
    %133 = vst [vmem:[%s132] sm:%s3] %v131
    %s134 = smul.addr 2, 5
    %s135 = scalar_lea.vmem %s0, %s134
    %v136 = vld [vmem:[%s135] sm:%s3]
    %s137 = scalar_lea.vmem [#allocation0], 40
    %138 = vst [vmem:[%s137] sm:%s3] %v136
    %s139 = smul.addr 2, 4
    %s140 = scalar_lea.vmem %s0, %s139
    %v141 = vld [vmem:[%s140] sm:%s3]
    %s142 = scalar_lea.vmem [#allocation0], 32
    %143 = vst [vmem:[%s142] sm:%s3] %v141
    %s144 = smul.addr 2, 3
    %s145 = scalar_lea.vmem %s0, %s144
    %v146 = vld [vmem:[%s145] sm:%s3]
    %s147 = scalar_lea.vmem [#allocation0], 24
    %148 = vst [vmem:[%s147] sm:%s3] %v146
    %s149 = smul.addr 2, 2
    %s150 = scalar_lea.vmem %s0, %s149
    %v151 = vld [vmem:[%s150] sm:%s3]
    %s152 = scalar_lea.vmem [#allocation0], 16
    %153 = vst [vmem:[%s152] sm:%s3] %v151
    %s154 = scalar_lea.vmem %s0, 2
    %v155 = vld [vmem:[%s154] sm:%s3]
    %s156 = scalar_lea.vmem [#allocation0], 8
    %157 = vst [vmem:[%s156] sm:%s3] %v155
    %v158 = vld [vmem:[%s0] sm:%s3]
    %159 = vst [vmem:[#allocation0] sm:%s3] %v158
    %v160 = vld [vmem:[#allocation0] ss:$8 sm:$0xf]
    %v161 = vld [vmem:[#allocation0] ss:$8 sm:$0xf0]
    %vm162 = vcmask 1047556
    %v163 = vsel %vm162, %v161, %v160
    %vm164 = vcmask 130048
    %165 = vst.msk [vmem:[%s1] sm:$0xff] %vm164, %v163
    %s166 = scalar_lea.vmem [#allocation0], 64
    %v167 = vld [vmem:[%s166] ss:$8 sm:$0xf]
    %s168 = scalar_lea.vmem [#allocation0], 64
    %v169 = vld [vmem:[%s168] ss:$8 sm:$0xf0]
    %vm170 = vcmask 1047556
    %v171 = vsel %vm170, %v169, %v167
    %vm172 = vcmask 130048
    %s173 = scalar_lea.vmem %s1, 8
    %174 = vst.msk [vmem:[%s173] sm:$0xff] %vm172, %v171
    %s175 = scalar_lea.vmem [#allocation0], 128
    %v176 = vld [vmem:[%s175] ss:$8 sm:$0xf]
    %s177 = scalar_lea.vmem [#allocation0], 128
    %v178 = vld [vmem:[%s177] ss:$8 sm:$0xf0]
    %vm179 = vcmask 1047556
    %v180 = vsel %vm179, %v178, %v176
    %vm181 = vcmask 130048
    %s182 = scalar_lea.vmem %s1, 16
    %183 = vst.msk [vmem:[%s182] sm:$0xff] %vm181, %v180
    %s184 = scalar_lea.vmem [#allocation0], 192
    %v185 = vld [vmem:[%s184] ss:$8 sm:$0xf]
    %s186 = scalar_lea.vmem [#allocation0], 192
    %v187 = vld [vmem:[%s186] ss:$8 sm:$0xf0]
    %vm188 = vcmask 1047556
    %v189 = vsel %vm188, %v187, %v185
    %vm190 = vcmask 130048
    %s191 = scalar_lea.vmem %s1, 24
    %192 = vst.msk [vmem:[%s191] sm:$0xff] %vm190, %v189
    %s193 = scalar_lea.vmem [#allocation0], 1
    %v194 = vld [vmem:[%s193] ss:$8 sm:$0xf]
    %s195 = scalar_lea.vmem [#allocation0], 1
    %v196 = vld [vmem:[%s195] ss:$8 sm:$0xf0]
    %vm197 = vcmask 1047556
    %v198 = vsel %vm197, %v196, %v194
    %199 = vrot.lane.b32.xlu0 %v198, 16
    %v200 = vpop.permute.xlu0 %199
    %vm201 = vcmask 261248
    %202 = vst.msk [vmem:[%s1] sm:$0xff] %vm201, %v200
    %s203 = scalar_lea.vmem [#allocation0], 65
    %v204 = vld [vmem:[%s203] ss:$8 sm:$0xf]
    %s205 = scalar_lea.vmem [#allocation0], 65
    %v206 = vld [vmem:[%s205] ss:$8 sm:$0xf0]
    %vm207 = vcmask 1047556
    %v208 = vsel %vm207, %v206, %v204
    %209 = vrot.lane.b32.xlu0 %v208, 16
    %v210 = vpop.permute.xlu0 %209
    %vm211 = vcmask 261248
    %s212 = scalar_lea.vmem %s1, 8
    %213 = vst.msk [vmem:[%s212] sm:$0xff] %vm211, %v210
    %s214 = scalar_lea.vmem [#allocation0], 129
    %v215 = vld [vmem:[%s214] ss:$8 sm:$0xf]
    %s216 = scalar_lea.vmem [#allocation0], 129
    %v217 = vld [vmem:[%s216] ss:$8 sm:$0xf0]
    %vm218 = vcmask 1047556
    %v219 = vsel %vm218, %v217, %v215
    %220 = vrot.lane.b32.xlu0 %v219, 16
    %v221 = vpop.permute.xlu0 %220
    %vm222 = vcmask 261248
    %s223 = scalar_lea.vmem %s1, 16
    %224 = vst.msk [vmem:[%s223] sm:$0xff] %vm222, %v221
    %s225 = scalar_lea.vmem [#allocation0], 193
    %v226 = vld [vmem:[%s225] ss:$8 sm:$0xf]
    %s227 = scalar_lea.vmem [#allocation0], 193
    %v228 = vld [vmem:[%s227] ss:$8 sm:$0xf0]
    %vm229 = vcmask 1047556
    %v230 = vsel %vm229, %v228, %v226
    %231 = vrot.lane.b32.xlu0 %v230, 16
    %v232 = vpop.permute.xlu0 %231
    %vm233 = vcmask 261248
    %s234 = scalar_lea.vmem %s1, 24
    %235 = vst.msk [vmem:[%s234] sm:$0xff] %vm233, %v232

// kernel: tile.14
$region0: #{tile.14}
  %s0 = inlined_call_operand.vmem [shape: f32[2,4,16], index: 0, kind: input, shape index: {}]
  %s1 = inlined_call_operand.vmem [shape: f32[2,64], index: 1, kind: output, shape index: {}]
  $region1: #{tile.14} parent=0
    #allocation0 [shape = 'u8[4096]{0}', space=vmem, size = 0x1000, scoped, tag = 'scoped mem for output reshape']
    #allocation1 [shape = 'u8[8192]{0}', space=vmem, size = 0x2000, scoped, tag = 'scoped mem for input reshape']
    %s3 = sshllo.u32 0, 4
    %s4 = scalar_lea.vmem %s0, 4
    %v5 = vld [vmem:[%s4] sm:%s3]
    %s6 = scalar_lea.vmem [#allocation1], 8
    %7 = vst [vmem:[%s6] sm:%s3] %v5
    %v8 = vld [vmem:[%s0] sm:%s3]
    %9 = vst [vmem:[#allocation1] sm:%s3] %v8
    %s10 = smov 3
    %v11 = vld [vmem:[#allocation1] ss:$8 sm:%s10]
    %vm12 = vcmask 130048
    %13 = vst.msk [vmem:[#allocation0] sm:$0x3] %vm12, %v11
    %s14 = scalar_lea.vmem [#allocation1], 3
    %s15 = smov 3
    %v16 = vld [vmem:[%s14] ss:$8 sm:%s15]
    %17 = vrot.lane.b32.xlu0 %v16, 48
    %v18 = vpop.permute.xlu0 %17
    %vm19 = vcmask 523648
    %20 = vst.msk [vmem:[#allocation0] sm:$0x3] %vm19, %v18
    %s21 = scalar_lea.vmem [#allocation1], 2
    %s22 = smov 3
    %v23 = vld [vmem:[%s21] ss:$8 sm:%s22]
    %24 = vrot.lane.b32.xlu0 %v23, 32
    %v25 = vpop.permute.xlu0 %24
    %vm26 = vcmask 392448
    %27 = vst.msk [vmem:[#allocation0] sm:$0x3] %vm26, %v25
    %s28 = scalar_lea.vmem [#allocation1], 1
    %s29 = smov 3
    %v30 = vld [vmem:[%s28] ss:$8 sm:%s29]
    %31 = vrot.lane.b32.xlu0 %v30, 16
    %v32 = vpop.permute.xlu0 %31
    %vm33 = vcmask 261248
    %34 = vst.msk [vmem:[#allocation0] sm:$0x3] %vm33, %v32
    %s36 = sshllo.u32 0, 2
    %v38 = vld [vmem:[#allocation0] sm:%s36]
    %s39 = sshllo.u32 0, 2
    %40 = vst [vmem:[%s1] sm:%s39] %v38

// kernel: _lambda_.1
$region0: #{_lambda_.1}
  #allocation0 [shape = 'u32[]', space=smem, size = 0x4, offset = 0x4, fixed_abs, tag = 'smem constant byte address 0x4 - core index']
  #allocation1 [shape = 'u32[144,128]{1,0:T(1,128)}', space=vmem, size = 0x12000, scoped, tag = 'internal scratch']
  %s0 = inlined_call_operand.vmem [shape: f32[32,16], index: 0, kind: input, shape index: {}]
  %s1 = inlined_call_operand.vmem [shape: f32[32,16], index: 1, kind: input, shape index: {}]
  %s2 = inlined_call_operand.vmem [shape: f32[32,16], index: 2, kind: input, shape index: {}]
  %s3 = inlined_call_operand.vmem [shape: f32[2,64], index: 3, kind: input, shape index: {}]
  %s4 = inlined_call_operand.vmem [shape: f32[32,32], index: 4, kind: input, shape index: {}]
  %s5 = inlined_call_operand.vmem [shape: f32[16,32], index: 5, kind: input, shape index: {}]
  %s6 = inlined_call_operand.vmem [shape: f32[1,32], index: 6, kind: input, shape index: {}]
  %s7 = inlined_call_operand.vmem [shape: f32[16,32], index: 7, kind: input, shape index: {}]
  %s8 = inlined_call_operand.vmem [shape: f32[1,32], index: 8, kind: input, shape index: {}]
  %s9 = inlined_call_operand.vmem [shape: f32[16,32], index: 9, kind: input, shape index: {}]
  %s10 = inlined_call_operand.vmem [shape: f32[1,32], index: 10, kind: input, shape index: {}]
  %s11 = inlined_call_operand.vmem [shape: f32[32,32], index: 11, kind: input, shape index: {}]
  %s12 = inlined_call_operand.vmem [shape: f32[1,32], index: 12, kind: input, shape index: {}]
  %s13 = inlined_call_operand.vmem [shape: bf16[300,64], index: 13, kind: input, shape index: {}]
  %s14 = inlined_call_operand.hbm [shape: f32[32,32], index: 14, kind: output, shape index: {}]
  %s15 = sld [smem:[#allocation0]]
  $region66: #{_lambda_.1} parent=0
    _
  %s17 = ssub.s32 1, %s15
  %s18 = scalar_select 0, %s17, %s15
  $region1: #{_lambda_.1} parent=0
    #allocation2 [shape = 'u8[16384]{0}', space=vmem, size = 0x4000, scoped, tag = 'output window, operand 0, single buffered']
    #allocation3 [shape = 's32[1]{0}', space=sflag, size = 0x4, scoped, tag = 'scoped memory for _lambda_.1']
    %19 = vsyncpa [#allocation3], 0
    // Predicated region
    $region2: #{_lambda_.1} parent=1 // pred_check
      _
    $region3: #{_lambda_.1} parent=1 // pred_check_branch
      %21 = sbr.rel (0) target = $region5
    $region4: #{_lambda_.1} parent=1 // pred_region
      _
    $region5: #{_lambda_.1} parent=1 // pred_fallthru
      _
    // Predicated region
    $region6: #{_lambda_.1} parent=1 // pred_check
      _
    $region7: #{_lambda_.1} parent=1 // pred_check_branch
      %23 = sbr.rel (0) target = $region9
    $region8: #{_lambda_.1} parent=1 // pred_region
      _
    $region9: #{_lambda_.1} parent=1 // pred_fallthru
      _
    // Predicated region
    $region10: #{_lambda_.1} parent=1 // pred_check
      _
    $region11: #{_lambda_.1} parent=1 // pred_check_branch
      %25 = sbr.rel (0) target = $region13
    $region12: #{_lambda_.1} parent=1 // pred_region
      _
    $region13: #{_lambda_.1} parent=1 // pred_fallthru
      _
    // Predicated region
    $region14: #{_lambda_.1} parent=1 // pred_check
      _
    $region15: #{_lambda_.1} parent=1 // pred_check_branch
      %27 = sbr.rel (0) target = $region17
    $region16: #{_lambda_.1} parent=1 // pred_region
      _
    $region17: #{_lambda_.1} parent=1 // pred_fallthru
      _
    // Predicated region
    $region18: #{_lambda_.1} parent=1 // pred_check
      _
    $region19: #{_lambda_.1} parent=1 // pred_check_branch
      %29 = sbr.rel (0) target = $region21
    $region20: #{_lambda_.1} parent=1 // pred_region
      _
    $region21: #{_lambda_.1} parent=1 // pred_fallthru
      _
    // Predicated region
    $region22: #{_lambda_.1} parent=1 // pred_check
      _
    $region23: #{_lambda_.1} parent=1 // pred_check_branch
      %31 = sbr.rel (0) target = $region25
    $region24: #{_lambda_.1} parent=1 // pred_region
      _
    $region25: #{_lambda_.1} parent=1 // pred_fallthru
      _
    // Predicated region
    $region26: #{_lambda_.1} parent=1 // pred_check
      _
    $region27: #{_lambda_.1} parent=1 // pred_check_branch
      %33 = sbr.rel (0) target = $region29
    $region28: #{_lambda_.1} parent=1 // pred_region
      _
    $region29: #{_lambda_.1} parent=1 // pred_fallthru
      _
    // Predicated region
    $region30: #{_lambda_.1} parent=1 // pred_check
      _
    $region31: #{_lambda_.1} parent=1 // pred_check_branch
      %35 = sbr.rel (0) target = $region33
    $region32: #{_lambda_.1} parent=1 // pred_region
      _
    $region33: #{_lambda_.1} parent=1 // pred_fallthru
      _
    // Predicated region
    $region34: #{_lambda_.1} parent=1 // pred_check
      _
    $region35: #{_lambda_.1} parent=1 // pred_check_branch
      %37 = sbr.rel (0) target = $region37
    $region36: #{_lambda_.1} parent=1 // pred_region
      _
    $region37: #{_lambda_.1} parent=1 // pred_fallthru
      _
    // Predicated region
    $region38: #{_lambda_.1} parent=1 // pred_check
      _
    $region39: #{_lambda_.1} parent=1 // pred_check_branch
      %39 = sbr.rel (0) target = $region41
    $region40: #{_lambda_.1} parent=1 // pred_region
      _
    $region41: #{_lambda_.1} parent=1 // pred_fallthru
      _
    // Predicated region
    $region42: #{_lambda_.1} parent=1 // pred_check
      _
    $region43: #{_lambda_.1} parent=1 // pred_check_branch
      %41 = sbr.rel (0) target = $region45
    $region44: #{_lambda_.1} parent=1 // pred_region
      _
    $region45: #{_lambda_.1} parent=1 // pred_fallthru
      _
    // Predicated region
    $region46: #{_lambda_.1} parent=1 // pred_check
      _
    $region47: #{_lambda_.1} parent=1 // pred_check_branch
      %43 = sbr.rel (0) target = $region49
    $region48: #{_lambda_.1} parent=1 // pred_region
      _
    $region49: #{_lambda_.1} parent=1 // pred_fallthru
      _
    // Predicated region
    $region50: #{_lambda_.1} parent=1 // pred_check
      _
    $region51: #{_lambda_.1} parent=1 // pred_check_branch
      %45 = sbr.rel (0) target = $region53
    $region52: #{_lambda_.1} parent=1 // pred_region
      _
    $region53: #{_lambda_.1} parent=1 // pred_fallthru
      _
    // Predicated region
    $region54: #{_lambda_.1} parent=1 // pred_check
      _
    $region55: #{_lambda_.1} parent=1 // pred_check_branch
      %47 = sbr.rel (0) target = $region57
    $region56: #{_lambda_.1} parent=1 // pred_region
      _
    $region57: #{_lambda_.1} parent=1 // pred_fallthru
      _
    %v49 = vld [vmem:[%s0] sm:$0xff]
    %v50 = vld [vmem:[%s0 + $0x8] sm:$0xff]
    %v51 = vld [vmem:[%s0 + $0x10] sm:$0xff]
    %v52 = vld [vmem:[%s0 + $0x18] sm:$0xff]
    %v53 = vld [vmem:[%s1] sm:$0xff]
    %v54 = vld [vmem:[%s1 + $0x8] sm:$0xff]
    %v55 = vld [vmem:[%s1 + $0x10] sm:$0xff]
    %v56 = vld [vmem:[%s1 + $0x18] sm:$0xff]
    %v57 = vld [vmem:[%s2] sm:$0xff]
    %v58 = vld [vmem:[%s2 + $0x8] sm:$0xff]
    %v59 = vld [vmem:[%s2 + $0x10] sm:$0xff]
    %v60 = vld [vmem:[%s2 + $0x18] sm:$0xff]
    %v61 = vld [vmem:[%s4] sm:$0xff]
    %v62 = vld [vmem:[%s4 + $0x8] sm:$0xff]
    %v63 = vld [vmem:[%s4 + $0x10] sm:$0xff]
    %v64 = vld [vmem:[%s4 + $0x18] sm:$0xff]
    %v65 = vld [vmem:[%s5] sm:$0xff]
    %v66 = vld [vmem:[%s5 + $0x8] sm:$0xff]
    %v67 = vld [vmem:[%s6] sm:$0x1]
    %v69 = vlaneseq
    %v70 = vshrl.u32 %v69, 7
    %v71 = vsub.s32 0, %v70
    %v72 = vrot.slane %v67, %v71
    %vm74 = vcmask 130048
    %v76 = vsel %vm74, %v49, 0
    %v79 = vsel %vm74, %v50, 0
    %v82 = vsel %vm74, %v51, 0
    %v85 = vsel %vm74, %v52, 0
    %87 = vmatprep.subr.mxu0 0.0
    %88 = vmatpush1.msra.mxu0 %v65
    %89 = vmatprep.subr.mxu0 0.0
    %90 = vmatpush1.msra.mxu0 %v66
    %91 = vmatprep.subr.mxu0 0.0
    %92 = vmatpush1.msra.mxu0 0.0
    %93 = vmatprep.subr.mxu0 0.0
    %94 = vmatpush1.msra.mxu0 0.0
    %95 = vmatprep.subr.mxu0 0.0
    %96 = vmatpush1.msra.mxu0 0.0
    %97 = vmatprep.subr.mxu0 0.0
    %98 = vmatpush1.msra.mxu0 0.0
    %99 = vmatprep.subr.mxu0 0.0
    %100 = vmatpush1.msra.mxu0 0.0
    %101 = vmatprep.subr.mxu0 0.0
    %102 = vmatpush1.msra.mxu0 0.0
    %103 = vmatprep.subr.mxu0 0.0
    %104 = vmatpush1.msra.mxu0 0.0
    %105 = vmatprep.subr.mxu0 0.0
    %106 = vmatpush1.msra.mxu0 0.0
    %107 = vmatprep.subr.mxu0 0.0
    %108 = vmatpush1.msra.mxu0 0.0
    %109 = vmatprep.subr.mxu0 0.0
    %110 = vmatpush1.msra.mxu0 0.0
    %111 = vmatprep.subr.mxu0 0.0
    %112 = vmatpush1.msra.mxu0 0.0
    %113 = vmatprep.subr.mxu0 0.0
    %114 = vmatpush1.msra.mxu0 0.0
    %115 = vmatprep.subr.mxu0 0.0
    %116 = vmatpush1.msra.mxu0 0.0
    %117 = vmatprep.subr.mxu0 0.0
    %118 = vmatpush1.msra.mxu0 0.0
    %119 = vmatprep.subr.mxu0 0.0
    %120 = vmatpush1.msra.mxu0 0.0
    %121 = vmatprep.subr.mxu0 0.0
    %122 = vmatpush1.msra.mxu0 0.0
    %123 = vmatprep.subr.mxu0 0.0
    %124 = vmatpush1.msra.mxu0 0.0
    %125 = vmatprep.subr.mxu0 0.0
    %126 = vmatpush1.msra.mxu0 0.0
    %127 = vmatprep.subr.mxu0 0.0
    %128 = vmatpush1.msra.mxu0 0.0
    %129 = vmatprep.subr.mxu0 0.0
    %130 = vmatpush1.msra.mxu0 0.0
    %131 = vmatprep.subr.mxu0 0.0
    %132 = vmatpush1.msra.mxu0 0.0
    %133 = vmatprep.subr.mxu0 0.0
    %134 = vmatpush1.msra.mxu0 0.0
    %135 = vmatprep.subr.mxu0 0.0
    %136 = vmatpush1.msra.mxu0 0.0
    %137 = vmatprep.subr.mxu0 0.0
    %138 = vmatpush1.msra.mxu0 0.0
    %139 = vmatprep.subr.mxu0 0.0
    %140 = vmatpush1.msra.mxu0 0.0
    %141 = vmatprep.subr.mxu0 0.0
    %142 = vmatpush1.msra.mxu0 0.0
    %143 = vmatprep.subr.mxu0 0.0
    %144 = vmatpush1.msra.mxu0 0.0
    %145 = vmatprep.subr.mxu0 0.0
    %146 = vmatpush1.msra.mxu0 0.0
    %147 = vmatprep.subr.mxu0 0.0
    %148 = vmatpush1.msra.mxu0 0.0
    %149 = vmatprep.subr.mxu0 0.0
    %150 = vmatpush1.msra.mxu0 0.0
    %151 = vmatprep.mubr.f32.mxu0 0.0
    %152 = vmatmul.mubr.f32.gmra.mrb[0].mxu0 %v76
    %v153 = vpop.f32.mrb[0].mxu0
    %v154 = vadd.f32 %v72, %v153
    %v155 = vpop.f32.mrb[0].mxu0
    %156 = vmatprep.mubr.f32.mxu0 0.0
    %157 = vmatmul.mubr.f32.gmra.mrb[0].mxu0 %v79
    %v158 = vpop.f32.mrb[0].mxu0
    %v159 = vadd.f32 %v72, %v158
    %v160 = vpop.f32.mrb[0].mxu0
    %161 = vmatprep.mubr.f32.mxu0 0.0
    %162 = vmatmul.mubr.f32.gmra.mrb[0].mxu0 %v82
    %v163 = vpop.f32.mrb[0].mxu0
    %v164 = vadd.f32 %v72, %v163
    %v165 = vpop.f32.mrb[0].mxu0
    %166 = vmatprep.mubr.f32.mxu0 0.0
    %167 = vmatmul.mubr.f32.gmra.mrb[0].mxu0 %v85
    %v168 = vpop.f32.mrb[0].mxu0
    %v169 = vadd.f32 %v72, %v168
    %v170 = vpop.f32.mrb[0].mxu0
    %171 = vdwg.mxu0
    %v172 = vld [vmem:[%s7] sm:$0xff]
    %v173 = vld [vmem:[%s7 + $0x8] sm:$0xff]
    %v174 = vld [vmem:[%s8] sm:$0x1]
    %v176 = vlaneseq
    %v177 = vshrl.u32 %v176, 7
    %v178 = vsub.s32 0, %v177
    %v179 = vrot.slane %v174, %v178
    %v182 = vsel %vm74, %v53, 0
    %v185 = vsel %vm74, %v54, 0
    %v188 = vsel %vm74, %v55, 0
    %v191 = vsel %vm74, %v56, 0
    %193 = vmatprep.subr.mxu0 0.0
    %194 = vmatpush1.msra.mxu0 %v172
    %195 = vmatprep.subr.mxu0 0.0
    %196 = vmatpush1.msra.mxu0 %v173
    %197 = vmatprep.subr.mxu0 0.0
    %198 = vmatpush1.msra.mxu0 0.0
    %199 = vmatprep.subr.mxu0 0.0
    %200 = vmatpush1.msra.mxu0 0.0
    %201 = vmatprep.subr.mxu0 0.0
    %202 = vmatpush1.msra.mxu0 0.0
    %203 = vmatprep.subr.mxu0 0.0
    %204 = vmatpush1.msra.mxu0 0.0
    %205 = vmatprep.subr.mxu0 0.0
    %206 = vmatpush1.msra.mxu0 0.0
    %207 = vmatprep.subr.mxu0 0.0
    %208 = vmatpush1.msra.mxu0 0.0
    %209 = vmatprep.subr.mxu0 0.0
    %210 = vmatpush1.msra.mxu0 0.0
    %211 = vmatprep.subr.mxu0 0.0
    %212 = vmatpush1.msra.mxu0 0.0
    %213 = vmatprep.subr.mxu0 0.0
    %214 = vmatpush1.msra.mxu0 0.0
    %215 = vmatprep.subr.mxu0 0.0
    %216 = vmatpush1.msra.mxu0 0.0
    %217 = vmatprep.subr.mxu0 0.0
    %218 = vmatpush1.msra.mxu0 0.0
    %219 = vmatprep.subr.mxu0 0.0
    %220 = vmatpush1.msra.mxu0 0.0
    %221 = vmatprep.subr.mxu0 0.0
    %222 = vmatpush1.msra.mxu0 0.0
    %223 = vmatprep.subr.mxu0 0.0
    %224 = vmatpush1.msra.mxu0 0.0
    %225 = vmatprep.subr.mxu0 0.0
    %226 = vmatpush1.msra.mxu0 0.0
    %227 = vmatprep.subr.mxu0 0.0
    %228 = vmatpush1.msra.mxu0 0.0
    %229 = vmatprep.subr.mxu0 0.0
    %230 = vmatpush1.msra.mxu0 0.0
    %231 = vmatprep.subr.mxu0 0.0
    %232 = vmatpush1.msra.mxu0 0.0
    %233 = vmatprep.subr.mxu0 0.0
    %234 = vmatpush1.msra.mxu0 0.0
    %235 = vmatprep.subr.mxu0 0.0
    %236 = vmatpush1.msra.mxu0 0.0
    %237 = vmatprep.subr.mxu0 0.0
    %238 = vmatpush1.msra.mxu0 0.0
    %239 = vmatprep.subr.mxu0 0.0
    %240 = vmatpush1.msra.mxu0 0.0
    %241 = vmatprep.subr.mxu0 0.0
    %242 = vmatpush1.msra.mxu0 0.0
    %243 = vmatprep.subr.mxu0 0.0
    %244 = vmatpush1.msra.mxu0 0.0
    %245 = vmatprep.subr.mxu0 0.0
    %246 = vmatpush1.msra.mxu0 0.0
    %247 = vmatprep.subr.mxu0 0.0
    %248 = vmatpush1.msra.mxu0 0.0
    %249 = vmatprep.subr.mxu0 0.0
    %250 = vmatpush1.msra.mxu0 0.0
    %251 = vmatprep.subr.mxu0 0.0
    %252 = vmatpush1.msra.mxu0 0.0
    %253 = vmatprep.subr.mxu0 0.0
    %254 = vmatpush1.msra.mxu0 0.0
    %255 = vmatprep.subr.mxu0 0.0
    %256 = vmatpush1.msra.mxu0 0.0
    %257 = vmatprep.mubr.f32.mxu0 0.0
    %258 = vmatmul.mubr.f32.gmra.mrb[0].mxu0 %v182
    %v259 = vpop.f32.mrb[0].mxu0
    %v260 = vadd.f32 %v179, %v259
    %v261 = vpop.f32.mrb[0].mxu0
    %262 = vmatprep.mubr.f32.mxu0 0.0
    %263 = vmatmul.mubr.f32.gmra.mrb[0].mxu0 %v185
    %v264 = vpop.f32.mrb[0].mxu0
    %v265 = vadd.f32 %v179, %v264
    %v266 = vpop.f32.mrb[0].mxu0
    %267 = vmatprep.mubr.f32.mxu0 0.0
    %268 = vmatmul.mubr.f32.gmra.mrb[0].mxu0 %v188
    %v269 = vpop.f32.mrb[0].mxu0
    %v270 = vadd.f32 %v179, %v269
    %v271 = vpop.f32.mrb[0].mxu0
    %272 = vmatprep.mubr.f32.mxu0 0.0
    %273 = vmatmul.mubr.f32.gmra.mrb[0].mxu0 %v191
    %v274 = vpop.f32.mrb[0].mxu0
    %v275 = vadd.f32 %v179, %v274
    %v276 = vpop.f32.mrb[0].mxu0
    %277 = vdwg.mxu0
    %v278 = vld [vmem:[%s9] sm:$0xff]
    %v279 = vld [vmem:[%s9 + $0x8] sm:$0xff]
    %v280 = vld [vmem:[%s10] sm:$0x1]
    %v282 = vlaneseq
    %v283 = vshrl.u32 %v282, 7
    %v284 = vsub.s32 0, %v283
    %v285 = vrot.slane %v280, %v284
    %v288 = vsel %vm74, %v57, 0
    %v291 = vsel %vm74, %v58, 0
    %v294 = vsel %vm74, %v59, 0
    %v297 = vsel %vm74, %v60, 0
    %299 = vmatprep.subr.mxu0 0.0
    %300 = vmatpush1.msra.mxu0 %v278
    %301 = vmatprep.subr.mxu0 0.0
    %302 = vmatpush1.msra.mxu0 %v279
    %303 = vmatprep.subr.mxu0 0.0
    %304 = vmatpush1.msra.mxu0 0.0
    %305 = vmatprep.subr.mxu0 0.0
    %306 = vmatpush1.msra.mxu0 0.0
    %307 = vmatprep.subr.mxu0 0.0
    %308 = vmatpush1.msra.mxu0 0.0
    %309 = vmatprep.subr.mxu0 0.0
    %310 = vmatpush1.msra.mxu0 0.0
    %311 = vmatprep.subr.mxu0 0.0
    %312 = vmatpush1.msra.mxu0 0.0
    %313 = vmatprep.subr.mxu0 0.0
    %314 = vmatpush1.msra.mxu0 0.0
    %315 = vmatprep.subr.mxu0 0.0
    %316 = vmatpush1.msra.mxu0 0.0
    %317 = vmatprep.subr.mxu0 0.0
    %318 = vmatpush1.msra.mxu0 0.0
    %319 = vmatprep.subr.mxu0 0.0
    %320 = vmatpush1.msra.mxu0 0.0
    %321 = vmatprep.subr.mxu0 0.0
    %322 = vmatpush1.msra.mxu0 0.0
    %323 = vmatprep.subr.mxu0 0.0
    %324 = vmatpush1.msra.mxu0 0.0
    %325 = vmatprep.subr.mxu0 0.0
    %326 = vmatpush1.msra.mxu0 0.0
    %327 = vmatprep.subr.mxu0 0.0
    %328 = vmatpush1.msra.mxu0 0.0
    %329 = vmatprep.subr.mxu0 0.0
    %330 = vmatpush1.msra.mxu0 0.0
    %331 = vmatprep.subr.mxu0 0.0
    %332 = vmatpush1.msra.mxu0 0.0
    %333 = vmatprep.subr.mxu0 0.0
    %334 = vmatpush1.msra.mxu0 0.0
    %335 = vmatprep.subr.mxu0 0.0
    %336 = vmatpush1.msra.mxu0 0.0
    %337 = vmatprep.subr.mxu0 0.0
    %338 = vmatpush1.msra.mxu0 0.0
    %339 = vmatprep.subr.mxu0 0.0
    %340 = vmatpush1.msra.mxu0 0.0
    %341 = vmatprep.subr.mxu0 0.0
    %342 = vmatpush1.msra.mxu0 0.0
    %343 = vmatprep.subr.mxu0 0.0
    %344 = vmatpush1.msra.mxu0 0.0
    %345 = vmatprep.subr.mxu0 0.0
    %346 = vmatpush1.msra.mxu0 0.0
    %347 = vmatprep.subr.mxu0 0.0
    %348 = vmatpush1.msra.mxu0 0.0
    %349 = vmatprep.subr.mxu0 0.0
    %350 = vmatpush1.msra.mxu0 0.0
    %351 = vmatprep.subr.mxu0 0.0
    %352 = vmatpush1.msra.mxu0 0.0
    %353 = vmatprep.subr.mxu0 0.0
    %354 = vmatpush1.msra.mxu0 0.0
    %355 = vmatprep.subr.mxu0 0.0
    %356 = vmatpush1.msra.mxu0 0.0
    %357 = vmatprep.subr.mxu0 0.0
    %358 = vmatpush1.msra.mxu0 0.0
    %359 = vmatprep.subr.mxu0 0.0
    %360 = vmatpush1.msra.mxu0 0.0
    %361 = vmatprep.subr.mxu0 0.0
    %362 = vmatpush1.msra.mxu0 0.0
    %363 = vmatprep.mubr.f32.mxu0 0.0
    %364 = vmatmul.mubr.f32.gmra.mrb[0].mxu0 %v288
    %v365 = vpop.f32.mrb[0].mxu0
    %v366 = vadd.f32 %v285, %v365
    %v367 = vpop.f32.mrb[0].mxu0
    %368 = vmatprep.mubr.f32.mxu0 0.0
    %369 = vmatmul.mubr.f32.gmra.mrb[0].mxu0 %v291
    %v370 = vpop.f32.mrb[0].mxu0
    %v371 = vadd.f32 %v285, %v370
    %v372 = vpop.f32.mrb[0].mxu0
    %373 = vmatprep.mubr.f32.mxu0 0.0
    %374 = vmatmul.mubr.f32.gmra.mrb[0].mxu0 %v294
    %v375 = vpop.f32.mrb[0].mxu0
    %v376 = vadd.f32 %v285, %v375
    %v377 = vpop.f32.mrb[0].mxu0
    %378 = vmatprep.mubr.f32.mxu0 0.0
    %379 = vmatmul.mubr.f32.gmra.mrb[0].mxu0 %v297
    %v380 = vpop.f32.mrb[0].mxu0
    %v381 = vadd.f32 %v285, %v380
    %v382 = vpop.f32.mrb[0].mxu0
    %383 = vdwg.mxu0
    %v384 = vmul.f32 %v366, 0.35355338
    %v385 = vmul.f32 %v371, 0.35355338
    %v386 = vmul.f32 %v376, 0.35355338
    %v387 = vmul.f32 %v381, 0.35355338
    %v388 = vadd.f32 %v154, %v61
    %v389 = vadd.f32 %v159, %v62
    %v390 = vadd.f32 %v164, %v63
    %v391 = vadd.f32 %v169, %v64
    %v392 = vadd.f32 %v260, %v61
    %v393 = vadd.f32 %v265, %v62
    %v394 = vadd.f32 %v270, %v63
    %v395 = vadd.f32 %v275, %v64
    %v396 = vlaneseq
    %v397 = vshrl.u32 %v396, 7
    %v398 = vadd.s32 %v397, 8
    %v399 = vadd.s32 %v397, 16
    %v400 = vadd.s32 %v397, 24
    %v401 = vadd.s32 %v397, 32
    %v402 = vadd.s32 %v397, 40
    %v403 = vadd.s32 %v397, 48
    %v404 = vadd.s32 %v397, 56
    %v405 = vadd.s32 %v397, 64
    %v406 = vadd.s32 %v397, 72
    %v407 = vadd.s32 %v397, 80
    %v408 = vadd.s32 %v397, 88
    %v409 = vadd.s32 %v397, 96
    %v410 = vadd.s32 %v397, 104
    %v411 = vadd.s32 %v397, 112
    %v412 = vadd.s32 %v397, 120
    %v413 = vadd.s32 %v397, 128
    %v414 = vadd.s32 %v397, 136
    %v415 = vadd.s32 %v397, 144
    %v416 = vadd.s32 %v397, 152
    %v417 = vadd.s32 %v397, 160
    %v418 = vadd.s32 %v397, 168
    %v419 = vadd.s32 %v397, 176
    %v420 = vadd.s32 %v397, 184
    %v421 = vadd.s32 %v397, 192
    %v422 = vadd.s32 %v397, 200
    %v423 = vadd.s32 %v397, 208
    %v424 = vadd.s32 %v397, 216
    %v425 = vadd.s32 %v397, 224
    %v426 = vadd.s32 %v397, 232
    %v427 = vadd.s32 %v397, 240
    %v428 = vadd.s32 %v397, 248
    %v429 = vadd.s32 %v397, 256
    %v430 = vadd.s32 %v397, 264
    %v431 = vadd.s32 %v397, 272
    %v432 = vadd.s32 %v397, 280
    %v433 = vadd.s32 %v397, 288
    %v434 = vadd.s32 %v397, 296
    %v435 = vadd.s32 %v397, 304
    %v436 = vadd.s32 %v397, 312
    %v437 = vadd.s32 %v397, 320
    %v438 = vadd.s32 %v397, 328
    %v439 = vadd.s32 %v397, 336
    %v440 = vadd.s32 %v397, 344
    %v441 = vadd.s32 %v397, 352
    %v442 = vadd.s32 %v397, 360
    %v443 = vadd.s32 %v397, 368
    %v444 = vadd.s32 %v397, 376
    %v445 = vadd.s32 %v397, 384
    %v446 = vadd.s32 %v397, 392
    %v447 = vadd.s32 %v397, 400
    %v448 = vadd.s32 %v397, 408
    %v449 = vadd.s32 %v397, 416
    %v450 = vadd.s32 %v397, 424
    %v451 = vadd.s32 %v397, 432
    %v452 = vadd.s32 %v397, 440
    %v453 = vadd.s32 %v397, 448
    %v454 = vadd.s32 %v397, 456
    %v455 = vadd.s32 %v397, 464
    %v456 = vadd.s32 %v397, 472
    %v457 = vadd.s32 %v397, 480
    %v458 = vadd.s32 %v397, 488
    %v459 = vadd.s32 %v397, 496
    %v460 = vadd.s32 %v397, 504
    %v461 = vlaneseq
    %v462 = vand.u32 %v461, 127
    %v463 = vshra.s32 %v397, 4
    %v464 = vshra.s32 %v398, 4
    %v465 = vshra.s32 %v399, 4
    %v466 = vshra.s32 %v400, 4
    %v467 = vshra.s32 %v401, 4
    %v468 = vshra.s32 %v402, 4
    %v469 = vshra.s32 %v403, 4
    %v470 = vshra.s32 %v404, 4
    %v471 = vshra.s32 %v405, 4
    %v472 = vshra.s32 %v406, 4
    %v473 = vshra.s32 %v407, 4
    %v474 = vshra.s32 %v408, 4
    %v475 = vshra.s32 %v409, 4
    %v476 = vshra.s32 %v410, 4
    %v477 = vshra.s32 %v411, 4
    %v478 = vshra.s32 %v412, 4
    %v479 = vshra.s32 %v413, 4
    %v480 = vshra.s32 %v414, 4
    %v481 = vshra.s32 %v415, 4
    %v482 = vshra.s32 %v416, 4
    %v483 = vshra.s32 %v417, 4
    %v484 = vshra.s32 %v418, 4
    %v485 = vshra.s32 %v419, 4
    %v486 = vshra.s32 %v420, 4
    %v487 = vshra.s32 %v421, 4
    %v488 = vshra.s32 %v422, 4
    %v489 = vshra.s32 %v423, 4
    %v490 = vshra.s32 %v424, 4
    %v491 = vshra.s32 %v425, 4
    %v492 = vshra.s32 %v426, 4
    %v493 = vshra.s32 %v427, 4
    %v494 = vshra.s32 %v428, 4
    %v495 = vshra.s32 %v429, 4
    %v496 = vshra.s32 %v430, 4
    %v497 = vshra.s32 %v431, 4
    %v498 = vshra.s32 %v432, 4
    %v499 = vshra.s32 %v433, 4
    %v500 = vshra.s32 %v434, 4
    %v501 = vshra.s32 %v435, 4
    %v502 = vshra.s32 %v436, 4
    %v503 = vshra.s32 %v437, 4
    %v504 = vshra.s32 %v438, 4
    %v505 = vshra.s32 %v439, 4
    %v506 = vshra.s32 %v440, 4
    %v507 = vshra.s32 %v441, 4
    %v508 = vshra.s32 %v442, 4
    %v509 = vshra.s32 %v443, 4
    %v510 = vshra.s32 %v444, 4
    %v511 = vshra.s32 %v445, 4
    %v512 = vshra.s32 %v446, 4
    %v513 = vshra.s32 %v447, 4
    %v514 = vshra.s32 %v448, 4
    %v515 = vshra.s32 %v449, 4
    %v516 = vshra.s32 %v450, 4
    %v517 = vshra.s32 %v451, 4
    %v518 = vshra.s32 %v452, 4
    %v519 = vshra.s32 %v453, 4
    %v520 = vshra.s32 %v454, 4
    %v521 = vshra.s32 %v455, 4
    %v522 = vshra.s32 %v456, 4
    %v523 = vshra.s32 %v457, 4
    %v524 = vshra.s32 %v458, 4
    %v525 = vshra.s32 %v459, 4
    %v526 = vshra.s32 %v460, 4
    %vm527 = vcmp.eq.s32.totalorder %v463, %v462
    %vm528 = vcmp.eq.s32.totalorder %v464, %v462
    %vm529 = vcmp.eq.s32.totalorder %v465, %v462
    %vm530 = vcmp.eq.s32.totalorder %v466, %v462
    %vm531 = vcmp.eq.s32.totalorder %v467, %v462
    %vm532 = vcmp.eq.s32.totalorder %v468, %v462
    %vm533 = vcmp.eq.s32.totalorder %v469, %v462
    %vm534 = vcmp.eq.s32.totalorder %v470, %v462
    %vm535 = vcmp.eq.s32.totalorder %v471, %v462
    %vm536 = vcmp.eq.s32.totalorder %v472, %v462
    %vm537 = vcmp.eq.s32.totalorder %v473, %v462
    %vm538 = vcmp.eq.s32.totalorder %v474, %v462
    %vm539 = vcmp.eq.s32.totalorder %v475, %v462
    %vm540 = vcmp.eq.s32.totalorder %v476, %v462
    %vm541 = vcmp.eq.s32.totalorder %v477, %v462
    %vm542 = vcmp.eq.s32.totalorder %v478, %v462
    %vm543 = vcmp.eq.s32.totalorder %v479, %v462
    %vm544 = vcmp.eq.s32.totalorder %v480, %v462
    %vm545 = vcmp.eq.s32.totalorder %v481, %v462
    %vm546 = vcmp.eq.s32.totalorder %v482, %v462
    %vm547 = vcmp.eq.s32.totalorder %v483, %v462
    %vm548 = vcmp.eq.s32.totalorder %v484, %v462
    %vm549 = vcmp.eq.s32.totalorder %v485, %v462
    %vm550 = vcmp.eq.s32.totalorder %v486, %v462
    %vm551 = vcmp.eq.s32.totalorder %v487, %v462
    %vm552 = vcmp.eq.s32.totalorder %v488, %v462
    %vm553 = vcmp.eq.s32.totalorder %v489, %v462
    %vm554 = vcmp.eq.s32.totalorder %v490, %v462
    %vm555 = vcmp.eq.s32.totalorder %v491, %v462
    %vm556 = vcmp.eq.s32.totalorder %v492, %v462
    %vm557 = vcmp.eq.s32.totalorder %v493, %v462
    %vm558 = vcmp.eq.s32.totalorder %v494, %v462
    %vm559 = vcmp.eq.s32.totalorder %v495, %v462
    %vm560 = vcmp.eq.s32.totalorder %v496, %v462
    %vm561 = vcmp.eq.s32.totalorder %v497, %v462
    %vm562 = vcmp.eq.s32.totalorder %v498, %v462
    %vm563 = vcmp.eq.s32.totalorder %v499, %v462
    %vm564 = vcmp.eq.s32.totalorder %v500, %v462
    %vm565 = vcmp.eq.s32.totalorder %v501, %v462
    %vm566 = vcmp.eq.s32.totalorder %v502, %v462
    %vm567 = vcmp.eq.s32.totalorder %v503, %v462
    %vm568 = vcmp.eq.s32.totalorder %v504, %v462
    %vm569 = vcmp.eq.s32.totalorder %v505, %v462
    %vm570 = vcmp.eq.s32.totalorder %v506, %v462
    %vm571 = vcmp.eq.s32.totalorder %v507, %v462
    %vm572 = vcmp.eq.s32.totalorder %v508, %v462
    %vm573 = vcmp.eq.s32.totalorder %v509, %v462
    %vm574 = vcmp.eq.s32.totalorder %v510, %v462
    %vm575 = vcmp.eq.s32.totalorder %v511, %v462
    %vm576 = vcmp.eq.s32.totalorder %v512, %v462
    %vm577 = vcmp.eq.s32.totalorder %v513, %v462
    %vm578 = vcmp.eq.s32.totalorder %v514, %v462
    %vm579 = vcmp.eq.s32.totalorder %v515, %v462
    %vm580 = vcmp.eq.s32.totalorder %v516, %v462
    %vm581 = vcmp.eq.s32.totalorder %v517, %v462
    %vm582 = vcmp.eq.s32.totalorder %v518, %v462
    %vm583 = vcmp.eq.s32.totalorder %v519, %v462
    %vm584 = vcmp.eq.s32.totalorder %v520, %v462
    %vm585 = vcmp.eq.s32.totalorder %v521, %v462
    %vm586 = vcmp.eq.s32.totalorder %v522, %v462
    %vm587 = vcmp.eq.s32.totalorder %v523, %v462
    %vm588 = vcmp.eq.s32.totalorder %v524, %v462
    %vm589 = vcmp.eq.s32.totalorder %v525, %v462
    %vm590 = vcmp.eq.s32.totalorder %v526, %v462
    %v591 = vsel %vm527, 1, 0
    %v592 = vsel %vm528, 1, 0
    %v593 = vsel %vm529, 1, 0
    %v594 = vsel %vm530, 1, 0
    %v595 = vsel %vm531, 1, 0
    %v596 = vsel %vm532, 1, 0
    %v597 = vsel %vm533, 1, 0
    %v598 = vsel %vm534, 1, 0
    %v599 = vsel %vm535, 1, 0
    %v600 = vsel %vm536, 1, 0
    %v601 = vsel %vm537, 1, 0
    %v602 = vsel %vm538, 1, 0
    %v603 = vsel %vm539, 1, 0
    %v604 = vsel %vm540, 1, 0
    %v605 = vsel %vm541, 1, 0
    %v606 = vsel %vm542, 1, 0
    %v607 = vsel %vm543, 1, 0
    %v608 = vsel %vm544, 1, 0
    %v609 = vsel %vm545, 1, 0
    %v610 = vsel %vm546, 1, 0
    %v611 = vsel %vm547, 1, 0
    %v612 = vsel %vm548, 1, 0
    %v613 = vsel %vm549, 1, 0
    %v614 = vsel %vm550, 1, 0
    %v615 = vsel %vm551, 1, 0
    %v616 = vsel %vm552, 1, 0
    %v617 = vsel %vm553, 1, 0
    %v618 = vsel %vm554, 1, 0
    %v619 = vsel %vm555, 1, 0
    %v620 = vsel %vm556, 1, 0
    %v621 = vsel %vm557, 1, 0
    %v622 = vsel %vm558, 1, 0
    %v623 = vsel %vm559, 1, 0
    %v624 = vsel %vm560, 1, 0
    %v625 = vsel %vm561, 1, 0
    %v626 = vsel %vm562, 1, 0
    %v627 = vsel %vm563, 1, 0
    %v628 = vsel %vm564, 1, 0
    %v629 = vsel %vm565, 1, 0
    %v630 = vsel %vm566, 1, 0
    %v631 = vsel %vm567, 1, 0
    %v632 = vsel %vm568, 1, 0
    %v633 = vsel %vm569, 1, 0
    %v634 = vsel %vm570, 1, 0
    %v635 = vsel %vm571, 1, 0
    %v636 = vsel %vm572, 1, 0
    %v637 = vsel %vm573, 1, 0
    %v638 = vsel %vm574, 1, 0
    %v639 = vsel %vm575, 1, 0
    %v640 = vsel %vm576, 1, 0
    %v641 = vsel %vm577, 1, 0
    %v642 = vsel %vm578, 1, 0
    %v643 = vsel %vm579, 1, 0
    %v644 = vsel %vm580, 1, 0
    %v645 = vsel %vm581, 1, 0
    %v646 = vsel %vm582, 1, 0
    %v647 = vsel %vm583, 1, 0
    %v648 = vsel %vm584, 1, 0
    %v649 = vsel %vm585, 1, 0
    %v650 = vsel %vm586, 1, 0
    %v651 = vsel %vm587, 1, 0
    %v652 = vsel %vm588, 1, 0
    %v653 = vsel %vm589, 1, 0
    %v654 = vsel %vm590, 1, 0
    %v655 = vcvt.s32.f32 %v591
    %v656 = vcvt.s32.f32 %v592
    %v657 = vcvt.s32.f32 %v593
    %v658 = vcvt.s32.f32 %v594
    %v659 = vcvt.s32.f32 %v595
    %v660 = vcvt.s32.f32 %v596
    %v661 = vcvt.s32.f32 %v597
    %v662 = vcvt.s32.f32 %v598
    %v663 = vcvt.s32.f32 %v599
    %v664 = vcvt.s32.f32 %v600
    %v665 = vcvt.s32.f32 %v601
    %v666 = vcvt.s32.f32 %v602
    %v667 = vcvt.s32.f32 %v603
    %v668 = vcvt.s32.f32 %v604
    %v669 = vcvt.s32.f32 %v605
    %v670 = vcvt.s32.f32 %v606
    %v671 = vcvt.s32.f32 %v607
    %v672 = vcvt.s32.f32 %v608
    %v673 = vcvt.s32.f32 %v609
    %v674 = vcvt.s32.f32 %v610
    %v675 = vcvt.s32.f32 %v611
    %v676 = vcvt.s32.f32 %v612
    %v677 = vcvt.s32.f32 %v613
    %v678 = vcvt.s32.f32 %v614
    %v679 = vcvt.s32.f32 %v615
    %v680 = vcvt.s32.f32 %v616
    %v681 = vcvt.s32.f32 %v617
    %v682 = vcvt.s32.f32 %v618
    %v683 = vcvt.s32.f32 %v619
    %v684 = vcvt.s32.f32 %v620
    %v685 = vcvt.s32.f32 %v621
    %v686 = vcvt.s32.f32 %v622
    %v687 = vcvt.s32.f32 %v623
    %v688 = vcvt.s32.f32 %v624
    %v689 = vcvt.s32.f32 %v625
    %v690 = vcvt.s32.f32 %v626
    %v691 = vcvt.s32.f32 %v627
    %v692 = vcvt.s32.f32 %v628
    %v693 = vcvt.s32.f32 %v629
    %v694 = vcvt.s32.f32 %v630
    %v695 = vcvt.s32.f32 %v631
    %v696 = vcvt.s32.f32 %v632
    %v697 = vcvt.s32.f32 %v633
    %v698 = vcvt.s32.f32 %v634
    %v699 = vcvt.s32.f32 %v635
    %v700 = vcvt.s32.f32 %v636
    %v701 = vcvt.s32.f32 %v637
    %v702 = vcvt.s32.f32 %v638
    %v703 = vcvt.s32.f32 %v639
    %v704 = vcvt.s32.f32 %v640
    %v705 = vcvt.s32.f32 %v641
    %v706 = vcvt.s32.f32 %v642
    %v707 = vcvt.s32.f32 %v643
    %v708 = vcvt.s32.f32 %v644
    %v709 = vcvt.s32.f32 %v645
    %v710 = vcvt.s32.f32 %v646
    %v711 = vcvt.s32.f32 %v647
    %v712 = vcvt.s32.f32 %v648
    %v713 = vcvt.s32.f32 %v649
    %v714 = vcvt.s32.f32 %v650
    %v715 = vcvt.s32.f32 %v651
    %v716 = vcvt.s32.f32 %v652
    %v717 = vcvt.s32.f32 %v653
    %v718 = vcvt.s32.f32 %v654
    %v719 = vshra.s32 %v397, 8
    %v720 = vshra.s32 %v398, 8
    %v721 = vshra.s32 %v399, 8
    %v722 = vshra.s32 %v400, 8
    %v723 = vshra.s32 %v401, 8
    %v724 = vshra.s32 %v402, 8
    %v725 = vshra.s32 %v403, 8
    %v726 = vshra.s32 %v404, 8
    %v727 = vshra.s32 %v405, 8
    %v728 = vshra.s32 %v406, 8
    %v729 = vshra.s32 %v407, 8
    %v730 = vshra.s32 %v408, 8
    %v731 = vshra.s32 %v409, 8
    %v732 = vshra.s32 %v410, 8
    %v733 = vshra.s32 %v411, 8
    %v734 = vshra.s32 %v412, 8
    %v735 = vshra.s32 %v413, 8
    %v736 = vshra.s32 %v414, 8
    %v737 = vshra.s32 %v415, 8
    %v738 = vshra.s32 %v416, 8
    %v739 = vshra.s32 %v417, 8
    %v740 = vshra.s32 %v418, 8
    %v741 = vshra.s32 %v419, 8
    %v742 = vshra.s32 %v420, 8
    %v743 = vshra.s32 %v421, 8
    %v744 = vshra.s32 %v422, 8
    %v745 = vshra.s32 %v423, 8
    %v746 = vshra.s32 %v424, 8
    %v747 = vshra.s32 %v425, 8
    %v748 = vshra.s32 %v426, 8
    %v749 = vshra.s32 %v427, 8
    %v750 = vshra.s32 %v428, 8
    %v751 = vshra.s32 %v429, 8
    %v752 = vshra.s32 %v430, 8
    %v753 = vshra.s32 %v431, 8
    %v754 = vshra.s32 %v432, 8
    %v755 = vshra.s32 %v433, 8
    %v756 = vshra.s32 %v434, 8
    %v757 = vshra.s32 %v435, 8
    %v758 = vshra.s32 %v436, 8
    %v759 = vshra.s32 %v437, 8
    %v760 = vshra.s32 %v438, 8
    %v761 = vshra.s32 %v439, 8
    %v762 = vshra.s32 %v440, 8
    %v763 = vshra.s32 %v441, 8
    %v764 = vshra.s32 %v442, 8
    %v765 = vshra.s32 %v443, 8
    %v766 = vshra.s32 %v444, 8
    %v767 = vshra.s32 %v445, 8
    %v768 = vshra.s32 %v446, 8
    %v769 = vshra.s32 %v447, 8
    %v770 = vshra.s32 %v448, 8
    %v771 = vshra.s32 %v449, 8
    %v772 = vshra.s32 %v450, 8
    %v773 = vshra.s32 %v451, 8
    %v774 = vshra.s32 %v452, 8
    %v775 = vshra.s32 %v453, 8
    %v776 = vshra.s32 %v454, 8
    %v777 = vshra.s32 %v455, 8
    %v778 = vshra.s32 %v456, 8
    %v779 = vshra.s32 %v457, 8
    %v780 = vshra.s32 %v458, 8
    %v781 = vshra.s32 %v459, 8
    %v782 = vshra.s32 %v460, 8
    %v783 = vmul.u32 %v719, 16
    %v784 = vmul.u32 %v720, 16
    %v785 = vmul.u32 %v721, 16
    %v786 = vmul.u32 %v722, 16
    %v787 = vmul.u32 %v723, 16
    %v788 = vmul.u32 %v724, 16
    %v789 = vmul.u32 %v725, 16
    %v790 = vmul.u32 %v726, 16
    %v791 = vmul.u32 %v727, 16
    %v792 = vmul.u32 %v728, 16
    %v793 = vmul.u32 %v729, 16
    %v794 = vmul.u32 %v730, 16
    %v795 = vmul.u32 %v731, 16
    %v796 = vmul.u32 %v732, 16
    %v797 = vmul.u32 %v733, 16
    %v798 = vmul.u32 %v734, 16
    %v799 = vmul.u32 %v735, 16
    %v800 = vmul.u32 %v736, 16
    %v801 = vmul.u32 %v737, 16
    %v802 = vmul.u32 %v738, 16
    %v803 = vmul.u32 %v739, 16
    %v804 = vmul.u32 %v740, 16
    %v805 = vmul.u32 %v741, 16
    %v806 = vmul.u32 %v742, 16
    %v807 = vmul.u32 %v743, 16
    %v808 = vmul.u32 %v744, 16
    %v809 = vmul.u32 %v745, 16
    %v810 = vmul.u32 %v746, 16
    %v811 = vmul.u32 %v747, 16
    %v812 = vmul.u32 %v748, 16
    %v813 = vmul.u32 %v749, 16
    %v814 = vmul.u32 %v750, 16
    %v815 = vmul.u32 %v751, 16
    %v816 = vmul.u32 %v752, 16
    %v817 = vmul.u32 %v753, 16
    %v818 = vmul.u32 %v754, 16
    %v819 = vmul.u32 %v755, 16
    %v820 = vmul.u32 %v756, 16
    %v821 = vmul.u32 %v757, 16
    %v822 = vmul.u32 %v758, 16
    %v823 = vmul.u32 %v759, 16
    %v824 = vmul.u32 %v760, 16
    %v825 = vmul.u32 %v761, 16
    %v826 = vmul.u32 %v762, 16
    %v827 = vmul.u32 %v763, 16
    %v828 = vmul.u32 %v764, 16
    %v829 = vmul.u32 %v765, 16
    %v830 = vmul.u32 %v766, 16
    %v831 = vmul.u32 %v767, 16
    %v832 = vmul.u32 %v768, 16
    %v833 = vmul.u32 %v769, 16
    %v834 = vmul.u32 %v770, 16
    %v835 = vmul.u32 %v771, 16
    %v836 = vmul.u32 %v772, 16
    %v837 = vmul.u32 %v773, 16
    %v838 = vmul.u32 %v774, 16
    %v839 = vmul.u32 %v775, 16
    %v840 = vmul.u32 %v776, 16
    %v841 = vmul.u32 %v777, 16
    %v842 = vmul.u32 %v778, 16
    %v843 = vmul.u32 %v779, 16
    %v844 = vmul.u32 %v780, 16
    %v845 = vmul.u32 %v781, 16
    %v846 = vmul.u32 %v782, 16
    %v847 = vand.u32 %v397, 15
    %v848 = vand.u32 %v398, 15
    %v849 = vand.u32 %v399, 15
    %v850 = vand.u32 %v400, 15
    %v851 = vand.u32 %v401, 15
    %v852 = vand.u32 %v402, 15
    %v853 = vand.u32 %v403, 15
    %v854 = vand.u32 %v404, 15
    %v855 = vand.u32 %v405, 15
    %v856 = vand.u32 %v406, 15
    %v857 = vand.u32 %v407, 15
    %v858 = vand.u32 %v408, 15
    %v859 = vand.u32 %v409, 15
    %v860 = vand.u32 %v410, 15
    %v861 = vand.u32 %v411, 15
    %v862 = vand.u32 %v412, 15
    %v863 = vand.u32 %v413, 15
    %v864 = vand.u32 %v414, 15
    %v865 = vand.u32 %v415, 15
    %v866 = vand.u32 %v416, 15
    %v867 = vand.u32 %v417, 15
    %v868 = vand.u32 %v418, 15
    %v869 = vand.u32 %v419, 15
    %v870 = vand.u32 %v420, 15
    %v871 = vand.u32 %v421, 15
    %v872 = vand.u32 %v422, 15
    %v873 = vand.u32 %v423, 15
    %v874 = vand.u32 %v424, 15
    %v875 = vand.u32 %v425, 15
    %v876 = vand.u32 %v426, 15
    %v877 = vand.u32 %v427, 15
    %v878 = vand.u32 %v428, 15
    %v879 = vand.u32 %v429, 15
    %v880 = vand.u32 %v430, 15
    %v881 = vand.u32 %v431, 15
    %v882 = vand.u32 %v432, 15
    %v883 = vand.u32 %v433, 15
    %v884 = vand.u32 %v434, 15
    %v885 = vand.u32 %v435, 15
    %v886 = vand.u32 %v436, 15
    %v887 = vand.u32 %v437, 15
    %v888 = vand.u32 %v438, 15
    %v889 = vand.u32 %v439, 15
    %v890 = vand.u32 %v440, 15
    %v891 = vand.u32 %v441, 15
    %v892 = vand.u32 %v442, 15
    %v893 = vand.u32 %v443, 15
    %v894 = vand.u32 %v444, 15
    %v895 = vand.u32 %v445, 15
    %v896 = vand.u32 %v446, 15
    %v897 = vand.u32 %v447, 15
    %v898 = vand.u32 %v448, 15
    %v899 = vand.u32 %v449, 15
    %v900 = vand.u32 %v450, 15
    %v901 = vand.u32 %v451, 15
    %v902 = vand.u32 %v452, 15
    %v903 = vand.u32 %v453, 15
    %v904 = vand.u32 %v454, 15
    %v905 = vand.u32 %v455, 15
    %v906 = vand.u32 %v456, 15
    %v907 = vand.u32 %v457, 15
    %v908 = vand.u32 %v458, 15
    %v909 = vand.u32 %v459, 15
    %v910 = vand.u32 %v460, 15
    %v911 = vadd.s32 %v783, %v847
    %v912 = vadd.s32 %v784, %v848
    %v913 = vadd.s32 %v785, %v849
    %v914 = vadd.s32 %v786, %v850
    %v915 = vadd.s32 %v787, %v851
    %v916 = vadd.s32 %v788, %v852
    %v917 = vadd.s32 %v789, %v853
    %v918 = vadd.s32 %v790, %v854
    %v919 = vadd.s32 %v791, %v855
    %v920 = vadd.s32 %v792, %v856
    %v921 = vadd.s32 %v793, %v857
    %v922 = vadd.s32 %v794, %v858
    %v923 = vadd.s32 %v795, %v859
    %v924 = vadd.s32 %v796, %v860
    %v925 = vadd.s32 %v797, %v861
    %v926 = vadd.s32 %v798, %v862
    %v927 = vadd.s32 %v799, %v863
    %v928 = vadd.s32 %v800, %v864
    %v929 = vadd.s32 %v801, %v865
    %v930 = vadd.s32 %v802, %v866
    %v931 = vadd.s32 %v803, %v867
    %v932 = vadd.s32 %v804, %v868
    %v933 = vadd.s32 %v805, %v869
    %v934 = vadd.s32 %v806, %v870
    %v935 = vadd.s32 %v807, %v871
    %v936 = vadd.s32 %v808, %v872
    %v937 = vadd.s32 %v809, %v873
    %v938 = vadd.s32 %v810, %v874
    %v939 = vadd.s32 %v811, %v875
    %v940 = vadd.s32 %v812, %v876
    %v941 = vadd.s32 %v813, %v877
    %v942 = vadd.s32 %v814, %v878
    %v943 = vadd.s32 %v815, %v879
    %v944 = vadd.s32 %v816, %v880
    %v945 = vadd.s32 %v817, %v881
    %v946 = vadd.s32 %v818, %v882
    %v947 = vadd.s32 %v819, %v883
    %v948 = vadd.s32 %v820, %v884
    %v949 = vadd.s32 %v821, %v885
    %v950 = vadd.s32 %v822, %v886
    %v951 = vadd.s32 %v823, %v887
    %v952 = vadd.s32 %v824, %v888
    %v953 = vadd.s32 %v825, %v889
    %v954 = vadd.s32 %v826, %v890
    %v955 = vadd.s32 %v827, %v891
    %v956 = vadd.s32 %v828, %v892
    %v957 = vadd.s32 %v829, %v893
    %v958 = vadd.s32 %v830, %v894
    %v959 = vadd.s32 %v831, %v895
    %v960 = vadd.s32 %v832, %v896
    %v961 = vadd.s32 %v833, %v897
    %v962 = vadd.s32 %v834, %v898
    %v963 = vadd.s32 %v835, %v899
    %v964 = vadd.s32 %v836, %v900
    %v965 = vadd.s32 %v837, %v901
    %v966 = vadd.s32 %v838, %v902
    %v967 = vadd.s32 %v839, %v903
    %v968 = vadd.s32 %v840, %v904
    %v969 = vadd.s32 %v841, %v905
    %v970 = vadd.s32 %v842, %v906
    %v971 = vadd.s32 %v843, %v907
    %v972 = vadd.s32 %v844, %v908
    %v973 = vadd.s32 %v845, %v909
    %v974 = vadd.s32 %v846, %v910
    %vm975 = vcmp.eq.s32.totalorder %v911, %v462
    %vm976 = vcmp.eq.s32.totalorder %v912, %v462
    %vm977 = vcmp.eq.s32.totalorder %v913, %v462
    %vm978 = vcmp.eq.s32.totalorder %v914, %v462
    %vm979 = vcmp.eq.s32.totalorder %v915, %v462
    %vm980 = vcmp.eq.s32.totalorder %v916, %v462
    %vm981 = vcmp.eq.s32.totalorder %v917, %v462
    %vm982 = vcmp.eq.s32.totalorder %v918, %v462
    %vm983 = vcmp.eq.s32.totalorder %v919, %v462
    %vm984 = vcmp.eq.s32.totalorder %v920, %v462
    %vm985 = vcmp.eq.s32.totalorder %v921, %v462
    %vm986 = vcmp.eq.s32.totalorder %v922, %v462
    %vm987 = vcmp.eq.s32.totalorder %v923, %v462
    %vm988 = vcmp.eq.s32.totalorder %v924, %v462
    %vm989 = vcmp.eq.s32.totalorder %v925, %v462
    %vm990 = vcmp.eq.s32.totalorder %v926, %v462
    %vm991 = vcmp.eq.s32.totalorder %v927, %v462
    %vm992 = vcmp.eq.s32.totalorder %v928, %v462
    %vm993 = vcmp.eq.s32.totalorder %v929, %v462
    %vm994 = vcmp.eq.s32.totalorder %v930, %v462
    %vm995 = vcmp.eq.s32.totalorder %v931, %v462
    %vm996 = vcmp.eq.s32.totalorder %v932, %v462
    %vm997 = vcmp.eq.s32.totalorder %v933, %v462
    %vm998 = vcmp.eq.s32.totalorder %v934, %v462
    %vm999 = vcmp.eq.s32.totalorder %v935, %v462
    %vm1000 = vcmp.eq.s32.totalorder %v936, %v462
    %vm1001 = vcmp.eq.s32.totalorder %v937, %v462
    %vm1002 = vcmp.eq.s32.totalorder %v938, %v462
    %vm1003 = vcmp.eq.s32.totalorder %v939, %v462
    %vm1004 = vcmp.eq.s32.totalorder %v940, %v462
    %vm1005 = vcmp.eq.s32.totalorder %v941, %v462
    %vm1006 = vcmp.eq.s32.totalorder %v942, %v462
    %vm1007 = vcmp.eq.s32.totalorder %v943, %v462
    %vm1008 = vcmp.eq.s32.totalorder %v944, %v462
    %vm1009 = vcmp.eq.s32.totalorder %v945, %v462
    %vm1010 = vcmp.eq.s32.totalorder %v946, %v462
    %vm1011 = vcmp.eq.s32.totalorder %v947, %v462
    %vm1012 = vcmp.eq.s32.totalorder %v948, %v462
    %vm1013 = vcmp.eq.s32.totalorder %v949, %v462
    %vm1014 = vcmp.eq.s32.totalorder %v950, %v462
    %vm1015 = vcmp.eq.s32.totalorder %v951, %v462
    %vm1016 = vcmp.eq.s32.totalorder %v952, %v462
    %vm1017 = vcmp.eq.s32.totalorder %v953, %v462
    %vm1018 = vcmp.eq.s32.totalorder %v954, %v462
    %vm1019 = vcmp.eq.s32.totalorder %v955, %v462
    %vm1020 = vcmp.eq.s32.totalorder %v956, %v462
    %vm1021 = vcmp.eq.s32.totalorder %v957, %v462
    %vm1022 = vcmp.eq.s32.totalorder %v958, %v462
    %vm1023 = vcmp.eq.s32.totalorder %v959, %v462
    %vm1024 = vcmp.eq.s32.totalorder %v960, %v462
    %vm1025 = vcmp.eq.s32.totalorder %v961, %v462
    %vm1026 = vcmp.eq.s32.totalorder %v962, %v462
    %vm1027 = vcmp.eq.s32.totalorder %v963, %v462
    %vm1028 = vcmp.eq.s32.totalorder %v964, %v462
    %vm1029 = vcmp.eq.s32.totalorder %v965, %v462
    %vm1030 = vcmp.eq.s32.totalorder %v966, %v462
    %vm1031 = vcmp.eq.s32.totalorder %v967, %v462
    %vm1032 = vcmp.eq.s32.totalorder %v968, %v462
    %vm1033 = vcmp.eq.s32.totalorder %v969, %v462
    %vm1034 = vcmp.eq.s32.totalorder %v970, %v462
    %vm1035 = vcmp.eq.s32.totalorder %v971, %v462
    %vm1036 = vcmp.eq.s32.totalorder %v972, %v462
    %vm1037 = vcmp.eq.s32.totalorder %v973, %v462
    %vm1038 = vcmp.eq.s32.totalorder %v974, %v462
    %v1039 = vsel %vm975, 1, 0
    %v1040 = vsel %vm976, 1, 0
    %v1041 = vsel %vm977, 1, 0
    %v1042 = vsel %vm978, 1, 0
    %v1043 = vsel %vm979, 1, 0
    %v1044 = vsel %vm980, 1, 0
    %v1045 = vsel %vm981, 1, 0
    %v1046 = vsel %vm982, 1, 0
    %v1047 = vsel %vm983, 1, 0
    %v1048 = vsel %vm984, 1, 0
    %v1049 = vsel %vm985, 1, 0
    %v1050 = vsel %vm986, 1, 0
    %v1051 = vsel %vm987, 1, 0
    %v1052 = vsel %vm988, 1, 0
    %v1053 = vsel %vm989, 1, 0
    %v1054 = vsel %vm990, 1, 0
    %v1055 = vsel %vm991, 1, 0
    %v1056 = vsel %vm992, 1, 0
    %v1057 = vsel %vm993, 1, 0
    %v1058 = vsel %vm994, 1, 0
    %v1059 = vsel %vm995, 1, 0
    %v1060 = vsel %vm996, 1, 0
    %v1061 = vsel %vm997, 1, 0
    %v1062 = vsel %vm998, 1, 0
    %v1063 = vsel %vm999, 1, 0
    %v1064 = vsel %vm1000, 1, 0
    %v1065 = vsel %vm1001, 1, 0
    %v1066 = vsel %vm1002, 1, 0
    %v1067 = vsel %vm1003, 1, 0
    %v1068 = vsel %vm1004, 1, 0
    %v1069 = vsel %vm1005, 1, 0
    %v1070 = vsel %vm1006, 1, 0
    %v1071 = vsel %vm1007, 1, 0
    %v1072 = vsel %vm1008, 1, 0
    %v1073 = vsel %vm1009, 1, 0
    %v1074 = vsel %vm1010, 1, 0
    %v1075 = vsel %vm1011, 1, 0
    %v1076 = vsel %vm1012, 1, 0
    %v1077 = vsel %vm1013, 1, 0
    %v1078 = vsel %vm1014, 1, 0
    %v1079 = vsel %vm1015, 1, 0
    %v1080 = vsel %vm1016, 1, 0
    %v1081 = vsel %vm1017, 1, 0
    %v1082 = vsel %vm1018, 1, 0
    %v1083 = vsel %vm1019, 1, 0
    %v1084 = vsel %vm1020, 1, 0
    %v1085 = vsel %vm1021, 1, 0
    %v1086 = vsel %vm1022, 1, 0
    %v1087 = vsel %vm1023, 1, 0
    %v1088 = vsel %vm1024, 1, 0
    %v1089 = vsel %vm1025, 1, 0
    %v1090 = vsel %vm1026, 1, 0
    %v1091 = vsel %vm1027, 1, 0
    %v1092 = vsel %vm1028, 1, 0
    %v1093 = vsel %vm1029, 1, 0
    %v1094 = vsel %vm1030, 1, 0
    %v1095 = vsel %vm1031, 1, 0
    %v1096 = vsel %vm1032, 1, 0
    %v1097 = vsel %vm1033, 1, 0
    %v1098 = vsel %vm1034, 1, 0
    %v1099 = vsel %vm1035, 1, 0
    %v1100 = vsel %vm1036, 1, 0
    %v1101 = vsel %vm1037, 1, 0
    %v1102 = vsel %vm1038, 1, 0
    %v1103 = vcvt.s32.f32 %v1039
    %v1104 = vcvt.s32.f32 %v1040
    %v1105 = vcvt.s32.f32 %v1041
    %v1106 = vcvt.s32.f32 %v1042
    %v1107 = vcvt.s32.f32 %v1043
    %v1108 = vcvt.s32.f32 %v1044
    %v1109 = vcvt.s32.f32 %v1045
    %v1110 = vcvt.s32.f32 %v1046
    %v1111 = vcvt.s32.f32 %v1047
    %v1112 = vcvt.s32.f32 %v1048
    %v1113 = vcvt.s32.f32 %v1049
    %v1114 = vcvt.s32.f32 %v1050
    %v1115 = vcvt.s32.f32 %v1051
    %v1116 = vcvt.s32.f32 %v1052
    %v1117 = vcvt.s32.f32 %v1053
    %v1118 = vcvt.s32.f32 %v1054
    %v1119 = vcvt.s32.f32 %v1055
    %v1120 = vcvt.s32.f32 %v1056
    %v1121 = vcvt.s32.f32 %v1057
    %v1122 = vcvt.s32.f32 %v1058
    %v1123 = vcvt.s32.f32 %v1059
    %v1124 = vcvt.s32.f32 %v1060
    %v1125 = vcvt.s32.f32 %v1061
    %v1126 = vcvt.s32.f32 %v1062
    %v1127 = vcvt.s32.f32 %v1063
    %v1128 = vcvt.s32.f32 %v1064
    %v1129 = vcvt.s32.f32 %v1065
    %v1130 = vcvt.s32.f32 %v1066
    %v1131 = vcvt.s32.f32 %v1067
    %v1132 = vcvt.s32.f32 %v1068
    %v1133 = vcvt.s32.f32 %v1069
    %v1134 = vcvt.s32.f32 %v1070
    %v1135 = vcvt.s32.f32 %v1071
    %v1136 = vcvt.s32.f32 %v1072
    %v1137 = vcvt.s32.f32 %v1073
    %v1138 = vcvt.s32.f32 %v1074
    %v1139 = vcvt.s32.f32 %v1075
    %v1140 = vcvt.s32.f32 %v1076
    %v1141 = vcvt.s32.f32 %v1077
    %v1142 = vcvt.s32.f32 %v1078
    %v1143 = vcvt.s32.f32 %v1079
    %v1144 = vcvt.s32.f32 %v1080
    %v1145 = vcvt.s32.f32 %v1081
    %v1146 = vcvt.s32.f32 %v1082
    %v1147 = vcvt.s32.f32 %v1083
    %v1148 = vcvt.s32.f32 %v1084
    %v1149 = vcvt.s32.f32 %v1085
    %v1150 = vcvt.s32.f32 %v1086
    %v1151 = vcvt.s32.f32 %v1087
    %v1152 = vcvt.s32.f32 %v1088
    %v1153 = vcvt.s32.f32 %v1089
    %v1154 = vcvt.s32.f32 %v1090
    %v1155 = vcvt.s32.f32 %v1091
    %v1156 = vcvt.s32.f32 %v1092
    %v1157 = vcvt.s32.f32 %v1093
    %v1158 = vcvt.s32.f32 %v1094
    %v1159 = vcvt.s32.f32 %v1095
    %v1160 = vcvt.s32.f32 %v1096
    %v1161 = vcvt.s32.f32 %v1097
    %v1162 = vcvt.s32.f32 %v1098
    %v1163 = vcvt.s32.f32 %v1099
    %v1164 = vcvt.s32.f32 %v1100
    %v1165 = vcvt.s32.f32 %v1101
    %v1166 = vcvt.s32.f32 %v1102
    %vm1167 = vcmask 261120
    %v1169 = vsel %vm1167, %v655, 0
    %v1172 = vsel %vm1167, %v656, 0
    %v1175 = vsel %vm1167, %v657, 0
    %v1178 = vsel %vm1167, %v658, 0
    %v1181 = vsel %vm1167, %v659, 0
    %v1184 = vsel %vm1167, %v660, 0
    %v1187 = vsel %vm1167, %v661, 0
    %v1190 = vsel %vm1167, %v662, 0
    %v1193 = vsel %vm1167, %v663, 0
    %v1196 = vsel %vm1167, %v664, 0
    %v1199 = vsel %vm1167, %v665, 0
    %v1202 = vsel %vm1167, %v666, 0
    %v1205 = vsel %vm1167, %v667, 0
    %v1208 = vsel %vm1167, %v668, 0
    %v1211 = vsel %vm1167, %v669, 0
    %v1214 = vsel %vm1167, %v670, 0
    %v1217 = vsel %vm1167, %v671, 0
    %v1220 = vsel %vm1167, %v672, 0
    %v1223 = vsel %vm1167, %v673, 0
    %v1226 = vsel %vm1167, %v674, 0
    %v1229 = vsel %vm1167, %v675, 0
    %v1232 = vsel %vm1167, %v676, 0
    %v1235 = vsel %vm1167, %v677, 0
    %v1238 = vsel %vm1167, %v678, 0
    %v1241 = vsel %vm1167, %v679, 0
    %v1244 = vsel %vm1167, %v680, 0
    %v1247 = vsel %vm1167, %v681, 0
    %v1250 = vsel %vm1167, %v682, 0
    %v1253 = vsel %vm1167, %v683, 0
    %v1256 = vsel %vm1167, %v684, 0
    %v1259 = vsel %vm1167, %v685, 0
    %v1262 = vsel %vm1167, %v686, 0
    %v1265 = vsel %vm1167, %v687, 0
    %v1268 = vsel %vm1167, %v688, 0
    %v1271 = vsel %vm1167, %v689, 0
    %v1274 = vsel %vm1167, %v690, 0
    %v1277 = vsel %vm1167, %v691, 0
    %v1280 = vsel %vm1167, %v692, 0
    %v1283 = vsel %vm1167, %v693, 0
    %v1286 = vsel %vm1167, %v694, 0
    %v1289 = vsel %vm1167, %v695, 0
    %v1292 = vsel %vm1167, %v696, 0
    %v1295 = vsel %vm1167, %v697, 0
    %v1298 = vsel %vm1167, %v698, 0
    %v1301 = vsel %vm1167, %v699, 0
    %v1304 = vsel %vm1167, %v700, 0
    %v1307 = vsel %vm1167, %v701, 0
    %v1310 = vsel %vm1167, %v702, 0
    %v1313 = vsel %vm1167, %v703, 0
    %v1316 = vsel %vm1167, %v704, 0
    %v1319 = vsel %vm1167, %v705, 0
    %v1322 = vsel %vm1167, %v706, 0
    %v1325 = vsel %vm1167, %v707, 0
    %v1328 = vsel %vm1167, %v708, 0
    %v1331 = vsel %vm1167, %v709, 0
    %v1334 = vsel %vm1167, %v710, 0
    %v1337 = vsel %vm1167, %v711, 0
    %v1340 = vsel %vm1167, %v712, 0
    %v1343 = vsel %vm1167, %v713, 0
    %v1346 = vsel %vm1167, %v714, 0
    %v1349 = vsel %vm1167, %v715, 0
    %v1352 = vsel %vm1167, %v716, 0
    %v1355 = vsel %vm1167, %v717, 0
    %v1358 = vsel %vm1167, %v718, 0
    %1360 = vmatprep.subr.mxu0 0.0
    %1361 = vmatpush1.msra.mxu0 %v53
    %1362 = vmatprep.subr.mxu0 0.0
    %1363 = vmatpush1.msra.mxu0 %v54
    %1364 = vmatprep.subr.mxu0 0.0
    %1365 = vmatpush1.msra.mxu0 %v55
    %1366 = vmatprep.subr.mxu0 0.0
    %1367 = vmatpush1.msra.mxu0 %v56
    %1368 = vmatprep.subr.mxu0 0.0
    %1369 = vmatpush1.msra.mxu0 0.0
    %1370 = vmatprep.subr.mxu0 0.0
    %1371 = vmatpush1.msra.mxu0 0.0
    %1372 = vmatprep.subr.mxu0 0.0
    %1373 = vmatpush1.msra.mxu0 0.0
    %1374 = vmatprep.subr.mxu0 0.0
    %1375 = vmatpush1.msra.mxu0 0.0
    %1376 = vmatprep.subr.mxu0 0.0
    %1377 = vmatpush1.msra.mxu0 0.0
    %1378 = vmatprep.subr.mxu0 0.0
    %1379 = vmatpush1.msra.mxu0 0.0
    %1380 = vmatprep.subr.mxu0 0.0
    %1381 = vmatpush1.msra.mxu0 0.0
    %1382 = vmatprep.subr.mxu0 0.0
    %1383 = vmatpush1.msra.mxu0 0.0
    %1384 = vmatprep.subr.mxu0 0.0
    %1385 = vmatpush1.msra.mxu0 0.0
    %1386 = vmatprep.subr.mxu0 0.0
    %1387 = vmatpush1.msra.mxu0 0.0
    %1388 = vmatprep.subr.mxu0 0.0
    %1389 = vmatpush1.msra.mxu0 0.0
    %1390 = vmatprep.subr.mxu0 0.0
    %1391 = vmatpush1.msra.mxu0 0.0
    %1392 = vmatprep.subr.mxu0 0.0
    %1393 = vmatpush1.msra.mxu0 0.0
    %1394 = vmatprep.subr.mxu0 0.0
    %1395 = vmatpush1.msra.mxu0 0.0
    %1396 = vmatprep.subr.mxu0 0.0
    %1397 = vmatpush1.msra.mxu0 0.0
    %1398 = vmatprep.subr.mxu0 0.0
    %1399 = vmatpush1.msra.mxu0 0.0
    %1400 = vmatprep.subr.mxu0 0.0
    %1401 = vmatpush1.msra.mxu0 0.0
    %1402 = vmatprep.subr.mxu0 0.0
    %1403 = vmatpush1.msra.mxu0 0.0
    %1404 = vmatprep.subr.mxu0 0.0
    %1405 = vmatpush1.msra.mxu0 0.0
    %1406 = vmatprep.subr.mxu0 0.0
    %1407 = vmatpush1.msra.mxu0 0.0
    %1408 = vmatprep.subr.mxu0 0.0
    %1409 = vmatpush1.msra.mxu0 0.0
    %1410 = vmatprep.subr.mxu0 0.0
    %1411 = vmatpush1.msra.mxu0 0.0
    %1412 = vmatprep.subr.mxu0 0.0
    %1413 = vmatpush1.msra.mxu0 0.0
    %1414 = vmatprep.subr.mxu0 0.0
    %1415 = vmatpush1.msra.mxu0 0.0
    %1416 = vmatprep.subr.mxu0 0.0
    %1417 = vmatpush1.msra.mxu0 0.0
    %1418 = vmatprep.subr.mxu0 0.0
    %1419 = vmatpush1.msra.mxu0 0.0
    %1420 = vmatprep.subr.mxu0 0.0
    %1421 = vmatpush1.msra.mxu0 0.0
    %1422 = vmatprep.subr.mxu0 0.0
    %1423 = vmatpush1.msra.mxu0 0.0
    %1424 = vmatprep.mubr.f32.mxu0 0.0
    %1425 = vmatmul.mubr.f32.gmra.mrb[0].mxu0 %v1169
    %v1426 = vpop.f32.mrb[0].mxu0
    %v1427 = vadd.f32 0.0, %v1426
    %v1428 = vpop.f32.mrb[0].mxu0
    %1429 = vmatprep.mubr.f32.mxu0 0.0
    %1430 = vmatmul.mubr.f32.gmra.mrb[0].mxu0 %v1172
    %v1431 = vpop.f32.mrb[0].mxu0
    %v1432 = vadd.f32 0.0, %v1431
    %v1433 = vpop.f32.mrb[0].mxu0
    %1434 = vmatprep.mubr.f32.mxu0 0.0
    %1435 = vmatmul.mubr.f32.gmra.mrb[0].mxu0 %v1175
    %v1436 = vpop.f32.mrb[0].mxu0
    %v1437 = vadd.f32 0.0, %v1436
    %v1438 = vpop.f32.mrb[0].mxu0
    %1439 = vmatprep.mubr.f32.mxu0 0.0
    %1440 = vmatmul.mubr.f32.gmra.mrb[0].mxu0 %v1178
    %v1441 = vpop.f32.mrb[0].mxu0
    %v1442 = vadd.f32 0.0, %v1441
    %v1443 = vpop.f32.mrb[0].mxu0
    %1444 = vmatprep.mubr.f32.mxu0 0.0
    %1445 = vmatmul.mubr.f32.gmra.mrb[0].mxu0 %v1181
    %v1446 = vpop.f32.mrb[0].mxu0
    %v1447 = vadd.f32 0.0, %v1446
    %v1448 = vpop.f32.mrb[0].mxu0
    %1449 = vmatprep.mubr.f32.mxu0 0.0
    %1450 = vmatmul.mubr.f32.gmra.mrb[0].mxu0 %v1184
    %v1451 = vpop.f32.mrb[0].mxu0
    %v1452 = vadd.f32 0.0, %v1451
    %v1453 = vpop.f32.mrb[0].mxu0
    %1454 = vmatprep.mubr.f32.mxu0 0.0
    %1455 = vmatmul.mubr.f32.gmra.mrb[0].mxu0 %v1187
    %v1456 = vpop.f32.mrb[0].mxu0
    %v1457 = vadd.f32 0.0, %v1456
    %v1458 = vpop.f32.mrb[0].mxu0
    %1459 = vmatprep.mubr.f32.mxu0 0.0
    %1460 = vmatmul.mubr.f32.gmra.mrb[0].mxu0 %v1190
    %v1461 = vpop.f32.mrb[0].mxu0
    %v1462 = vadd.f32 0.0, %v1461
    %v1463 = vpop.f32.mrb[0].mxu0
    %1464 = vmatprep.mubr.f32.mxu0 0.0
    %1465 = vmatmul.mubr.f32.gmra.mrb[0].mxu0 %v1193
    %v1466 = vpop.f32.mrb[0].mxu0
    %v1467 = vadd.f32 0.0, %v1466
    %v1468 = vpop.f32.mrb[0].mxu0
    %1469 = vmatprep.mubr.f32.mxu0 0.0
    %1470 = vmatmul.mubr.f32.gmra.mrb[0].mxu0 %v1196
    %v1471 = vpop.f32.mrb[0].mxu0
    %v1472 = vadd.f32 0.0, %v1471
    %v1473 = vpop.f32.mrb[0].mxu0
    %1474 = vmatprep.mubr.f32.mxu0 0.0
    %1475 = vmatmul.mubr.f32.gmra.mrb[0].mxu0 %v1199
    %v1476 = vpop.f32.mrb[0].mxu0
    %v1477 = vadd.f32 0.0, %v1476
    %v1478 = vpop.f32.mrb[0].mxu0
    %1479 = vmatprep.mubr.f32.mxu0 0.0
    %1480 = vmatmul.mubr.f32.gmra.mrb[0].mxu0 %v1202
    %v1481 = vpop.f32.mrb[0].mxu0
    %v1482 = vadd.f32 0.0, %v1481
    %v1483 = vpop.f32.mrb[0].mxu0
    %1484 = vmatprep.mubr.f32.mxu0 0.0
    %1485 = vmatmul.mubr.f32.gmra.mrb[0].mxu0 %v1205
    %v1486 = vpop.f32.mrb[0].mxu0
    %v1487 = vadd.f32 0.0, %v1486
    %v1488 = vpop.f32.mrb[0].mxu0
    %1489 = vmatprep.mubr.f32.mxu0 0.0
    %1490 = vmatmul.mubr.f32.gmra.mrb[0].mxu0 %v1208
    %v1491 = vpop.f32.mrb[0].mxu0
    %v1492 = vadd.f32 0.0, %v1491
    %v1493 = vpop.f32.mrb[0].mxu0
    %1494 = vmatprep.mubr.f32.mxu0 0.0
    %1495 = vmatmul.mubr.f32.gmra.mrb[0].mxu0 %v1211
    %v1496 = vpop.f32.mrb[0].mxu0
    %v1497 = vadd.f32 0.0, %v1496
    %v1498 = vpop.f32.mrb[0].mxu0
    %1499 = vmatprep.mubr.f32.mxu0 0.0
    %1500 = vmatmul.mubr.f32.gmra.mrb[0].mxu0 %v1214
    %v1501 = vpop.f32.mrb[0].mxu0
    %v1502 = vadd.f32 0.0, %v1501
    %v1503 = vpop.f32.mrb[0].mxu0
    %1504 = vmatprep.mubr.f32.mxu0 0.0
    %1505 = vmatmul.mubr.f32.gmra.mrb[0].mxu0 %v1217
    %v1506 = vpop.f32.mrb[0].mxu0
    %v1507 = vadd.f32 0.0, %v1506
    %v1508 = vpop.f32.mrb[0].mxu0
    %1509 = vmatprep.mubr.f32.mxu0 0.0
    %1510 = vmatmul.mubr.f32.gmra.mrb[0].mxu0 %v1220
    %v1511 = vpop.f32.mrb[0].mxu0
    %v1512 = vadd.f32 0.0, %v1511
    %v1513 = vpop.f32.mrb[0].mxu0
    %1514 = vmatprep.mubr.f32.mxu0 0.0
    %1515 = vmatmul.mubr.f32.gmra.mrb[0].mxu0 %v1223
    %v1516 = vpop.f32.mrb[0].mxu0
    %v1517 = vadd.f32 0.0, %v1516
    %v1518 = vpop.f32.mrb[0].mxu0
    %1519 = vmatprep.mubr.f32.mxu0 0.0
    %1520 = vmatmul.mubr.f32.gmra.mrb[0].mxu0 %v1226
    %v1521 = vpop.f32.mrb[0].mxu0
    %v1522 = vadd.f32 0.0, %v1521
    %v1523 = vpop.f32.mrb[0].mxu0
    %1524 = vmatprep.mubr.f32.mxu0 0.0
    %1525 = vmatmul.mubr.f32.gmra.mrb[0].mxu0 %v1229
    %v1526 = vpop.f32.mrb[0].mxu0
    %v1527 = vadd.f32 0.0, %v1526
    %v1528 = vpop.f32.mrb[0].mxu0
    %1529 = vmatprep.mubr.f32.mxu0 0.0
    %1530 = vmatmul.mubr.f32.gmra.mrb[0].mxu0 %v1232
    %v1531 = vpop.f32.mrb[0].mxu0
    %v1532 = vadd.f32 0.0, %v1531
    %v1533 = vpop.f32.mrb[0].mxu0
    %1534 = vmatprep.mubr.f32.mxu0 0.0
    %1535 = vmatmul.mubr.f32.gmra.mrb[0].mxu0 %v1235
    %v1536 = vpop.f32.mrb[0].mxu0
    %v1537 = vadd.f32 0.0, %v1536
    %v1538 = vpop.f32.mrb[0].mxu0
    %1539 = vmatprep.mubr.f32.mxu0 0.0
    %1540 = vmatmul.mubr.f32.gmra.mrb[0].mxu0 %v1238
    %v1541 = vpop.f32.mrb[0].mxu0
    %v1542 = vadd.f32 0.0, %v1541
    %v1543 = vpop.f32.mrb[0].mxu0
    %1544 = vmatprep.mubr.f32.mxu0 0.0
    %1545 = vmatmul.mubr.f32.gmra.mrb[0].mxu0 %v1241
    %v1546 = vpop.f32.mrb[0].mxu0
    %v1547 = vadd.f32 0.0, %v1546
    %v1548 = vpop.f32.mrb[0].mxu0
    %1549 = vmatprep.mubr.f32.mxu0 0.0
    %1550 = vmatmul.mubr.f32.gmra.mrb[0].mxu0 %v1244
    %v1551 = vpop.f32.mrb[0].mxu0
    %v1552 = vadd.f32 0.0, %v1551
    %v1553 = vpop.f32.mrb[0].mxu0
    %1554 = vmatprep.mubr.f32.mxu0 0.0
    %1555 = vmatmul.mubr.f32.gmra.mrb[0].mxu0 %v1247
    %v1556 = vpop.f32.mrb[0].mxu0
    %v1557 = vadd.f32 0.0, %v1556
    %v1558 = vpop.f32.mrb[0].mxu0
    %1559 = vmatprep.mubr.f32.mxu0 0.0
    %1560 = vmatmul.mubr.f32.gmra.mrb[0].mxu0 %v1250
    %v1561 = vpop.f32.mrb[0].mxu0
    %v1562 = vadd.f32 0.0, %v1561
    %v1563 = vpop.f32.mrb[0].mxu0
    %1564 = vmatprep.mubr.f32.mxu0 0.0
    %1565 = vmatmul.mubr.f32.gmra.mrb[0].mxu0 %v1253
    %v1566 = vpop.f32.mrb[0].mxu0
    %v1567 = vadd.f32 0.0, %v1566
    %v1568 = vpop.f32.mrb[0].mxu0
    %1569 = vmatprep.mubr.f32.mxu0 0.0
    %1570 = vmatmul.mubr.f32.gmra.mrb[0].mxu0 %v1256
    %v1571 = vpop.f32.mrb[0].mxu0
    %v1572 = vadd.f32 0.0, %v1571
    %v1573 = vpop.f32.mrb[0].mxu0
    %1574 = vmatprep.mubr.f32.mxu0 0.0
    %1575 = vmatmul.mubr.f32.gmra.mrb[0].mxu0 %v1259
    %v1576 = vpop.f32.mrb[0].mxu0
    %v1577 = vadd.f32 0.0, %v1576
    %v1578 = vpop.f32.mrb[0].mxu0
    %1579 = vmatprep.mubr.f32.mxu0 0.0
    %1580 = vmatmul.mubr.f32.gmra.mrb[0].mxu0 %v1262
    %v1581 = vpop.f32.mrb[0].mxu0
    %v1582 = vadd.f32 0.0, %v1581
    %v1583 = vpop.f32.mrb[0].mxu0
    %1584 = vmatprep.mubr.f32.mxu0 0.0
    %1585 = vmatmul.mubr.f32.gmra.mrb[0].mxu0 %v1265
    %v1586 = vpop.f32.mrb[0].mxu0
    %v1587 = vadd.f32 0.0, %v1586
    %v1588 = vpop.f32.mrb[0].mxu0
    %1589 = vmatprep.mubr.f32.mxu0 0.0
    %1590 = vmatmul.mubr.f32.gmra.mrb[0].mxu0 %v1268
    %v1591 = vpop.f32.mrb[0].mxu0
    %v1592 = vadd.f32 0.0, %v1591
    %v1593 = vpop.f32.mrb[0].mxu0
    %1594 = vmatprep.mubr.f32.mxu0 0.0
    %1595 = vmatmul.mubr.f32.gmra.mrb[0].mxu0 %v1271
    %v1596 = vpop.f32.mrb[0].mxu0
    %v1597 = vadd.f32 0.0, %v1596
    %v1598 = vpop.f32.mrb[0].mxu0
    %1599 = vmatprep.mubr.f32.mxu0 0.0
    %1600 = vmatmul.mubr.f32.gmra.mrb[0].mxu0 %v1274
    %v1601 = vpop.f32.mrb[0].mxu0
    %v1602 = vadd.f32 0.0, %v1601
    %v1603 = vpop.f32.mrb[0].mxu0
    %1604 = vmatprep.mubr.f32.mxu0 0.0
    %1605 = vmatmul.mubr.f32.gmra.mrb[0].mxu0 %v1277
    %v1606 = vpop.f32.mrb[0].mxu0
    %v1607 = vadd.f32 0.0, %v1606
    %v1608 = vpop.f32.mrb[0].mxu0
    %1609 = vmatprep.mubr.f32.mxu0 0.0
    %1610 = vmatmul.mubr.f32.gmra.mrb[0].mxu0 %v1280
    %v1611 = vpop.f32.mrb[0].mxu0
    %v1612 = vadd.f32 0.0, %v1611
    %v1613 = vpop.f32.mrb[0].mxu0
    %1614 = vmatprep.mubr.f32.mxu0 0.0
    %1615 = vmatmul.mubr.f32.gmra.mrb[0].mxu0 %v1283
    %v1616 = vpop.f32.mrb[0].mxu0
    %v1617 = vadd.f32 0.0, %v1616
    %v1618 = vpop.f32.mrb[0].mxu0
    %1619 = vmatprep.mubr.f32.mxu0 0.0
    %1620 = vmatmul.mubr.f32.gmra.mrb[0].mxu0 %v1286
    %v1621 = vpop.f32.mrb[0].mxu0
    %v1622 = vadd.f32 0.0, %v1621
    %v1623 = vpop.f32.mrb[0].mxu0
    %1624 = vmatprep.mubr.f32.mxu0 0.0
    %1625 = vmatmul.mubr.f32.gmra.mrb[0].mxu0 %v1289
    %v1626 = vpop.f32.mrb[0].mxu0
    %v1627 = vadd.f32 0.0, %v1626
    %v1628 = vpop.f32.mrb[0].mxu0
    %1629 = vmatprep.mubr.f32.mxu0 0.0
    %1630 = vmatmul.mubr.f32.gmra.mrb[0].mxu0 %v1292
    %v1631 = vpop.f32.mrb[0].mxu0
    %v1632 = vadd.f32 0.0, %v1631
    %v1633 = vpop.f32.mrb[0].mxu0
    %1634 = vmatprep.mubr.f32.mxu0 0.0
    %1635 = vmatmul.mubr.f32.gmra.mrb[0].mxu0 %v1295
    %v1636 = vpop.f32.mrb[0].mxu0
    %v1637 = vadd.f32 0.0, %v1636
    %v1638 = vpop.f32.mrb[0].mxu0
    %1639 = vmatprep.mubr.f32.mxu0 0.0
    %1640 = vmatmul.mubr.f32.gmra.mrb[0].mxu0 %v1298
    %v1641 = vpop.f32.mrb[0].mxu0
    %v1642 = vadd.f32 0.0, %v1641
    %v1643 = vpop.f32.mrb[0].mxu0
    %1644 = vmatprep.mubr.f32.mxu0 0.0
    %1645 = vmatmul.mubr.f32.gmra.mrb[0].mxu0 %v1301
    %v1646 = vpop.f32.mrb[0].mxu0
    %v1647 = vadd.f32 0.0, %v1646
    %v1648 = vpop.f32.mrb[0].mxu0
    %1649 = vmatprep.mubr.f32.mxu0 0.0
    %1650 = vmatmul.mubr.f32.gmra.mrb[0].mxu0 %v1304
    %v1651 = vpop.f32.mrb[0].mxu0
    %v1652 = vadd.f32 0.0, %v1651
    %v1653 = vpop.f32.mrb[0].mxu0
    %1654 = vmatprep.mubr.f32.mxu0 0.0
    %1655 = vmatmul.mubr.f32.gmra.mrb[0].mxu0 %v1307
    %v1656 = vpop.f32.mrb[0].mxu0
    %v1657 = vadd.f32 0.0, %v1656
    %v1658 = vpop.f32.mrb[0].mxu0
    %1659 = vmatprep.mubr.f32.mxu0 0.0
    %1660 = vmatmul.mubr.f32.gmra.mrb[0].mxu0 %v1310
    %v1661 = vpop.f32.mrb[0].mxu0
    %v1662 = vadd.f32 0.0, %v1661
    %v1663 = vpop.f32.mrb[0].mxu0
    %1664 = vmatprep.mubr.f32.mxu0 0.0
    %1665 = vmatmul.mubr.f32.gmra.mrb[0].mxu0 %v1313
    %v1666 = vpop.f32.mrb[0].mxu0
    %v1667 = vadd.f32 0.0, %v1666
    %v1668 = vpop.f32.mrb[0].mxu0
    %1669 = vmatprep.mubr.f32.mxu0 0.0
    %1670 = vmatmul.mubr.f32.gmra.mrb[0].mxu0 %v1316
    %v1671 = vpop.f32.mrb[0].mxu0
    %v1672 = vadd.f32 0.0, %v1671
    %v1673 = vpop.f32.mrb[0].mxu0
    %1674 = vmatprep.mubr.f32.mxu0 0.0
    %1675 = vmatmul.mubr.f32.gmra.mrb[0].mxu0 %v1319
    %v1676 = vpop.f32.mrb[0].mxu0
    %v1677 = vadd.f32 0.0, %v1676
    %v1678 = vpop.f32.mrb[0].mxu0
    %1679 = vmatprep.mubr.f32.mxu0 0.0
    %1680 = vmatmul.mubr.f32.gmra.mrb[0].mxu0 %v1322
    %v1681 = vpop.f32.mrb[0].mxu0
    %v1682 = vadd.f32 0.0, %v1681
    %v1683 = vpop.f32.mrb[0].mxu0
    %1684 = vmatprep.mubr.f32.mxu0 0.0
    %1685 = vmatmul.mubr.f32.gmra.mrb[0].mxu0 %v1325
    %v1686 = vpop.f32.mrb[0].mxu0
    %v1687 = vadd.f32 0.0, %v1686
    %v1688 = vpop.f32.mrb[0].mxu0
    %1689 = vmatprep.mubr.f32.mxu0 0.0
    %1690 = vmatmul.mubr.f32.gmra.mrb[0].mxu0 %v1328
    %v1691 = vpop.f32.mrb[0].mxu0
    %v1692 = vadd.f32 0.0, %v1691
    %v1693 = vpop.f32.mrb[0].mxu0
    %1694 = vmatprep.mubr.f32.mxu0 0.0
    %1695 = vmatmul.mubr.f32.gmra.mrb[0].mxu0 %v1331
    %v1696 = vpop.f32.mrb[0].mxu0
    %v1697 = vadd.f32 0.0, %v1696
    %v1698 = vpop.f32.mrb[0].mxu0
    %1699 = vmatprep.mubr.f32.mxu0 0.0
    %1700 = vmatmul.mubr.f32.gmra.mrb[0].mxu0 %v1334
    %v1701 = vpop.f32.mrb[0].mxu0
    %v1702 = vadd.f32 0.0, %v1701
    %v1703 = vpop.f32.mrb[0].mxu0
    %1704 = vmatprep.mubr.f32.mxu0 0.0
    %1705 = vmatmul.mubr.f32.gmra.mrb[0].mxu0 %v1337
    %v1706 = vpop.f32.mrb[0].mxu0
    %v1707 = vadd.f32 0.0, %v1706
    %v1708 = vpop.f32.mrb[0].mxu0
    %1709 = vmatprep.mubr.f32.mxu0 0.0
    %1710 = vmatmul.mubr.f32.gmra.mrb[0].mxu0 %v1340
    %v1711 = vpop.f32.mrb[0].mxu0
    %v1712 = vadd.f32 0.0, %v1711
    %v1713 = vpop.f32.mrb[0].mxu0
    %1714 = vmatprep.mubr.f32.mxu0 0.0
    %1715 = vmatmul.mubr.f32.gmra.mrb[0].mxu0 %v1343
    %v1716 = vpop.f32.mrb[0].mxu0
    %v1717 = vadd.f32 0.0, %v1716
    %v1718 = vpop.f32.mrb[0].mxu0
    %1719 = vmatprep.mubr.f32.mxu0 0.0
    %1720 = vmatmul.mubr.f32.gmra.mrb[0].mxu0 %v1346
    %v1721 = vpop.f32.mrb[0].mxu0
    %v1722 = vadd.f32 0.0, %v1721
    %v1723 = vpop.f32.mrb[0].mxu0
    %1724 = vmatprep.mubr.f32.mxu0 0.0
    %1725 = vmatmul.mubr.f32.gmra.mrb[0].mxu0 %v1349
    %v1726 = vpop.f32.mrb[0].mxu0
    %v1727 = vadd.f32 0.0, %v1726
    %v1728 = vpop.f32.mrb[0].mxu0
    %1729 = vmatprep.mubr.f32.mxu0 0.0
    %1730 = vmatmul.mubr.f32.gmra.mrb[0].mxu0 %v1352
    %v1731 = vpop.f32.mrb[0].mxu0
    %v1732 = vadd.f32 0.0, %v1731
    %v1733 = vpop.f32.mrb[0].mxu0
    %1734 = vmatprep.mubr.f32.mxu0 0.0
    %1735 = vmatmul.mubr.f32.gmra.mrb[0].mxu0 %v1355
    %v1736 = vpop.f32.mrb[0].mxu0
    %v1737 = vadd.f32 0.0, %v1736
    %v1738 = vpop.f32.mrb[0].mxu0
    %1739 = vmatprep.mubr.f32.mxu0 0.0
    %1740 = vmatmul.mubr.f32.gmra.mrb[0].mxu0 %v1358
    %v1741 = vpop.f32.mrb[0].mxu0
    %v1742 = vadd.f32 0.0, %v1741
    %v1743 = vpop.f32.mrb[0].mxu0
    %1744 = vdwg.mxu0
    %v1746 = vsel %vm1167, %v1103, 0
    %v1749 = vsel %vm1167, %v1104, 0
    %v1752 = vsel %vm1167, %v1105, 0
    %v1755 = vsel %vm1167, %v1106, 0
    %v1758 = vsel %vm1167, %v1107, 0
    %v1761 = vsel %vm1167, %v1108, 0
    %v1764 = vsel %vm1167, %v1109, 0
    %v1767 = vsel %vm1167, %v1110, 0
    %v1770 = vsel %vm1167, %v1111, 0
    %v1773 = vsel %vm1167, %v1112, 0
    %v1776 = vsel %vm1167, %v1113, 0
    %v1779 = vsel %vm1167, %v1114, 0
    %v1782 = vsel %vm1167, %v1115, 0
    %v1785 = vsel %vm1167, %v1116, 0
    %v1788 = vsel %vm1167, %v1117, 0
    %v1791 = vsel %vm1167, %v1118, 0
    %v1794 = vsel %vm1167, %v1119, 0
    %v1797 = vsel %vm1167, %v1120, 0
    %v1800 = vsel %vm1167, %v1121, 0
    %v1803 = vsel %vm1167, %v1122, 0
    %v1806 = vsel %vm1167, %v1123, 0
    %v1809 = vsel %vm1167, %v1124, 0
    %v1812 = vsel %vm1167, %v1125, 0
    %v1815 = vsel %vm1167, %v1126, 0
    %v1818 = vsel %vm1167, %v1127, 0
    %v1821 = vsel %vm1167, %v1128, 0
    %v1824 = vsel %vm1167, %v1129, 0
    %v1827 = vsel %vm1167, %v1130, 0
    %v1830 = vsel %vm1167, %v1131, 0
    %v1833 = vsel %vm1167, %v1132, 0
    %v1836 = vsel %vm1167, %v1133, 0
    %v1839 = vsel %vm1167, %v1134, 0
    %v1842 = vsel %vm1167, %v1135, 0
    %v1845 = vsel %vm1167, %v1136, 0
    %v1848 = vsel %vm1167, %v1137, 0
    %v1851 = vsel %vm1167, %v1138, 0
    %v1854 = vsel %vm1167, %v1139, 0
    %v1857 = vsel %vm1167, %v1140, 0
    %v1860 = vsel %vm1167, %v1141, 0
    %v1863 = vsel %vm1167, %v1142, 0
    %v1866 = vsel %vm1167, %v1143, 0
    %v1869 = vsel %vm1167, %v1144, 0
    %v1872 = vsel %vm1167, %v1145, 0
    %v1875 = vsel %vm1167, %v1146, 0
    %v1878 = vsel %vm1167, %v1147, 0
    %v1881 = vsel %vm1167, %v1148, 0
    %v1884 = vsel %vm1167, %v1149, 0
    %v1887 = vsel %vm1167, %v1150, 0
    %v1890 = vsel %vm1167, %v1151, 0
    %v1893 = vsel %vm1167, %v1152, 0
    %v1896 = vsel %vm1167, %v1153, 0
    %v1899 = vsel %vm1167, %v1154, 0
    %v1902 = vsel %vm1167, %v1155, 0
    %v1905 = vsel %vm1167, %v1156, 0
    %v1908 = vsel %vm1167, %v1157, 0
    %v1911 = vsel %vm1167, %v1158, 0
    %v1914 = vsel %vm1167, %v1159, 0
    %v1917 = vsel %vm1167, %v1160, 0
    %v1920 = vsel %vm1167, %v1161, 0
    %v1923 = vsel %vm1167, %v1162, 0
    %v1926 = vsel %vm1167, %v1163, 0
    %v1929 = vsel %vm1167, %v1164, 0
    %v1932 = vsel %vm1167, %v1165, 0
    %v1935 = vsel %vm1167, %v1166, 0
    %1937 = vmatprep.subr.mxu0 0.0
    %1938 = vmatpush1.msra.mxu0 %v53
    %1939 = vmatprep.subr.mxu0 0.0
    %1940 = vmatpush1.msra.mxu0 %v54
    %1941 = vmatprep.subr.mxu0 0.0
    %1942 = vmatpush1.msra.mxu0 %v55
    %1943 = vmatprep.subr.mxu0 0.0
    %1944 = vmatpush1.msra.mxu0 %v56
    %1945 = vmatprep.subr.mxu0 0.0
    %1946 = vmatpush1.msra.mxu0 0.0
    %1947 = vmatprep.subr.mxu0 0.0
    %1948 = vmatpush1.msra.mxu0 0.0
    %1949 = vmatprep.subr.mxu0 0.0
    %1950 = vmatpush1.msra.mxu0 0.0
    %1951 = vmatprep.subr.mxu0 0.0
    %1952 = vmatpush1.msra.mxu0 0.0
    %1953 = vmatprep.subr.mxu0 0.0
    %1954 = vmatpush1.msra.mxu0 0.0
    %1955 = vmatprep.subr.mxu0 0.0
    %1956 = vmatpush1.msra.mxu0 0.0
    %1957 = vmatprep.subr.mxu0 0.0
    %1958 = vmatpush1.msra.mxu0 0.0
    %1959 = vmatprep.subr.mxu0 0.0
    %1960 = vmatpush1.msra.mxu0 0.0
    %1961 = vmatprep.subr.mxu0 0.0
    %1962 = vmatpush1.msra.mxu0 0.0
    %1963 = vmatprep.subr.mxu0 0.0
    %1964 = vmatpush1.msra.mxu0 0.0
    %1965 = vmatprep.subr.mxu0 0.0
    %1966 = vmatpush1.msra.mxu0 0.0
    %1967 = vmatprep.subr.mxu0 0.0
    %1968 = vmatpush1.msra.mxu0 0.0
    %1969 = vmatprep.subr.mxu0 0.0
    %1970 = vmatpush1.msra.mxu0 0.0
    %1971 = vmatprep.subr.mxu0 0.0
    %1972 = vmatpush1.msra.mxu0 0.0
    %1973 = vmatprep.subr.mxu0 0.0
    %1974 = vmatpush1.msra.mxu0 0.0
    %1975 = vmatprep.subr.mxu0 0.0
    %1976 = vmatpush1.msra.mxu0 0.0
    %1977 = vmatprep.subr.mxu0 0.0
    %1978 = vmatpush1.msra.mxu0 0.0
    %1979 = vmatprep.subr.mxu0 0.0
    %1980 = vmatpush1.msra.mxu0 0.0
    %1981 = vmatprep.subr.mxu0 0.0
    %1982 = vmatpush1.msra.mxu0 0.0
    %1983 = vmatprep.subr.mxu0 0.0
    %1984 = vmatpush1.msra.mxu0 0.0
    %1985 = vmatprep.subr.mxu0 0.0
    %1986 = vmatpush1.msra.mxu0 0.0
    %1987 = vmatprep.subr.mxu0 0.0
    %1988 = vmatpush1.msra.mxu0 0.0
    %1989 = vmatprep.subr.mxu0 0.0
    %1990 = vmatpush1.msra.mxu0 0.0
    %1991 = vmatprep.subr.mxu0 0.0
    %1992 = vmatpush1.msra.mxu0 0.0
    %1993 = vmatprep.subr.mxu0 0.0
    %1994 = vmatpush1.msra.mxu0 0.0
    %1995 = vmatprep.subr.mxu0 0.0
    %1996 = vmatpush1.msra.mxu0 0.0
    %1997 = vmatprep.subr.mxu0 0.0
    %1998 = vmatpush1.msra.mxu0 0.0
    %1999 = vmatprep.subr.mxu0 0.0
    %2000 = vmatpush1.msra.mxu0 0.0
    %2001 = vmatprep.mubr.f32.mxu0 0.0
    %2002 = vmatmul.mubr.f32.gmra.mrb[0].mxu0 %v1746
    %v2003 = vpop.f32.mrb[0].mxu0
    %v2004 = vadd.f32 0.0, %v2003
    %v2005 = vpop.f32.mrb[0].mxu0
    %2006 = vmatprep.mubr.f32.mxu0 0.0
    %2007 = vmatmul.mubr.f32.gmra.mrb[0].mxu0 %v1749
    %v2008 = vpop.f32.mrb[0].mxu0
    %v2009 = vadd.f32 0.0, %v2008
    %v2010 = vpop.f32.mrb[0].mxu0
    %2011 = vmatprep.mubr.f32.mxu0 0.0
    %2012 = vmatmul.mubr.f32.gmra.mrb[0].mxu0 %v1752
    %v2013 = vpop.f32.mrb[0].mxu0
    %v2014 = vadd.f32 0.0, %v2013
    %v2015 = vpop.f32.mrb[0].mxu0
    %2016 = vmatprep.mubr.f32.mxu0 0.0
    %2017 = vmatmul.mubr.f32.gmra.mrb[0].mxu0 %v1755
    %v2018 = vpop.f32.mrb[0].mxu0
    %v2019 = vadd.f32 0.0, %v2018
    %v2020 = vpop.f32.mrb[0].mxu0
    %2021 = vmatprep.mubr.f32.mxu0 0.0
    %2022 = vmatmul.mubr.f32.gmra.mrb[0].mxu0 %v1758
    %v2023 = vpop.f32.mrb[0].mxu0
    %v2024 = vadd.f32 0.0, %v2023
    %v2025 = vpop.f32.mrb[0].mxu0
    %2026 = vmatprep.mubr.f32.mxu0 0.0
    %2027 = vmatmul.mubr.f32.gmra.mrb[0].mxu0 %v1761
    %v2028 = vpop.f32.mrb[0].mxu0
    %v2029 = vadd.f32 0.0, %v2028
    %v2030 = vpop.f32.mrb[0].mxu0
    %2031 = vmatprep.mubr.f32.mxu0 0.0
    %2032 = vmatmul.mubr.f32.gmra.mrb[0].mxu0 %v1764
    %v2033 = vpop.f32.mrb[0].mxu0
    %v2034 = vadd.f32 0.0, %v2033
    %v2035 = vpop.f32.mrb[0].mxu0
    %2036 = vmatprep.mubr.f32.mxu0 0.0
    %2037 = vmatmul.mubr.f32.gmra.mrb[0].mxu0 %v1767
    %v2038 = vpop.f32.mrb[0].mxu0
    %v2039 = vadd.f32 0.0, %v2038
    %v2040 = vpop.f32.mrb[0].mxu0
    %2041 = vmatprep.mubr.f32.mxu0 0.0
    %2042 = vmatmul.mubr.f32.gmra.mrb[0].mxu0 %v1770
    %v2043 = vpop.f32.mrb[0].mxu0
    %v2044 = vadd.f32 0.0, %v2043
    %v2045 = vpop.f32.mrb[0].mxu0
    %2046 = vmatprep.mubr.f32.mxu0 0.0
    %2047 = vmatmul.mubr.f32.gmra.mrb[0].mxu0 %v1773
    %v2048 = vpop.f32.mrb[0].mxu0
    %v2049 = vadd.f32 0.0, %v2048
    %v2050 = vpop.f32.mrb[0].mxu0
    %2051 = vmatprep.mubr.f32.mxu0 0.0
    %2052 = vmatmul.mubr.f32.gmra.mrb[0].mxu0 %v1776
    %v2053 = vpop.f32.mrb[0].mxu0
    %v2054 = vadd.f32 0.0, %v2053
    %v2055 = vpop.f32.mrb[0].mxu0
    %2056 = vmatprep.mubr.f32.mxu0 0.0
    %2057 = vmatmul.mubr.f32.gmra.mrb[0].mxu0 %v1779
    %v2058 = vpop.f32.mrb[0].mxu0
    %v2059 = vadd.f32 0.0, %v2058
    %v2060 = vpop.f32.mrb[0].mxu0
    %2061 = vmatprep.mubr.f32.mxu0 0.0
    %2062 = vmatmul.mubr.f32.gmra.mrb[0].mxu0 %v1782
    %v2063 = vpop.f32.mrb[0].mxu0
    %v2064 = vadd.f32 0.0, %v2063
    %v2065 = vpop.f32.mrb[0].mxu0
    %2066 = vmatprep.mubr.f32.mxu0 0.0
    %2067 = vmatmul.mubr.f32.gmra.mrb[0].mxu0 %v1785
    %v2068 = vpop.f32.mrb[0].mxu0
    %v2069 = vadd.f32 0.0, %v2068
    %v2070 = vpop.f32.mrb[0].mxu0
    %2071 = vmatprep.mubr.f32.mxu0 0.0
    %2072 = vmatmul.mubr.f32.gmra.mrb[0].mxu0 %v1788
    %v2073 = vpop.f32.mrb[0].mxu0
    %v2074 = vadd.f32 0.0, %v2073
    %v2075 = vpop.f32.mrb[0].mxu0
    %2076 = vmatprep.mubr.f32.mxu0 0.0
    %2077 = vmatmul.mubr.f32.gmra.mrb[0].mxu0 %v1791
    %v2078 = vpop.f32.mrb[0].mxu0
    %v2079 = vadd.f32 0.0, %v2078
    %v2080 = vpop.f32.mrb[0].mxu0
    %2081 = vmatprep.mubr.f32.mxu0 0.0
    %2082 = vmatmul.mubr.f32.gmra.mrb[0].mxu0 %v1794
    %v2083 = vpop.f32.mrb[0].mxu0
    %v2084 = vadd.f32 0.0, %v2083
    %v2085 = vpop.f32.mrb[0].mxu0
    %2086 = vmatprep.mubr.f32.mxu0 0.0
    %2087 = vmatmul.mubr.f32.gmra.mrb[0].mxu0 %v1797
    %v2088 = vpop.f32.mrb[0].mxu0
    %v2089 = vadd.f32 0.0, %v2088
    %v2090 = vpop.f32.mrb[0].mxu0
    %2091 = vmatprep.mubr.f32.mxu0 0.0
    %2092 = vmatmul.mubr.f32.gmra.mrb[0].mxu0 %v1800
    %v2093 = vpop.f32.mrb[0].mxu0
    %v2094 = vadd.f32 0.0, %v2093
    %v2095 = vpop.f32.mrb[0].mxu0
    %2096 = vmatprep.mubr.f32.mxu0 0.0
    %2097 = vmatmul.mubr.f32.gmra.mrb[0].mxu0 %v1803
    %v2098 = vpop.f32.mrb[0].mxu0
    %v2099 = vadd.f32 0.0, %v2098
    %v2100 = vpop.f32.mrb[0].mxu0
    %2101 = vmatprep.mubr.f32.mxu0 0.0
    %2102 = vmatmul.mubr.f32.gmra.mrb[0].mxu0 %v1806
    %v2103 = vpop.f32.mrb[0].mxu0
    %v2104 = vadd.f32 0.0, %v2103
    %v2105 = vpop.f32.mrb[0].mxu0
    %2106 = vmatprep.mubr.f32.mxu0 0.0
    %2107 = vmatmul.mubr.f32.gmra.mrb[0].mxu0 %v1809
    %v2108 = vpop.f32.mrb[0].mxu0
    %v2109 = vadd.f32 0.0, %v2108
    %v2110 = vpop.f32.mrb[0].mxu0
    %2111 = vmatprep.mubr.f32.mxu0 0.0
    %2112 = vmatmul.mubr.f32.gmra.mrb[0].mxu0 %v1812
    %v2113 = vpop.f32.mrb[0].mxu0
    %v2114 = vadd.f32 0.0, %v2113
    %v2115 = vpop.f32.mrb[0].mxu0
    %2116 = vmatprep.mubr.f32.mxu0 0.0
    %2117 = vmatmul.mubr.f32.gmra.mrb[0].mxu0 %v1815
    %v2118 = vpop.f32.mrb[0].mxu0
    %v2119 = vadd.f32 0.0, %v2118
    %v2120 = vpop.f32.mrb[0].mxu0
    %2121 = vmatprep.mubr.f32.mxu0 0.0
    %2122 = vmatmul.mubr.f32.gmra.mrb[0].mxu0 %v1818
    %v2123 = vpop.f32.mrb[0].mxu0
    %v2124 = vadd.f32 0.0, %v2123
    %v2125 = vpop.f32.mrb[0].mxu0
    %2126 = vmatprep.mubr.f32.mxu0 0.0
    %2127 = vmatmul.mubr.f32.gmra.mrb[0].mxu0 %v1821
    %v2128 = vpop.f32.mrb[0].mxu0
    %v2129 = vadd.f32 0.0, %v2128
    %v2130 = vpop.f32.mrb[0].mxu0
    %2131 = vmatprep.mubr.f32.mxu0 0.0
    %2132 = vmatmul.mubr.f32.gmra.mrb[0].mxu0 %v1824
    %v2133 = vpop.f32.mrb[0].mxu0
    %v2134 = vadd.f32 0.0, %v2133
    %v2135 = vpop.f32.mrb[0].mxu0
    %2136 = vmatprep.mubr.f32.mxu0 0.0
    %2137 = vmatmul.mubr.f32.gmra.mrb[0].mxu0 %v1827
    %v2138 = vpop.f32.mrb[0].mxu0
    %v2139 = vadd.f32 0.0, %v2138
    %v2140 = vpop.f32.mrb[0].mxu0
    %2141 = vmatprep.mubr.f32.mxu0 0.0
    %2142 = vmatmul.mubr.f32.gmra.mrb[0].mxu0 %v1830
    %v2143 = vpop.f32.mrb[0].mxu0
    %v2144 = vadd.f32 0.0, %v2143
    %v2145 = vpop.f32.mrb[0].mxu0
    %2146 = vmatprep.mubr.f32.mxu0 0.0
    %2147 = vmatmul.mubr.f32.gmra.mrb[0].mxu0 %v1833
    %v2148 = vpop.f32.mrb[0].mxu0
    %v2149 = vadd.f32 0.0, %v2148
    %v2150 = vpop.f32.mrb[0].mxu0
    %2151 = vmatprep.mubr.f32.mxu0 0.0
    %2152 = vmatmul.mubr.f32.gmra.mrb[0].mxu0 %v1836
    %v2153 = vpop.f32.mrb[0].mxu0
    %v2154 = vadd.f32 0.0, %v2153
    %v2155 = vpop.f32.mrb[0].mxu0
    %2156 = vmatprep.mubr.f32.mxu0 0.0
    %2157 = vmatmul.mubr.f32.gmra.mrb[0].mxu0 %v1839
    %v2158 = vpop.f32.mrb[0].mxu0
    %v2159 = vadd.f32 0.0, %v2158
    %v2160 = vpop.f32.mrb[0].mxu0
    %2161 = vmatprep.mubr.f32.mxu0 0.0
    %2162 = vmatmul.mubr.f32.gmra.mrb[0].mxu0 %v1842
    %v2163 = vpop.f32.mrb[0].mxu0
    %v2164 = vadd.f32 0.0, %v2163
    %v2165 = vpop.f32.mrb[0].mxu0
    %2166 = vmatprep.mubr.f32.mxu0 0.0
    %2167 = vmatmul.mubr.f32.gmra.mrb[0].mxu0 %v1845
    %v2168 = vpop.f32.mrb[0].mxu0
    %v2169 = vadd.f32 0.0, %v2168
    %v2170 = vpop.f32.mrb[0].mxu0
    %2171 = vmatprep.mubr.f32.mxu0 0.0
    %2172 = vmatmul.mubr.f32.gmra.mrb[0].mxu0 %v1848
    %v2173 = vpop.f32.mrb[0].mxu0
    %v2174 = vadd.f32 0.0, %v2173
    %v2175 = vpop.f32.mrb[0].mxu0
    %2176 = vmatprep.mubr.f32.mxu0 0.0
    %2177 = vmatmul.mubr.f32.gmra.mrb[0].mxu0 %v1851
    %v2178 = vpop.f32.mrb[0].mxu0
    %v2179 = vadd.f32 0.0, %v2178
    %v2180 = vpop.f32.mrb[0].mxu0
    %2181 = vmatprep.mubr.f32.mxu0 0.0
    %2182 = vmatmul.mubr.f32.gmra.mrb[0].mxu0 %v1854
    %v2183 = vpop.f32.mrb[0].mxu0
    %v2184 = vadd.f32 0.0, %v2183
    %v2185 = vpop.f32.mrb[0].mxu0
    %2186 = vmatprep.mubr.f32.mxu0 0.0
    %2187 = vmatmul.mubr.f32.gmra.mrb[0].mxu0 %v1857
    %v2188 = vpop.f32.mrb[0].mxu0
    %v2189 = vadd.f32 0.0, %v2188
    %v2190 = vpop.f32.mrb[0].mxu0
    %2191 = vmatprep.mubr.f32.mxu0 0.0
    %2192 = vmatmul.mubr.f32.gmra.mrb[0].mxu0 %v1860
    %v2193 = vpop.f32.mrb[0].mxu0
    %v2194 = vadd.f32 0.0, %v2193
    %v2195 = vpop.f32.mrb[0].mxu0
    %2196 = vmatprep.mubr.f32.mxu0 0.0
    %2197 = vmatmul.mubr.f32.gmra.mrb[0].mxu0 %v1863
    %v2198 = vpop.f32.mrb[0].mxu0
    %v2199 = vadd.f32 0.0, %v2198
    %v2200 = vpop.f32.mrb[0].mxu0
    %2201 = vmatprep.mubr.f32.mxu0 0.0
    %2202 = vmatmul.mubr.f32.gmra.mrb[0].mxu0 %v1866
    %v2203 = vpop.f32.mrb[0].mxu0
    %v2204 = vadd.f32 0.0, %v2203
    %v2205 = vpop.f32.mrb[0].mxu0
    %2206 = vmatprep.mubr.f32.mxu0 0.0
    %2207 = vmatmul.mubr.f32.gmra.mrb[0].mxu0 %v1869
    %v2208 = vpop.f32.mrb[0].mxu0
    %v2209 = vadd.f32 0.0, %v2208
    %v2210 = vpop.f32.mrb[0].mxu0
    %2211 = vmatprep.mubr.f32.mxu0 0.0
    %2212 = vmatmul.mubr.f32.gmra.mrb[0].mxu0 %v1872
    %v2213 = vpop.f32.mrb[0].mxu0
    %v2214 = vadd.f32 0.0, %v2213
    %v2215 = vpop.f32.mrb[0].mxu0
    %2216 = vmatprep.mubr.f32.mxu0 0.0
    %2217 = vmatmul.mubr.f32.gmra.mrb[0].mxu0 %v1875
    %v2218 = vpop.f32.mrb[0].mxu0
    %v2219 = vadd.f32 0.0, %v2218
    %v2220 = vpop.f32.mrb[0].mxu0
    %2221 = vmatprep.mubr.f32.mxu0 0.0
    %2222 = vmatmul.mubr.f32.gmra.mrb[0].mxu0 %v1878
    %v2223 = vpop.f32.mrb[0].mxu0
    %v2224 = vadd.f32 0.0, %v2223
    %v2225 = vpop.f32.mrb[0].mxu0
    %2226 = vmatprep.mubr.f32.mxu0 0.0
    %2227 = vmatmul.mubr.f32.gmra.mrb[0].mxu0 %v1881
    %v2228 = vpop.f32.mrb[0].mxu0
    %v2229 = vadd.f32 0.0, %v2228
    %v2230 = vpop.f32.mrb[0].mxu0
    %2231 = vmatprep.mubr.f32.mxu0 0.0
    %2232 = vmatmul.mubr.f32.gmra.mrb[0].mxu0 %v1884
    %v2233 = vpop.f32.mrb[0].mxu0
    %v2234 = vadd.f32 0.0, %v2233
    %v2235 = vpop.f32.mrb[0].mxu0
    %2236 = vmatprep.mubr.f32.mxu0 0.0
    %2237 = vmatmul.mubr.f32.gmra.mrb[0].mxu0 %v1887
    %v2238 = vpop.f32.mrb[0].mxu0
    %v2239 = vadd.f32 0.0, %v2238
    %v2240 = vpop.f32.mrb[0].mxu0
    %2241 = vmatprep.mubr.f32.mxu0 0.0
    %2242 = vmatmul.mubr.f32.gmra.mrb[0].mxu0 %v1890
    %v2243 = vpop.f32.mrb[0].mxu0
    %v2244 = vadd.f32 0.0, %v2243
    %v2245 = vpop.f32.mrb[0].mxu0
    %2246 = vmatprep.mubr.f32.mxu0 0.0
    %2247 = vmatmul.mubr.f32.gmra.mrb[0].mxu0 %v1893
    %v2248 = vpop.f32.mrb[0].mxu0
    %v2249 = vadd.f32 0.0, %v2248
    %v2250 = vpop.f32.mrb[0].mxu0
    %2251 = vmatprep.mubr.f32.mxu0 0.0
    %2252 = vmatmul.mubr.f32.gmra.mrb[0].mxu0 %v1896
    %v2253 = vpop.f32.mrb[0].mxu0
    %v2254 = vadd.f32 0.0, %v2253
    %v2255 = vpop.f32.mrb[0].mxu0
    %2256 = vmatprep.mubr.f32.mxu0 0.0
    %2257 = vmatmul.mubr.f32.gmra.mrb[0].mxu0 %v1899
    %v2258 = vpop.f32.mrb[0].mxu0
    %v2259 = vadd.f32 0.0, %v2258
    %v2260 = vpop.f32.mrb[0].mxu0
    %2261 = vmatprep.mubr.f32.mxu0 0.0
    %2262 = vmatmul.mubr.f32.gmra.mrb[0].mxu0 %v1902
    %v2263 = vpop.f32.mrb[0].mxu0
    %v2264 = vadd.f32 0.0, %v2263
    %v2265 = vpop.f32.mrb[0].mxu0
    %2266 = vmatprep.mubr.f32.mxu0 0.0
    %2267 = vmatmul.mubr.f32.gmra.mrb[0].mxu0 %v1905
    %v2268 = vpop.f32.mrb[0].mxu0
    %v2269 = vadd.f32 0.0, %v2268
    %v2270 = vpop.f32.mrb[0].mxu0
    %2271 = vmatprep.mubr.f32.mxu0 0.0
    %2272 = vmatmul.mubr.f32.gmra.mrb[0].mxu0 %v1908
    %v2273 = vpop.f32.mrb[0].mxu0
    %v2274 = vadd.f32 0.0, %v2273
    %v2275 = vpop.f32.mrb[0].mxu0
    %2276 = vmatprep.mubr.f32.mxu0 0.0
    %2277 = vmatmul.mubr.f32.gmra.mrb[0].mxu0 %v1911
    %v2278 = vpop.f32.mrb[0].mxu0
    %v2279 = vadd.f32 0.0, %v2278
    %v2280 = vpop.f32.mrb[0].mxu0
    %2281 = vmatprep.mubr.f32.mxu0 0.0
    %2282 = vmatmul.mubr.f32.gmra.mrb[0].mxu0 %v1914
    %v2283 = vpop.f32.mrb[0].mxu0
    %v2284 = vadd.f32 0.0, %v2283
    %v2285 = vpop.f32.mrb[0].mxu0
    %2286 = vmatprep.mubr.f32.mxu0 0.0
    %2287 = vmatmul.mubr.f32.gmra.mrb[0].mxu0 %v1917
    %v2288 = vpop.f32.mrb[0].mxu0
    %v2289 = vadd.f32 0.0, %v2288
    %v2290 = vpop.f32.mrb[0].mxu0
    %2291 = vmatprep.mubr.f32.mxu0 0.0
    %2292 = vmatmul.mubr.f32.gmra.mrb[0].mxu0 %v1920
    %v2293 = vpop.f32.mrb[0].mxu0
    %v2294 = vadd.f32 0.0, %v2293
    %v2295 = vpop.f32.mrb[0].mxu0
    %2296 = vmatprep.mubr.f32.mxu0 0.0
    %2297 = vmatmul.mubr.f32.gmra.mrb[0].mxu0 %v1923
    %v2298 = vpop.f32.mrb[0].mxu0
    %v2299 = vadd.f32 0.0, %v2298
    %v2300 = vpop.f32.mrb[0].mxu0
    %2301 = vmatprep.mubr.f32.mxu0 0.0
    %2302 = vmatmul.mubr.f32.gmra.mrb[0].mxu0 %v1926
    %v2303 = vpop.f32.mrb[0].mxu0
    %v2304 = vadd.f32 0.0, %v2303
    %v2305 = vpop.f32.mrb[0].mxu0
    %2306 = vmatprep.mubr.f32.mxu0 0.0
    %2307 = vmatmul.mubr.f32.gmra.mrb[0].mxu0 %v1929
    %v2308 = vpop.f32.mrb[0].mxu0
    %v2309 = vadd.f32 0.0, %v2308
    %v2310 = vpop.f32.mrb[0].mxu0
    %2311 = vmatprep.mubr.f32.mxu0 0.0
    %2312 = vmatmul.mubr.f32.gmra.mrb[0].mxu0 %v1932
    %v2313 = vpop.f32.mrb[0].mxu0
    %v2314 = vadd.f32 0.0, %v2313
    %v2315 = vpop.f32.mrb[0].mxu0
    %2316 = vmatprep.mubr.f32.mxu0 0.0
    %2317 = vmatmul.mubr.f32.gmra.mrb[0].mxu0 %v1935
    %v2318 = vpop.f32.mrb[0].mxu0
    %v2319 = vadd.f32 0.0, %v2318
    %v2320 = vpop.f32.mrb[0].mxu0
    %2321 = vdwg.mxu0
    %v2322 = vsub.f32 %v1427, %v2004
    %v2323 = vsub.f32 %v1432, %v2009
    %v2324 = vsub.f32 %v1437, %v2014
    %v2325 = vsub.f32 %v1442, %v2019
    %v2326 = vsub.f32 %v1447, %v2024
    %v2327 = vsub.f32 %v1452, %v2029
    %v2328 = vsub.f32 %v1457, %v2034
    %v2329 = vsub.f32 %v1462, %v2039
    %v2330 = vsub.f32 %v1467, %v2044
    %v2331 = vsub.f32 %v1472, %v2049
    %v2332 = vsub.f32 %v1477, %v2054
    %v2333 = vsub.f32 %v1482, %v2059
    %v2334 = vsub.f32 %v1487, %v2064
    %v2335 = vsub.f32 %v1492, %v2069
    %v2336 = vsub.f32 %v1497, %v2074
    %v2337 = vsub.f32 %v1502, %v2079
    %v2338 = vsub.f32 %v1507, %v2084
    %v2339 = vsub.f32 %v1512, %v2089
    %v2340 = vsub.f32 %v1517, %v2094
    %v2341 = vsub.f32 %v1522, %v2099
    %v2342 = vsub.f32 %v1527, %v2104
    %v2343 = vsub.f32 %v1532, %v2109
    %v2344 = vsub.f32 %v1537, %v2114
    %v2345 = vsub.f32 %v1542, %v2119
    %v2346 = vsub.f32 %v1547, %v2124
    %v2347 = vsub.f32 %v1552, %v2129
    %v2348 = vsub.f32 %v1557, %v2134
    %v2349 = vsub.f32 %v1562, %v2139
    %v2350 = vsub.f32 %v1567, %v2144
    %v2351 = vsub.f32 %v1572, %v2149
    %v2352 = vsub.f32 %v1577, %v2154
    %v2353 = vsub.f32 %v1582, %v2159
    %v2354 = vsub.f32 %v1587, %v2164
    %v2355 = vsub.f32 %v1592, %v2169
    %v2356 = vsub.f32 %v1597, %v2174
    %v2357 = vsub.f32 %v1602, %v2179
    %v2358 = vsub.f32 %v1607, %v2184
    %v2359 = vsub.f32 %v1612, %v2189
    %v2360 = vsub.f32 %v1617, %v2194
    %v2361 = vsub.f32 %v1622, %v2199
    %v2362 = vsub.f32 %v1627, %v2204
    %v2363 = vsub.f32 %v1632, %v2209
    %v2364 = vsub.f32 %v1637, %v2214
    %v2365 = vsub.f32 %v1642, %v2219
    %v2366 = vsub.f32 %v1647, %v2224
    %v2367 = vsub.f32 %v1652, %v2229
    %v2368 = vsub.f32 %v1657, %v2234
    %v2369 = vsub.f32 %v1662, %v2239
    %v2370 = vsub.f32 %v1667, %v2244
    %v2371 = vsub.f32 %v1672, %v2249
    %v2372 = vsub.f32 %v1677, %v2254
    %v2373 = vsub.f32 %v1682, %v2259
    %v2374 = vsub.f32 %v1687, %v2264
    %v2375 = vsub.f32 %v1692, %v2269
    %v2376 = vsub.f32 %v1697, %v2274
    %v2377 = vsub.f32 %v1702, %v2279
    %v2378 = vsub.f32 %v1707, %v2284
    %v2379 = vsub.f32 %v1712, %v2289
    %v2380 = vsub.f32 %v1717, %v2294
    %v2381 = vsub.f32 %v1722, %v2299
    %v2382 = vsub.f32 %v1727, %v2304
    %v2383 = vsub.f32 %v1732, %v2309
    %v2384 = vsub.f32 %v1737, %v2314
    %v2385 = vsub.f32 %v1742, %v2319
    %v2386 = vmul.f32 %v2322, %v2322
    %v2387 = vmul.f32 %v2323, %v2323
    %v2388 = vmul.f32 %v2324, %v2324
    %v2389 = vmul.f32 %v2325, %v2325
    %v2390 = vmul.f32 %v2326, %v2326
    %v2391 = vmul.f32 %v2327, %v2327
    %v2392 = vmul.f32 %v2328, %v2328
    %v2393 = vmul.f32 %v2329, %v2329
    %v2394 = vmul.f32 %v2330, %v2330
    %v2395 = vmul.f32 %v2331, %v2331
    %v2396 = vmul.f32 %v2332, %v2332
    %v2397 = vmul.f32 %v2333, %v2333
    %v2398 = vmul.f32 %v2334, %v2334
    %v2399 = vmul.f32 %v2335, %v2335
    %v2400 = vmul.f32 %v2336, %v2336
    %v2401 = vmul.f32 %v2337, %v2337
    %v2402 = vmul.f32 %v2338, %v2338
    %v2403 = vmul.f32 %v2339, %v2339
    %v2404 = vmul.f32 %v2340, %v2340
    %v2405 = vmul.f32 %v2341, %v2341
    %v2406 = vmul.f32 %v2342, %v2342
    %v2407 = vmul.f32 %v2343, %v2343
    %v2408 = vmul.f32 %v2344, %v2344
    %v2409 = vmul.f32 %v2345, %v2345
    %v2410 = vmul.f32 %v2346, %v2346
    %v2411 = vmul.f32 %v2347, %v2347
    %v2412 = vmul.f32 %v2348, %v2348
    %v2413 = vmul.f32 %v2349, %v2349
    %v2414 = vmul.f32 %v2350, %v2350
    %v2415 = vmul.f32 %v2351, %v2351
    %v2416 = vmul.f32 %v2352, %v2352
    %v2417 = vmul.f32 %v2353, %v2353
    %v2418 = vmul.f32 %v2354, %v2354
    %v2419 = vmul.f32 %v2355, %v2355
    %v2420 = vmul.f32 %v2356, %v2356
    %v2421 = vmul.f32 %v2357, %v2357
    %v2422 = vmul.f32 %v2358, %v2358
    %v2423 = vmul.f32 %v2359, %v2359
    %v2424 = vmul.f32 %v2360, %v2360
    %v2425 = vmul.f32 %v2361, %v2361
    %v2426 = vmul.f32 %v2362, %v2362
    %v2427 = vmul.f32 %v2363, %v2363
    %v2428 = vmul.f32 %v2364, %v2364
    %v2429 = vmul.f32 %v2365, %v2365
    %v2430 = vmul.f32 %v2366, %v2366
    %v2431 = vmul.f32 %v2367, %v2367
    %v2432 = vmul.f32 %v2368, %v2368
    %v2433 = vmul.f32 %v2369, %v2369
    %v2434 = vmul.f32 %v2370, %v2370
    %v2435 = vmul.f32 %v2371, %v2371
    %v2436 = vmul.f32 %v2372, %v2372
    %v2437 = vmul.f32 %v2373, %v2373
    %v2438 = vmul.f32 %v2374, %v2374
    %v2439 = vmul.f32 %v2375, %v2375
    %v2440 = vmul.f32 %v2376, %v2376
    %v2441 = vmul.f32 %v2377, %v2377
    %v2442 = vmul.f32 %v2378, %v2378
    %v2443 = vmul.f32 %v2379, %v2379
    %v2444 = vmul.f32 %v2380, %v2380
    %v2445 = vmul.f32 %v2381, %v2381
    %v2446 = vmul.f32 %v2382, %v2382
    %v2447 = vmul.f32 %v2383, %v2383
    %v2448 = vmul.f32 %v2384, %v2384
    %v2449 = vmul.f32 %v2385, %v2385
    %v2450 = vsel %vm74, %v2386, 0.0
    %2451 = vadd.xlane.f32.xlu0 %v2450
    %v2452 = vpop.xlane.xlu0 %2451
    %v2453 = vsel %vm74, %v2387, 0.0
    %2454 = vadd.xlane.f32.xlu0 %v2453
    %v2455 = vpop.xlane.xlu0 %2454
    %v2456 = vsel %vm74, %v2388, 0.0
    %2457 = vadd.xlane.f32.xlu0 %v2456
    %v2458 = vpop.xlane.xlu0 %2457
    %v2459 = vsel %vm74, %v2389, 0.0
    %2460 = vadd.xlane.f32.xlu0 %v2459
    %v2461 = vpop.xlane.xlu0 %2460
    %v2462 = vsel %vm74, %v2390, 0.0
    %2463 = vadd.xlane.f32.xlu0 %v2462
    %v2464 = vpop.xlane.xlu0 %2463
    %v2465 = vsel %vm74, %v2391, 0.0
    %2466 = vadd.xlane.f32.xlu0 %v2465
    %v2467 = vpop.xlane.xlu0 %2466
    %v2468 = vsel %vm74, %v2392, 0.0
    %2469 = vadd.xlane.f32.xlu0 %v2468
    %v2470 = vpop.xlane.xlu0 %2469
    %v2471 = vsel %vm74, %v2393, 0.0
    %2472 = vadd.xlane.f32.xlu0 %v2471
    %v2473 = vpop.xlane.xlu0 %2472
    %v2474 = vsel %vm74, %v2394, 0.0
    %2475 = vadd.xlane.f32.xlu0 %v2474
    %v2476 = vpop.xlane.xlu0 %2475
    %v2477 = vsel %vm74, %v2395, 0.0
    %2478 = vadd.xlane.f32.xlu0 %v2477
    %v2479 = vpop.xlane.xlu0 %2478
    %v2480 = vsel %vm74, %v2396, 0.0
    %2481 = vadd.xlane.f32.xlu0 %v2480
    %v2482 = vpop.xlane.xlu0 %2481
    %v2483 = vsel %vm74, %v2397, 0.0
    %2484 = vadd.xlane.f32.xlu0 %v2483
    %v2485 = vpop.xlane.xlu0 %2484
    %v2486 = vsel %vm74, %v2398, 0.0
    %2487 = vadd.xlane.f32.xlu0 %v2486
    %v2488 = vpop.xlane.xlu0 %2487
    %v2489 = vsel %vm74, %v2399, 0.0
    %2490 = vadd.xlane.f32.xlu0 %v2489
    %v2491 = vpop.xlane.xlu0 %2490
    %v2492 = vsel %vm74, %v2400, 0.0
    %2493 = vadd.xlane.f32.xlu0 %v2492
    %v2494 = vpop.xlane.xlu0 %2493
    %v2495 = vsel %vm74, %v2401, 0.0
    %2496 = vadd.xlane.f32.xlu0 %v2495
    %v2497 = vpop.xlane.xlu0 %2496
    %v2498 = vsel %vm74, %v2402, 0.0
    %2499 = vadd.xlane.f32.xlu0 %v2498
    %v2500 = vpop.xlane.xlu0 %2499
    %v2501 = vsel %vm74, %v2403, 0.0
    %2502 = vadd.xlane.f32.xlu0 %v2501
    %v2503 = vpop.xlane.xlu0 %2502
    %v2504 = vsel %vm74, %v2404, 0.0
    %2505 = vadd.xlane.f32.xlu0 %v2504
    %v2506 = vpop.xlane.xlu0 %2505
    %v2507 = vsel %vm74, %v2405, 0.0
    %2508 = vadd.xlane.f32.xlu0 %v2507
    %v2509 = vpop.xlane.xlu0 %2508
    %v2510 = vsel %vm74, %v2406, 0.0
    %2511 = vadd.xlane.f32.xlu0 %v2510
    %v2512 = vpop.xlane.xlu0 %2511
    %v2513 = vsel %vm74, %v2407, 0.0
    %2514 = vadd.xlane.f32.xlu0 %v2513
    %v2515 = vpop.xlane.xlu0 %2514
    %v2516 = vsel %vm74, %v2408, 0.0
    %2517 = vadd.xlane.f32.xlu0 %v2516
    %v2518 = vpop.xlane.xlu0 %2517
    %v2519 = vsel %vm74, %v2409, 0.0
    %2520 = vadd.xlane.f32.xlu0 %v2519
    %v2521 = vpop.xlane.xlu0 %2520
    %v2522 = vsel %vm74, %v2410, 0.0
    %2523 = vadd.xlane.f32.xlu0 %v2522
    %v2524 = vpop.xlane.xlu0 %2523
    %v2525 = vsel %vm74, %v2411, 0.0
    %2526 = vadd.xlane.f32.xlu0 %v2525
    %v2527 = vpop.xlane.xlu0 %2526
    %v2528 = vsel %vm74, %v2412, 0.0
    %2529 = vadd.xlane.f32.xlu0 %v2528
    %v2530 = vpop.xlane.xlu0 %2529
    %v2531 = vsel %vm74, %v2413, 0.0
    %2532 = vadd.xlane.f32.xlu0 %v2531
    %v2533 = vpop.xlane.xlu0 %2532
    %v2534 = vsel %vm74, %v2414, 0.0
    %2535 = vadd.xlane.f32.xlu0 %v2534
    %v2536 = vpop.xlane.xlu0 %2535
    %v2537 = vsel %vm74, %v2415, 0.0
    %2538 = vadd.xlane.f32.xlu0 %v2537
    %v2539 = vpop.xlane.xlu0 %2538
    %v2540 = vsel %vm74, %v2416, 0.0
    %2541 = vadd.xlane.f32.xlu0 %v2540
    %v2542 = vpop.xlane.xlu0 %2541
    %v2543 = vsel %vm74, %v2417, 0.0
    %2544 = vadd.xlane.f32.xlu0 %v2543
    %v2545 = vpop.xlane.xlu0 %2544
    %v2546 = vsel %vm74, %v2418, 0.0
    %2547 = vadd.xlane.f32.xlu0 %v2546
    %v2548 = vpop.xlane.xlu0 %2547
    %v2549 = vsel %vm74, %v2419, 0.0
    %2550 = vadd.xlane.f32.xlu0 %v2549
    %v2551 = vpop.xlane.xlu0 %2550
    %v2552 = vsel %vm74, %v2420, 0.0
    %2553 = vadd.xlane.f32.xlu0 %v2552
    %v2554 = vpop.xlane.xlu0 %2553
    %v2555 = vsel %vm74, %v2421, 0.0
    %2556 = vadd.xlane.f32.xlu0 %v2555
    %v2557 = vpop.xlane.xlu0 %2556
    %v2558 = vsel %vm74, %v2422, 0.0
    %2559 = vadd.xlane.f32.xlu0 %v2558
    %v2560 = vpop.xlane.xlu0 %2559
    %v2561 = vsel %vm74, %v2423, 0.0
    %2562 = vadd.xlane.f32.xlu0 %v2561
    %v2563 = vpop.xlane.xlu0 %2562
    %v2564 = vsel %vm74, %v2424, 0.0
    %2565 = vadd.xlane.f32.xlu0 %v2564
    %v2566 = vpop.xlane.xlu0 %2565
    %v2567 = vsel %vm74, %v2425, 0.0
    %2568 = vadd.xlane.f32.xlu0 %v2567
    %v2569 = vpop.xlane.xlu0 %2568
    %v2570 = vsel %vm74, %v2426, 0.0
    %2571 = vadd.xlane.f32.xlu0 %v2570
    %v2572 = vpop.xlane.xlu0 %2571
    %v2573 = vsel %vm74, %v2427, 0.0
    %2574 = vadd.xlane.f32.xlu0 %v2573
    %v2575 = vpop.xlane.xlu0 %2574
    %v2576 = vsel %vm74, %v2428, 0.0
    %2577 = vadd.xlane.f32.xlu0 %v2576
    %v2578 = vpop.xlane.xlu0 %2577
    %v2579 = vsel %vm74, %v2429, 0.0
    %2580 = vadd.xlane.f32.xlu0 %v2579
    %v2581 = vpop.xlane.xlu0 %2580
    %v2582 = vsel %vm74, %v2430, 0.0
    %2583 = vadd.xlane.f32.xlu0 %v2582
    %v2584 = vpop.xlane.xlu0 %2583
    %v2585 = vsel %vm74, %v2431, 0.0
    %2586 = vadd.xlane.f32.xlu0 %v2585
    %v2587 = vpop.xlane.xlu0 %2586
    %v2588 = vsel %vm74, %v2432, 0.0
    %2589 = vadd.xlane.f32.xlu0 %v2588
    %v2590 = vpop.xlane.xlu0 %2589
    %v2591 = vsel %vm74, %v2433, 0.0
    %2592 = vadd.xlane.f32.xlu0 %v2591
    %v2593 = vpop.xlane.xlu0 %2592
    %v2594 = vsel %vm74, %v2434, 0.0
    %2595 = vadd.xlane.f32.xlu0 %v2594
    %v2596 = vpop.xlane.xlu0 %2595
    %v2597 = vsel %vm74, %v2435, 0.0
    %2598 = vadd.xlane.f32.xlu0 %v2597
    %v2599 = vpop.xlane.xlu0 %2598
    %v2600 = vsel %vm74, %v2436, 0.0
    %2601 = vadd.xlane.f32.xlu0 %v2600
    %v2602 = vpop.xlane.xlu0 %2601
    %v2603 = vsel %vm74, %v2437, 0.0
    %2604 = vadd.xlane.f32.xlu0 %v2603
    %v2605 = vpop.xlane.xlu0 %2604
    %v2606 = vsel %vm74, %v2438, 0.0
    %2607 = vadd.xlane.f32.xlu0 %v2606
    %v2608 = vpop.xlane.xlu0 %2607
    %v2609 = vsel %vm74, %v2439, 0.0
    %2610 = vadd.xlane.f32.xlu0 %v2609
    %v2611 = vpop.xlane.xlu0 %2610
    %v2612 = vsel %vm74, %v2440, 0.0
    %2613 = vadd.xlane.f32.xlu0 %v2612
    %v2614 = vpop.xlane.xlu0 %2613
    %v2615 = vsel %vm74, %v2441, 0.0
    %2616 = vadd.xlane.f32.xlu0 %v2615
    %v2617 = vpop.xlane.xlu0 %2616
    %v2618 = vsel %vm74, %v2442, 0.0
    %2619 = vadd.xlane.f32.xlu0 %v2618
    %v2620 = vpop.xlane.xlu0 %2619
    %v2621 = vsel %vm74, %v2443, 0.0
    %2622 = vadd.xlane.f32.xlu0 %v2621
    %v2623 = vpop.xlane.xlu0 %2622
    %v2624 = vsel %vm74, %v2444, 0.0
    %2625 = vadd.xlane.f32.xlu0 %v2624
    %v2626 = vpop.xlane.xlu0 %2625
    %v2627 = vsel %vm74, %v2445, 0.0
    %2628 = vadd.xlane.f32.xlu0 %v2627
    %v2629 = vpop.xlane.xlu0 %2628
    %v2630 = vsel %vm74, %v2446, 0.0
    %2631 = vadd.xlane.f32.xlu0 %v2630
    %v2632 = vpop.xlane.xlu0 %2631
    %v2633 = vsel %vm74, %v2447, 0.0
    %2634 = vadd.xlane.f32.xlu0 %v2633
    %v2635 = vpop.xlane.xlu0 %2634
    %v2636 = vsel %vm74, %v2448, 0.0
    %2637 = vadd.xlane.f32.xlu0 %v2636
    %v2638 = vpop.xlane.xlu0 %2637
    %v2639 = vsel %vm74, %v2449, 0.0
    %2640 = vadd.xlane.f32.xlu0 %v2639
    %v2641 = vpop.xlane.xlu0 %2640
    %v2642 = vcvt.f32.s32.to.zero.pseudo %v2452
    %v2643 = vcvt.f32.s32.to.zero.pseudo %v2455
    %v2644 = vcvt.f32.s32.to.zero.pseudo %v2458
    %v2645 = vcvt.f32.s32.to.zero.pseudo %v2461
    %v2646 = vcvt.f32.s32.to.zero.pseudo %v2464
    %v2647 = vcvt.f32.s32.to.zero.pseudo %v2467
    %v2648 = vcvt.f32.s32.to.zero.pseudo %v2470
    %v2649 = vcvt.f32.s32.to.zero.pseudo %v2473
    %v2650 = vcvt.f32.s32.to.zero.pseudo %v2476
    %v2651 = vcvt.f32.s32.to.zero.pseudo %v2479
    %v2652 = vcvt.f32.s32.to.zero.pseudo %v2482
    %v2653 = vcvt.f32.s32.to.zero.pseudo %v2485
    %v2654 = vcvt.f32.s32.to.zero.pseudo %v2488
    %v2655 = vcvt.f32.s32.to.zero.pseudo %v2491
    %v2656 = vcvt.f32.s32.to.zero.pseudo %v2494
    %v2657 = vcvt.f32.s32.to.zero.pseudo %v2497
    %v2658 = vcvt.f32.s32.to.zero.pseudo %v2500
    %v2659 = vcvt.f32.s32.to.zero.pseudo %v2503
    %v2660 = vcvt.f32.s32.to.zero.pseudo %v2506
    %v2661 = vcvt.f32.s32.to.zero.pseudo %v2509
    %v2662 = vcvt.f32.s32.to.zero.pseudo %v2512
    %v2663 = vcvt.f32.s32.to.zero.pseudo %v2515
    %v2664 = vcvt.f32.s32.to.zero.pseudo %v2518
    %v2665 = vcvt.f32.s32.to.zero.pseudo %v2521
    %v2666 = vcvt.f32.s32.to.zero.pseudo %v2524
    %v2667 = vcvt.f32.s32.to.zero.pseudo %v2527
    %v2668 = vcvt.f32.s32.to.zero.pseudo %v2530
    %v2669 = vcvt.f32.s32.to.zero.pseudo %v2533
    %v2670 = vcvt.f32.s32.to.zero.pseudo %v2536
    %v2671 = vcvt.f32.s32.to.zero.pseudo %v2539
    %v2672 = vcvt.f32.s32.to.zero.pseudo %v2542
    %v2673 = vcvt.f32.s32.to.zero.pseudo %v2545
    %v2674 = vcvt.f32.s32.to.zero.pseudo %v2548
    %v2675 = vcvt.f32.s32.to.zero.pseudo %v2551
    %v2676 = vcvt.f32.s32.to.zero.pseudo %v2554
    %v2677 = vcvt.f32.s32.to.zero.pseudo %v2557
    %v2678 = vcvt.f32.s32.to.zero.pseudo %v2560
    %v2679 = vcvt.f32.s32.to.zero.pseudo %v2563
    %v2680 = vcvt.f32.s32.to.zero.pseudo %v2566
    %v2681 = vcvt.f32.s32.to.zero.pseudo %v2569
    %v2682 = vcvt.f32.s32.to.zero.pseudo %v2572
    %v2683 = vcvt.f32.s32.to.zero.pseudo %v2575
    %v2684 = vcvt.f32.s32.to.zero.pseudo %v2578
    %v2685 = vcvt.f32.s32.to.zero.pseudo %v2581
    %v2686 = vcvt.f32.s32.to.zero.pseudo %v2584
    %v2687 = vcvt.f32.s32.to.zero.pseudo %v2587
    %v2688 = vcvt.f32.s32.to.zero.pseudo %v2590
    %v2689 = vcvt.f32.s32.to.zero.pseudo %v2593
    %v2690 = vcvt.f32.s32.to.zero.pseudo %v2596
    %v2691 = vcvt.f32.s32.to.zero.pseudo %v2599
    %v2692 = vcvt.f32.s32.to.zero.pseudo %v2602
    %v2693 = vcvt.f32.s32.to.zero.pseudo %v2605
    %v2694 = vcvt.f32.s32.to.zero.pseudo %v2608
    %v2695 = vcvt.f32.s32.to.zero.pseudo %v2611
    %v2696 = vcvt.f32.s32.to.zero.pseudo %v2614
    %v2697 = vcvt.f32.s32.to.zero.pseudo %v2617
    %v2698 = vcvt.f32.s32.to.zero.pseudo %v2620
    %v2699 = vcvt.f32.s32.to.zero.pseudo %v2623
    %v2700 = vcvt.f32.s32.to.zero.pseudo %v2626
    %v2701 = vcvt.f32.s32.to.zero.pseudo %v2629
    %v2702 = vcvt.f32.s32.to.zero.pseudo %v2632
    %v2703 = vcvt.f32.s32.to.zero.pseudo %v2635
    %v2704 = vcvt.f32.s32.to.zero.pseudo %v2638
    %v2705 = vcvt.f32.s32.to.zero.pseudo %v2641
    %vm2706 = vcmp.gt.s32.totalorder %v2642, 0
    %v2707 = vsel %vm2706, %v2642, 0
    %vm2708 = vcmp.gt.s32.totalorder %v2643, 0
    %v2709 = vsel %vm2708, %v2643, 0
    %vm2710 = vcmp.gt.s32.totalorder %v2644, 0
    %v2711 = vsel %vm2710, %v2644, 0
    %vm2712 = vcmp.gt.s32.totalorder %v2645, 0
    %v2713 = vsel %vm2712, %v2645, 0
    %vm2714 = vcmp.gt.s32.totalorder %v2646, 0
    %v2715 = vsel %vm2714, %v2646, 0
    %vm2716 = vcmp.gt.s32.totalorder %v2647, 0
    %v2717 = vsel %vm2716, %v2647, 0
    %vm2718 = vcmp.gt.s32.totalorder %v2648, 0
    %v2719 = vsel %vm2718, %v2648, 0
    %vm2720 = vcmp.gt.s32.totalorder %v2649, 0
    %v2721 = vsel %vm2720, %v2649, 0
    %vm2722 = vcmp.gt.s32.totalorder %v2650, 0
    %v2723 = vsel %vm2722, %v2650, 0
    %vm2724 = vcmp.gt.s32.totalorder %v2651, 0
    %v2725 = vsel %vm2724, %v2651, 0
    %vm2726 = vcmp.gt.s32.totalorder %v2652, 0
    %v2727 = vsel %vm2726, %v2652, 0
    %vm2728 = vcmp.gt.s32.totalorder %v2653, 0
    %v2729 = vsel %vm2728, %v2653, 0
    %vm2730 = vcmp.gt.s32.totalorder %v2654, 0
    %v2731 = vsel %vm2730, %v2654, 0
    %vm2732 = vcmp.gt.s32.totalorder %v2655, 0
    %v2733 = vsel %vm2732, %v2655, 0
    %vm2734 = vcmp.gt.s32.totalorder %v2656, 0
    %v2735 = vsel %vm2734, %v2656, 0
    %vm2736 = vcmp.gt.s32.totalorder %v2657, 0
    %v2737 = vsel %vm2736, %v2657, 0
    %vm2738 = vcmp.gt.s32.totalorder %v2658, 0
    %v2739 = vsel %vm2738, %v2658, 0
    %vm2740 = vcmp.gt.s32.totalorder %v2659, 0
    %v2741 = vsel %vm2740, %v2659, 0
    %vm2742 = vcmp.gt.s32.totalorder %v2660, 0
    %v2743 = vsel %vm2742, %v2660, 0
    %vm2744 = vcmp.gt.s32.totalorder %v2661, 0
    %v2745 = vsel %vm2744, %v2661, 0
    %vm2746 = vcmp.gt.s32.totalorder %v2662, 0
    %v2747 = vsel %vm2746, %v2662, 0
    %vm2748 = vcmp.gt.s32.totalorder %v2663, 0
    %v2749 = vsel %vm2748, %v2663, 0
    %vm2750 = vcmp.gt.s32.totalorder %v2664, 0
    %v2751 = vsel %vm2750, %v2664, 0
    %vm2752 = vcmp.gt.s32.totalorder %v2665, 0
    %v2753 = vsel %vm2752, %v2665, 0
    %vm2754 = vcmp.gt.s32.totalorder %v2666, 0
    %v2755 = vsel %vm2754, %v2666, 0
    %vm2756 = vcmp.gt.s32.totalorder %v2667, 0
    %v2757 = vsel %vm2756, %v2667, 0
    %vm2758 = vcmp.gt.s32.totalorder %v2668, 0
    %v2759 = vsel %vm2758, %v2668, 0
    %vm2760 = vcmp.gt.s32.totalorder %v2669, 0
    %v2761 = vsel %vm2760, %v2669, 0
    %vm2762 = vcmp.gt.s32.totalorder %v2670, 0
    %v2763 = vsel %vm2762, %v2670, 0
    %vm2764 = vcmp.gt.s32.totalorder %v2671, 0
    %v2765 = vsel %vm2764, %v2671, 0
    %vm2766 = vcmp.gt.s32.totalorder %v2672, 0
    %v2767 = vsel %vm2766, %v2672, 0
    %vm2768 = vcmp.gt.s32.totalorder %v2673, 0
    %v2769 = vsel %vm2768, %v2673, 0
    %vm2770 = vcmp.gt.s32.totalorder %v2674, 0
    %v2771 = vsel %vm2770, %v2674, 0
    %vm2772 = vcmp.gt.s32.totalorder %v2675, 0
    %v2773 = vsel %vm2772, %v2675, 0
    %vm2774 = vcmp.gt.s32.totalorder %v2676, 0
    %v2775 = vsel %vm2774, %v2676, 0
    %vm2776 = vcmp.gt.s32.totalorder %v2677, 0
    %v2777 = vsel %vm2776, %v2677, 0
    %vm2778 = vcmp.gt.s32.totalorder %v2678, 0
    %v2779 = vsel %vm2778, %v2678, 0
    %vm2780 = vcmp.gt.s32.totalorder %v2679, 0
    %v2781 = vsel %vm2780, %v2679, 0
    %vm2782 = vcmp.gt.s32.totalorder %v2680, 0
    %v2783 = vsel %vm2782, %v2680, 0
    %vm2784 = vcmp.gt.s32.totalorder %v2681, 0
    %v2785 = vsel %vm2784, %v2681, 0
    %vm2786 = vcmp.gt.s32.totalorder %v2682, 0
    %v2787 = vsel %vm2786, %v2682, 0
    %vm2788 = vcmp.gt.s32.totalorder %v2683, 0
    %v2789 = vsel %vm2788, %v2683, 0
    %vm2790 = vcmp.gt.s32.totalorder %v2684, 0
    %v2791 = vsel %vm2790, %v2684, 0
    %vm2792 = vcmp.gt.s32.totalorder %v2685, 0
    %v2793 = vsel %vm2792, %v2685, 0
    %vm2794 = vcmp.gt.s32.totalorder %v2686, 0
    %v2795 = vsel %vm2794, %v2686, 0
    %vm2796 = vcmp.gt.s32.totalorder %v2687, 0
    %v2797 = vsel %vm2796, %v2687, 0
    %vm2798 = vcmp.gt.s32.totalorder %v2688, 0
    %v2799 = vsel %vm2798, %v2688, 0
    %vm2800 = vcmp.gt.s32.totalorder %v2689, 0
    %v2801 = vsel %vm2800, %v2689, 0
    %vm2802 = vcmp.gt.s32.totalorder %v2690, 0
    %v2803 = vsel %vm2802, %v2690, 0
    %vm2804 = vcmp.gt.s32.totalorder %v2691, 0
    %v2805 = vsel %vm2804, %v2691, 0
    %vm2806 = vcmp.gt.s32.totalorder %v2692, 0
    %v2807 = vsel %vm2806, %v2692, 0
    %vm2808 = vcmp.gt.s32.totalorder %v2693, 0
    %v2809 = vsel %vm2808, %v2693, 0
    %vm2810 = vcmp.gt.s32.totalorder %v2694, 0
    %v2811 = vsel %vm2810, %v2694, 0
    %vm2812 = vcmp.gt.s32.totalorder %v2695, 0
    %v2813 = vsel %vm2812, %v2695, 0
    %vm2814 = vcmp.gt.s32.totalorder %v2696, 0
    %v2815 = vsel %vm2814, %v2696, 0
    %vm2816 = vcmp.gt.s32.totalorder %v2697, 0
    %v2817 = vsel %vm2816, %v2697, 0
    %vm2818 = vcmp.gt.s32.totalorder %v2698, 0
    %v2819 = vsel %vm2818, %v2698, 0
    %vm2820 = vcmp.gt.s32.totalorder %v2699, 0
    %v2821 = vsel %vm2820, %v2699, 0
    %vm2822 = vcmp.gt.s32.totalorder %v2700, 0
    %v2823 = vsel %vm2822, %v2700, 0
    %vm2824 = vcmp.gt.s32.totalorder %v2701, 0
    %v2825 = vsel %vm2824, %v2701, 0
    %vm2826 = vcmp.gt.s32.totalorder %v2702, 0
    %v2827 = vsel %vm2826, %v2702, 0
    %vm2828 = vcmp.gt.s32.totalorder %v2703, 0
    %v2829 = vsel %vm2828, %v2703, 0
    %vm2830 = vcmp.gt.s32.totalorder %v2704, 0
    %v2831 = vsel %vm2830, %v2704, 0
    %vm2832 = vcmp.gt.s32.totalorder %v2705, 0
    %v2833 = vsel %vm2832, %v2705, 0
    %vm2834 = vcmp.lt.s32.totalorder %v2707, 299
    %v2835 = vsel %vm2834, %v2707, 299
    %vm2836 = vcmp.lt.s32.totalorder %v2709, 299
    %v2837 = vsel %vm2836, %v2709, 299
    %vm2838 = vcmp.lt.s32.totalorder %v2711, 299
    %v2839 = vsel %vm2838, %v2711, 299
    %vm2840 = vcmp.lt.s32.totalorder %v2713, 299
    %v2841 = vsel %vm2840, %v2713, 299
    %vm2842 = vcmp.lt.s32.totalorder %v2715, 299
    %v2843 = vsel %vm2842, %v2715, 299
    %vm2844 = vcmp.lt.s32.totalorder %v2717, 299
    %v2845 = vsel %vm2844, %v2717, 299
    %vm2846 = vcmp.lt.s32.totalorder %v2719, 299
    %v2847 = vsel %vm2846, %v2719, 299
    %vm2848 = vcmp.lt.s32.totalorder %v2721, 299
    %v2849 = vsel %vm2848, %v2721, 299
    %vm2850 = vcmp.lt.s32.totalorder %v2723, 299
    %v2851 = vsel %vm2850, %v2723, 299
    %vm2852 = vcmp.lt.s32.totalorder %v2725, 299
    %v2853 = vsel %vm2852, %v2725, 299
    %vm2854 = vcmp.lt.s32.totalorder %v2727, 299
    %v2855 = vsel %vm2854, %v2727, 299
    %vm2856 = vcmp.lt.s32.totalorder %v2729, 299
    %v2857 = vsel %vm2856, %v2729, 299
    %vm2858 = vcmp.lt.s32.totalorder %v2731, 299
    %v2859 = vsel %vm2858, %v2731, 299
    %vm2860 = vcmp.lt.s32.totalorder %v2733, 299
    %v2861 = vsel %vm2860, %v2733, 299
    %vm2862 = vcmp.lt.s32.totalorder %v2735, 299
    %v2863 = vsel %vm2862, %v2735, 299
    %vm2864 = vcmp.lt.s32.totalorder %v2737, 299
    %v2865 = vsel %vm2864, %v2737, 299
    %vm2866 = vcmp.lt.s32.totalorder %v2739, 299
    %v2867 = vsel %vm2866, %v2739, 299
    %vm2868 = vcmp.lt.s32.totalorder %v2741, 299
    %v2869 = vsel %vm2868, %v2741, 299
    %vm2870 = vcmp.lt.s32.totalorder %v2743, 299
    %v2871 = vsel %vm2870, %v2743, 299
    %vm2872 = vcmp.lt.s32.totalorder %v2745, 299
    %v2873 = vsel %vm2872, %v2745, 299
    %vm2874 = vcmp.lt.s32.totalorder %v2747, 299
    %v2875 = vsel %vm2874, %v2747, 299
    %vm2876 = vcmp.lt.s32.totalorder %v2749, 299
    %v2877 = vsel %vm2876, %v2749, 299
    %vm2878 = vcmp.lt.s32.totalorder %v2751, 299
    %v2879 = vsel %vm2878, %v2751, 299
    %vm2880 = vcmp.lt.s32.totalorder %v2753, 299
    %v2881 = vsel %vm2880, %v2753, 299
    %vm2882 = vcmp.lt.s32.totalorder %v2755, 299
    %v2883 = vsel %vm2882, %v2755, 299
    %vm2884 = vcmp.lt.s32.totalorder %v2757, 299
    %v2885 = vsel %vm2884, %v2757, 299
    %vm2886 = vcmp.lt.s32.totalorder %v2759, 299
    %v2887 = vsel %vm2886, %v2759, 299
    %vm2888 = vcmp.lt.s32.totalorder %v2761, 299
    %v2889 = vsel %vm2888, %v2761, 299
    %vm2890 = vcmp.lt.s32.totalorder %v2763, 299
    %v2891 = vsel %vm2890, %v2763, 299
    %vm2892 = vcmp.lt.s32.totalorder %v2765, 299
    %v2893 = vsel %vm2892, %v2765, 299
    %vm2894 = vcmp.lt.s32.totalorder %v2767, 299
    %v2895 = vsel %vm2894, %v2767, 299
    %vm2896 = vcmp.lt.s32.totalorder %v2769, 299
    %v2897 = vsel %vm2896, %v2769, 299
    %vm2898 = vcmp.lt.s32.totalorder %v2771, 299
    %v2899 = vsel %vm2898, %v2771, 299
    %vm2900 = vcmp.lt.s32.totalorder %v2773, 299
    %v2901 = vsel %vm2900, %v2773, 299
    %vm2902 = vcmp.lt.s32.totalorder %v2775, 299
    %v2903 = vsel %vm2902, %v2775, 299
    %vm2904 = vcmp.lt.s32.totalorder %v2777, 299
    %v2905 = vsel %vm2904, %v2777, 299
    %vm2906 = vcmp.lt.s32.totalorder %v2779, 299
    %v2907 = vsel %vm2906, %v2779, 299
    %vm2908 = vcmp.lt.s32.totalorder %v2781, 299
    %v2909 = vsel %vm2908, %v2781, 299
    %vm2910 = vcmp.lt.s32.totalorder %v2783, 299
    %v2911 = vsel %vm2910, %v2783, 299
    %vm2912 = vcmp.lt.s32.totalorder %v2785, 299
    %v2913 = vsel %vm2912, %v2785, 299
    %vm2914 = vcmp.lt.s32.totalorder %v2787, 299
    %v2915 = vsel %vm2914, %v2787, 299
    %vm2916 = vcmp.lt.s32.totalorder %v2789, 299
    %v2917 = vsel %vm2916, %v2789, 299
    %vm2918 = vcmp.lt.s32.totalorder %v2791, 299
    %v2919 = vsel %vm2918, %v2791, 299
    %vm2920 = vcmp.lt.s32.totalorder %v2793, 299
    %v2921 = vsel %vm2920, %v2793, 299
    %vm2922 = vcmp.lt.s32.totalorder %v2795, 299
    %v2923 = vsel %vm2922, %v2795, 299
    %vm2924 = vcmp.lt.s32.totalorder %v2797, 299
    %v2925 = vsel %vm2924, %v2797, 299
    %vm2926 = vcmp.lt.s32.totalorder %v2799, 299
    %v2927 = vsel %vm2926, %v2799, 299
    %vm2928 = vcmp.lt.s32.totalorder %v2801, 299
    %v2929 = vsel %vm2928, %v2801, 299
    %vm2930 = vcmp.lt.s32.totalorder %v2803, 299
    %v2931 = vsel %vm2930, %v2803, 299
    %vm2932 = vcmp.lt.s32.totalorder %v2805, 299
    %v2933 = vsel %vm2932, %v2805, 299
    %vm2934 = vcmp.lt.s32.totalorder %v2807, 299
    %v2935 = vsel %vm2934, %v2807, 299
    %vm2936 = vcmp.lt.s32.totalorder %v2809, 299
    %v2937 = vsel %vm2936, %v2809, 299
    %vm2938 = vcmp.lt.s32.totalorder %v2811, 299
    %v2939 = vsel %vm2938, %v2811, 299
    %vm2940 = vcmp.lt.s32.totalorder %v2813, 299
    %v2941 = vsel %vm2940, %v2813, 299
    %vm2942 = vcmp.lt.s32.totalorder %v2815, 299
    %v2943 = vsel %vm2942, %v2815, 299
    %vm2944 = vcmp.lt.s32.totalorder %v2817, 299
    %v2945 = vsel %vm2944, %v2817, 299
    %vm2946 = vcmp.lt.s32.totalorder %v2819, 299
    %v2947 = vsel %vm2946, %v2819, 299
    %vm2948 = vcmp.lt.s32.totalorder %v2821, 299
    %v2949 = vsel %vm2948, %v2821, 299
    %vm2950 = vcmp.lt.s32.totalorder %v2823, 299
    %v2951 = vsel %vm2950, %v2823, 299
    %vm2952 = vcmp.lt.s32.totalorder %v2825, 299
    %v2953 = vsel %vm2952, %v2825, 299
    %vm2954 = vcmp.lt.s32.totalorder %v2827, 299
    %v2955 = vsel %vm2954, %v2827, 299
    %vm2956 = vcmp.lt.s32.totalorder %v2829, 299
    %v2957 = vsel %vm2956, %v2829, 299
    %vm2958 = vcmp.lt.s32.totalorder %v2831, 299
    %v2959 = vsel %vm2958, %v2831, 299
    %vm2960 = vcmp.lt.s32.totalorder %v2833, 299
    %v2961 = vsel %vm2960, %v2833, 299
    %v2962 = vadd.s32 %v462, 128
    %v2963 = vadd.s32 %v462, 256
    %vm2964 = vcmp.eq.s32.totalorder %v2835, %v462
    %vm2965 = vcmp.eq.s32.totalorder %v2835, %v2962
    %vm2966 = vcmp.eq.s32.totalorder %v2835, %v2963
    %vm2967 = vcmp.eq.s32.totalorder %v2837, %v462
    %vm2968 = vcmp.eq.s32.totalorder %v2837, %v2962
    %vm2969 = vcmp.eq.s32.totalorder %v2837, %v2963
    %vm2970 = vcmp.eq.s32.totalorder %v2839, %v462
    %vm2971 = vcmp.eq.s32.totalorder %v2839, %v2962
    %vm2972 = vcmp.eq.s32.totalorder %v2839, %v2963
    %vm2973 = vcmp.eq.s32.totalorder %v2841, %v462
    %vm2974 = vcmp.eq.s32.totalorder %v2841, %v2962
    %vm2975 = vcmp.eq.s32.totalorder %v2841, %v2963
    %vm2976 = vcmp.eq.s32.totalorder %v2843, %v462
    %vm2977 = vcmp.eq.s32.totalorder %v2843, %v2962
    %vm2978 = vcmp.eq.s32.totalorder %v2843, %v2963
    %vm2979 = vcmp.eq.s32.totalorder %v2845, %v462
    %vm2980 = vcmp.eq.s32.totalorder %v2845, %v2962
    %vm2981 = vcmp.eq.s32.totalorder %v2845, %v2963
    %vm2982 = vcmp.eq.s32.totalorder %v2847, %v462
    %vm2983 = vcmp.eq.s32.totalorder %v2847, %v2962
    %vm2984 = vcmp.eq.s32.totalorder %v2847, %v2963
    %vm2985 = vcmp.eq.s32.totalorder %v2849, %v462
    %vm2986 = vcmp.eq.s32.totalorder %v2849, %v2962
    %vm2987 = vcmp.eq.s32.totalorder %v2849, %v2963
    %vm2988 = vcmp.eq.s32.totalorder %v2851, %v462
    %vm2989 = vcmp.eq.s32.totalorder %v2851, %v2962
    %vm2990 = vcmp.eq.s32.totalorder %v2851, %v2963
    %vm2991 = vcmp.eq.s32.totalorder %v2853, %v462
    %vm2992 = vcmp.eq.s32.totalorder %v2853, %v2962
    %vm2993 = vcmp.eq.s32.totalorder %v2853, %v2963
    %vm2994 = vcmp.eq.s32.totalorder %v2855, %v462
    %vm2995 = vcmp.eq.s32.totalorder %v2855, %v2962
    %vm2996 = vcmp.eq.s32.totalorder %v2855, %v2963
    %vm2997 = vcmp.eq.s32.totalorder %v2857, %v462
    %vm2998 = vcmp.eq.s32.totalorder %v2857, %v2962
    %vm2999 = vcmp.eq.s32.totalorder %v2857, %v2963
    %vm3000 = vcmp.eq.s32.totalorder %v2859, %v462
    %vm3001 = vcmp.eq.s32.totalorder %v2859, %v2962
    %vm3002 = vcmp.eq.s32.totalorder %v2859, %v2963
    %vm3003 = vcmp.eq.s32.totalorder %v2861, %v462
    %vm3004 = vcmp.eq.s32.totalorder %v2861, %v2962
    %vm3005 = vcmp.eq.s32.totalorder %v2861, %v2963
    %vm3006 = vcmp.eq.s32.totalorder %v2863, %v462
    %vm3007 = vcmp.eq.s32.totalorder %v2863, %v2962
    %vm3008 = vcmp.eq.s32.totalorder %v2863, %v2963
    %vm3009 = vcmp.eq.s32.totalorder %v2865, %v462
    %vm3010 = vcmp.eq.s32.totalorder %v2865, %v2962
    %vm3011 = vcmp.eq.s32.totalorder %v2865, %v2963
    %vm3012 = vcmp.eq.s32.totalorder %v2867, %v462
    %vm3013 = vcmp.eq.s32.totalorder %v2867, %v2962
    %vm3014 = vcmp.eq.s32.totalorder %v2867, %v2963
    %vm3015 = vcmp.eq.s32.totalorder %v2869, %v462
    %vm3016 = vcmp.eq.s32.totalorder %v2869, %v2962
    %vm3017 = vcmp.eq.s32.totalorder %v2869, %v2963
    %vm3018 = vcmp.eq.s32.totalorder %v2871, %v462
    %vm3019 = vcmp.eq.s32.totalorder %v2871, %v2962
    %vm3020 = vcmp.eq.s32.totalorder %v2871, %v2963
    %vm3021 = vcmp.eq.s32.totalorder %v2873, %v462
    %vm3022 = vcmp.eq.s32.totalorder %v2873, %v2962
    %vm3023 = vcmp.eq.s32.totalorder %v2873, %v2963
    %vm3024 = vcmp.eq.s32.totalorder %v2875, %v462
    %vm3025 = vcmp.eq.s32.totalorder %v2875, %v2962
    %vm3026 = vcmp.eq.s32.totalorder %v2875, %v2963
    %vm3027 = vcmp.eq.s32.totalorder %v2877, %v462
    %vm3028 = vcmp.eq.s32.totalorder %v2877, %v2962
    %vm3029 = vcmp.eq.s32.totalorder %v2877, %v2963
    %vm3030 = vcmp.eq.s32.totalorder %v2879, %v462
    %vm3031 = vcmp.eq.s32.totalorder %v2879, %v2962
    %vm3032 = vcmp.eq.s32.totalorder %v2879, %v2963
    %vm3033 = vcmp.eq.s32.totalorder %v2881, %v462
    %vm3034 = vcmp.eq.s32.totalorder %v2881, %v2962
    %vm3035 = vcmp.eq.s32.totalorder %v2881, %v2963
    %vm3036 = vcmp.eq.s32.totalorder %v2883, %v462
    %vm3037 = vcmp.eq.s32.totalorder %v2883, %v2962
    %vm3038 = vcmp.eq.s32.totalorder %v2883, %v2963
    %vm3039 = vcmp.eq.s32.totalorder %v2885, %v462
    %vm3040 = vcmp.eq.s32.totalorder %v2885, %v2962
    %vm3041 = vcmp.eq.s32.totalorder %v2885, %v2963
    %vm3042 = vcmp.eq.s32.totalorder %v2887, %v462
    %vm3043 = vcmp.eq.s32.totalorder %v2887, %v2962
    %vm3044 = vcmp.eq.s32.totalorder %v2887, %v2963
    %vm3045 = vcmp.eq.s32.totalorder %v2889, %v462
    %vm3046 = vcmp.eq.s32.totalorder %v2889, %v2962
    %vm3047 = vcmp.eq.s32.totalorder %v2889, %v2963
    %vm3048 = vcmp.eq.s32.totalorder %v2891, %v462
    %vm3049 = vcmp.eq.s32.totalorder %v2891, %v2962
    %vm3050 = vcmp.eq.s32.totalorder %v2891, %v2963
    %vm3051 = vcmp.eq.s32.totalorder %v2893, %v462
    %vm3052 = vcmp.eq.s32.totalorder %v2893, %v2962
    %vm3053 = vcmp.eq.s32.totalorder %v2893, %v2963
    %vm3054 = vcmp.eq.s32.totalorder %v2895, %v462
    %vm3055 = vcmp.eq.s32.totalorder %v2895, %v2962
    %vm3056 = vcmp.eq.s32.totalorder %v2895, %v2963
    %vm3057 = vcmp.eq.s32.totalorder %v2897, %v462
    %vm3058 = vcmp.eq.s32.totalorder %v2897, %v2962
    %vm3059 = vcmp.eq.s32.totalorder %v2897, %v2963
    %vm3060 = vcmp.eq.s32.totalorder %v2899, %v462
    %vm3061 = vcmp.eq.s32.totalorder %v2899, %v2962
    %vm3062 = vcmp.eq.s32.totalorder %v2899, %v2963
    %vm3063 = vcmp.eq.s32.totalorder %v2901, %v462
    %vm3064 = vcmp.eq.s32.totalorder %v2901, %v2962
    %vm3065 = vcmp.eq.s32.totalorder %v2901, %v2963
    %vm3066 = vcmp.eq.s32.totalorder %v2903, %v462
    %vm3067 = vcmp.eq.s32.totalorder %v2903, %v2962
    %vm3068 = vcmp.eq.s32.totalorder %v2903, %v2963
    %vm3069 = vcmp.eq.s32.totalorder %v2905, %v462
    %vm3070 = vcmp.eq.s32.totalorder %v2905, %v2962
    %vm3071 = vcmp.eq.s32.totalorder %v2905, %v2963
    %vm3072 = vcmp.eq.s32.totalorder %v2907, %v462
    %vm3073 = vcmp.eq.s32.totalorder %v2907, %v2962
    %vm3074 = vcmp.eq.s32.totalorder %v2907, %v2963
    %vm3075 = vcmp.eq.s32.totalorder %v2909, %v462
    %vm3076 = vcmp.eq.s32.totalorder %v2909, %v2962
    %vm3077 = vcmp.eq.s32.totalorder %v2909, %v2963
    %vm3078 = vcmp.eq.s32.totalorder %v2911, %v462
    %vm3079 = vcmp.eq.s32.totalorder %v2911, %v2962
    %vm3080 = vcmp.eq.s32.totalorder %v2911, %v2963
    %vm3081 = vcmp.eq.s32.totalorder %v2913, %v462
    %vm3082 = vcmp.eq.s32.totalorder %v2913, %v2962
    %vm3083 = vcmp.eq.s32.totalorder %v2913, %v2963
    %vm3084 = vcmp.eq.s32.totalorder %v2915, %v462
    %vm3085 = vcmp.eq.s32.totalorder %v2915, %v2962
    %vm3086 = vcmp.eq.s32.totalorder %v2915, %v2963
    %vm3087 = vcmp.eq.s32.totalorder %v2917, %v462
    %vm3088 = vcmp.eq.s32.totalorder %v2917, %v2962
    %vm3089 = vcmp.eq.s32.totalorder %v2917, %v2963
    %vm3090 = vcmp.eq.s32.totalorder %v2919, %v462
    %vm3091 = vcmp.eq.s32.totalorder %v2919, %v2962
    %vm3092 = vcmp.eq.s32.totalorder %v2919, %v2963
    %vm3093 = vcmp.eq.s32.totalorder %v2921, %v462
    %vm3094 = vcmp.eq.s32.totalorder %v2921, %v2962
    %vm3095 = vcmp.eq.s32.totalorder %v2921, %v2963
    %vm3096 = vcmp.eq.s32.totalorder %v2923, %v462
    %vm3097 = vcmp.eq.s32.totalorder %v2923, %v2962
    %vm3098 = vcmp.eq.s32.totalorder %v2923, %v2963
    %vm3099 = vcmp.eq.s32.totalorder %v2925, %v462
    %vm3100 = vcmp.eq.s32.totalorder %v2925, %v2962
    %vm3101 = vcmp.eq.s32.totalorder %v2925, %v2963
    %vm3102 = vcmp.eq.s32.totalorder %v2927, %v462
    %vm3103 = vcmp.eq.s32.totalorder %v2927, %v2962
    %vm3104 = vcmp.eq.s32.totalorder %v2927, %v2963
    %vm3105 = vcmp.eq.s32.totalorder %v2929, %v462
    %vm3106 = vcmp.eq.s32.totalorder %v2929, %v2962
    %vm3107 = vcmp.eq.s32.totalorder %v2929, %v2963
    %vm3108 = vcmp.eq.s32.totalorder %v2931, %v462
    %vm3109 = vcmp.eq.s32.totalorder %v2931, %v2962
    %vm3110 = vcmp.eq.s32.totalorder %v2931, %v2963
    %vm3111 = vcmp.eq.s32.totalorder %v2933, %v462
    %vm3112 = vcmp.eq.s32.totalorder %v2933, %v2962
    %vm3113 = vcmp.eq.s32.totalorder %v2933, %v2963
    %vm3114 = vcmp.eq.s32.totalorder %v2935, %v462
    %vm3115 = vcmp.eq.s32.totalorder %v2935, %v2962
    %vm3116 = vcmp.eq.s32.totalorder %v2935, %v2963
    %vm3117 = vcmp.eq.s32.totalorder %v2937, %v462
    %vm3118 = vcmp.eq.s32.totalorder %v2937, %v2962
    %vm3119 = vcmp.eq.s32.totalorder %v2937, %v2963
    %vm3120 = vcmp.eq.s32.totalorder %v2939, %v462
    %vm3121 = vcmp.eq.s32.totalorder %v2939, %v2962
    %vm3122 = vcmp.eq.s32.totalorder %v2939, %v2963
    %vm3123 = vcmp.eq.s32.totalorder %v2941, %v462
    %vm3124 = vcmp.eq.s32.totalorder %v2941, %v2962
    %vm3125 = vcmp.eq.s32.totalorder %v2941, %v2963
    %vm3126 = vcmp.eq.s32.totalorder %v2943, %v462
    %vm3127 = vcmp.eq.s32.totalorder %v2943, %v2962
    %vm3128 = vcmp.eq.s32.totalorder %v2943, %v2963
    %vm3129 = vcmp.eq.s32.totalorder %v2945, %v462
    %vm3130 = vcmp.eq.s32.totalorder %v2945, %v2962
    %vm3131 = vcmp.eq.s32.totalorder %v2945, %v2963
    %vm3132 = vcmp.eq.s32.totalorder %v2947, %v462
    %vm3133 = vcmp.eq.s32.totalorder %v2947, %v2962
    %vm3134 = vcmp.eq.s32.totalorder %v2947, %v2963
    %vm3135 = vcmp.eq.s32.totalorder %v2949, %v462
    %vm3136 = vcmp.eq.s32.totalorder %v2949, %v2962
    %vm3137 = vcmp.eq.s32.totalorder %v2949, %v2963
    %vm3138 = vcmp.eq.s32.totalorder %v2951, %v462
    %vm3139 = vcmp.eq.s32.totalorder %v2951, %v2962
    %vm3140 = vcmp.eq.s32.totalorder %v2951, %v2963
    %vm3141 = vcmp.eq.s32.totalorder %v2953, %v462
    %vm3142 = vcmp.eq.s32.totalorder %v2953, %v2962
    %vm3143 = vcmp.eq.s32.totalorder %v2953, %v2963
    %vm3144 = vcmp.eq.s32.totalorder %v2955, %v462
    %vm3145 = vcmp.eq.s32.totalorder %v2955, %v2962
    %vm3146 = vcmp.eq.s32.totalorder %v2955, %v2963
    %vm3147 = vcmp.eq.s32.totalorder %v2957, %v462
    %vm3148 = vcmp.eq.s32.totalorder %v2957, %v2962
    %vm3149 = vcmp.eq.s32.totalorder %v2957, %v2963
    %vm3150 = vcmp.eq.s32.totalorder %v2959, %v462
    %vm3151 = vcmp.eq.s32.totalorder %v2959, %v2962
    %vm3152 = vcmp.eq.s32.totalorder %v2959, %v2963
    %vm3153 = vcmp.eq.s32.totalorder %v2961, %v462
    %vm3154 = vcmp.eq.s32.totalorder %v2961, %v2962
    %vm3155 = vcmp.eq.s32.totalorder %v2961, %v2963
    %v3156 = vsel %vm2964, 1, 0
    %v3157 = vsel %vm2965, 1, 0
    %v3158 = vsel %vm2966, 1, 0
    %v3159 = vsel %vm2967, 1, 0
    %v3160 = vsel %vm2968, 1, 0
    %v3161 = vsel %vm2969, 1, 0
    %v3162 = vsel %vm2970, 1, 0
    %v3163 = vsel %vm2971, 1, 0
    %v3164 = vsel %vm2972, 1, 0
    %v3165 = vsel %vm2973, 1, 0
    %v3166 = vsel %vm2974, 1, 0
    %v3167 = vsel %vm2975, 1, 0
    %v3168 = vsel %vm2976, 1, 0
    %v3169 = vsel %vm2977, 1, 0
    %v3170 = vsel %vm2978, 1, 0
    %v3171 = vsel %vm2979, 1, 0
    %v3172 = vsel %vm2980, 1, 0
    %v3173 = vsel %vm2981, 1, 0
    %v3174 = vsel %vm2982, 1, 0
    %v3175 = vsel %vm2983, 1, 0
    %v3176 = vsel %vm2984, 1, 0
    %v3177 = vsel %vm2985, 1, 0
    %v3178 = vsel %vm2986, 1, 0
    %v3179 = vsel %vm2987, 1, 0
    %v3180 = vsel %vm2988, 1, 0
    %v3181 = vsel %vm2989, 1, 0
    %v3182 = vsel %vm2990, 1, 0
    %v3183 = vsel %vm2991, 1, 0
    %v3184 = vsel %vm2992, 1, 0
    %v3185 = vsel %vm2993, 1, 0
    %v3186 = vsel %vm2994, 1, 0
    %v3187 = vsel %vm2995, 1, 0
    %v3188 = vsel %vm2996, 1, 0
    %v3189 = vsel %vm2997, 1, 0
    %v3190 = vsel %vm2998, 1, 0
    %v3191 = vsel %vm2999, 1, 0
    %v3192 = vsel %vm3000, 1, 0
    %v3193 = vsel %vm3001, 1, 0
    %v3194 = vsel %vm3002, 1, 0
    %v3195 = vsel %vm3003, 1, 0
    %v3196 = vsel %vm3004, 1, 0
    %v3197 = vsel %vm3005, 1, 0
    %v3198 = vsel %vm3006, 1, 0
    %v3199 = vsel %vm3007, 1, 0
    %v3200 = vsel %vm3008, 1, 0
    %v3201 = vsel %vm3009, 1, 0
    %v3202 = vsel %vm3010, 1, 0
    %v3203 = vsel %vm3011, 1, 0
    %v3204 = vsel %vm3012, 1, 0
    %v3205 = vsel %vm3013, 1, 0
    %v3206 = vsel %vm3014, 1, 0
    %v3207 = vsel %vm3015, 1, 0
    %v3208 = vsel %vm3016, 1, 0
    %v3209 = vsel %vm3017, 1, 0
    %v3210 = vsel %vm3018, 1, 0
    %v3211 = vsel %vm3019, 1, 0
    %v3212 = vsel %vm3020, 1, 0
    %v3213 = vsel %vm3021, 1, 0
    %v3214 = vsel %vm3022, 1, 0
    %v3215 = vsel %vm3023, 1, 0
    %v3216 = vsel %vm3024, 1, 0
    %v3217 = vsel %vm3025, 1, 0
    %v3218 = vsel %vm3026, 1, 0
    %v3219 = vsel %vm3027, 1, 0
    %v3220 = vsel %vm3028, 1, 0
    %v3221 = vsel %vm3029, 1, 0
    %v3222 = vsel %vm3030, 1, 0
    %v3223 = vsel %vm3031, 1, 0
    %v3224 = vsel %vm3032, 1, 0
    %v3225 = vsel %vm3033, 1, 0
    %v3226 = vsel %vm3034, 1, 0
    %v3227 = vsel %vm3035, 1, 0
    %v3228 = vsel %vm3036, 1, 0
    %v3229 = vsel %vm3037, 1, 0
    %v3230 = vsel %vm3038, 1, 0
    %v3231 = vsel %vm3039, 1, 0
    %v3232 = vsel %vm3040, 1, 0
    %v3233 = vsel %vm3041, 1, 0
    %v3234 = vsel %vm3042, 1, 0
    %v3235 = vsel %vm3043, 1, 0
    %v3236 = vsel %vm3044, 1, 0
    %v3237 = vsel %vm3045, 1, 0
    %v3238 = vsel %vm3046, 1, 0
    %v3239 = vsel %vm3047, 1, 0
    %v3240 = vsel %vm3048, 1, 0
    %v3241 = vsel %vm3049, 1, 0
    %v3242 = vsel %vm3050, 1, 0
    %v3243 = vsel %vm3051, 1, 0
    %v3244 = vsel %vm3052, 1, 0
    %v3245 = vsel %vm3053, 1, 0
    %v3246 = vsel %vm3054, 1, 0
    %v3247 = vsel %vm3055, 1, 0
    %v3248 = vsel %vm3056, 1, 0
    %v3249 = vsel %vm3057, 1, 0
    %v3250 = vsel %vm3058, 1, 0
    %v3251 = vsel %vm3059, 1, 0
    %v3252 = vsel %vm3060, 1, 0
    %v3253 = vsel %vm3061, 1, 0
    %v3254 = vsel %vm3062, 1, 0
    %v3255 = vsel %vm3063, 1, 0
    %v3256 = vsel %vm3064, 1, 0
    %v3257 = vsel %vm3065, 1, 0
    %v3258 = vsel %vm3066, 1, 0
    %v3259 = vsel %vm3067, 1, 0
    %v3260 = vsel %vm3068, 1, 0
    %v3261 = vsel %vm3069, 1, 0
    %v3262 = vsel %vm3070, 1, 0
    %v3263 = vsel %vm3071, 1, 0
    %v3264 = vsel %vm3072, 1, 0
    %v3265 = vsel %vm3073, 1, 0
    %v3266 = vsel %vm3074, 1, 0
    %v3267 = vsel %vm3075, 1, 0
    %v3268 = vsel %vm3076, 1, 0
    %v3269 = vsel %vm3077, 1, 0
    %v3270 = vsel %vm3078, 1, 0
    %v3271 = vsel %vm3079, 1, 0
    %v3272 = vsel %vm3080, 1, 0
    %v3273 = vsel %vm3081, 1, 0
    %v3274 = vsel %vm3082, 1, 0
    %v3275 = vsel %vm3083, 1, 0
    %v3276 = vsel %vm3084, 1, 0
    %v3277 = vsel %vm3085, 1, 0
    %v3278 = vsel %vm3086, 1, 0
    %v3279 = vsel %vm3087, 1, 0
    %v3280 = vsel %vm3088, 1, 0
    %v3281 = vsel %vm3089, 1, 0
    %v3282 = vsel %vm3090, 1, 0
    %v3283 = vsel %vm3091, 1, 0
    %v3284 = vsel %vm3092, 1, 0
    %v3285 = vsel %vm3093, 1, 0
    %v3286 = vsel %vm3094, 1, 0
    %v3287 = vsel %vm3095, 1, 0
    %v3288 = vsel %vm3096, 1, 0
    %v3289 = vsel %vm3097, 1, 0
    %v3290 = vsel %vm3098, 1, 0
    %v3291 = vsel %vm3099, 1, 0
    %v3292 = vsel %vm3100, 1, 0
    %v3293 = vsel %vm3101, 1, 0
    %v3294 = vsel %vm3102, 1, 0
    %v3295 = vsel %vm3103, 1, 0
    %v3296 = vsel %vm3104, 1, 0
    %v3297 = vsel %vm3105, 1, 0
    %v3298 = vsel %vm3106, 1, 0
    %v3299 = vsel %vm3107, 1, 0
    %v3300 = vsel %vm3108, 1, 0
    %v3301 = vsel %vm3109, 1, 0
    %v3302 = vsel %vm3110, 1, 0
    %v3303 = vsel %vm3111, 1, 0
    %v3304 = vsel %vm3112, 1, 0
    %v3305 = vsel %vm3113, 1, 0
    %v3306 = vsel %vm3114, 1, 0
    %v3307 = vsel %vm3115, 1, 0
    %v3308 = vsel %vm3116, 1, 0
    %v3309 = vsel %vm3117, 1, 0
    %v3310 = vsel %vm3118, 1, 0
    %v3311 = vsel %vm3119, 1, 0
    %v3312 = vsel %vm3120, 1, 0
    %v3313 = vsel %vm3121, 1, 0
    %v3314 = vsel %vm3122, 1, 0
    %v3315 = vsel %vm3123, 1, 0
    %v3316 = vsel %vm3124, 1, 0
    %v3317 = vsel %vm3125, 1, 0
    %v3318 = vsel %vm3126, 1, 0
    %v3319 = vsel %vm3127, 1, 0
    %v3320 = vsel %vm3128, 1, 0
    %v3321 = vsel %vm3129, 1, 0
    %v3322 = vsel %vm3130, 1, 0
    %v3323 = vsel %vm3131, 1, 0
    %v3324 = vsel %vm3132, 1, 0
    %v3325 = vsel %vm3133, 1, 0
    %v3326 = vsel %vm3134, 1, 0
    %v3327 = vsel %vm3135, 1, 0
    %v3328 = vsel %vm3136, 1, 0
    %v3329 = vsel %vm3137, 1, 0
    %v3330 = vsel %vm3138, 1, 0
    %v3331 = vsel %vm3139, 1, 0
    %v3332 = vsel %vm3140, 1, 0
    %v3333 = vsel %vm3141, 1, 0
    %v3334 = vsel %vm3142, 1, 0
    %v3335 = vsel %vm3143, 1, 0
    %v3336 = vsel %vm3144, 1, 0
    %v3337 = vsel %vm3145, 1, 0
    %v3338 = vsel %vm3146, 1, 0
    %v3339 = vsel %vm3147, 1, 0
    %v3340 = vsel %vm3148, 1, 0
    %v3341 = vsel %vm3149, 1, 0
    %v3342 = vsel %vm3150, 1, 0
    %v3343 = vsel %vm3151, 1, 0
    %v3344 = vsel %vm3152, 1, 0
    %v3345 = vsel %vm3153, 1, 0
    %v3346 = vsel %vm3154, 1, 0
    %v3347 = vsel %vm3155, 1, 0
    %v3348 = vcvt.s32.f32 %v3156
    %v3349 = vcvt.s32.f32 %v3157
    %v3350 = vcvt.s32.f32 %v3158
    %v3351 = vcvt.s32.f32 %v3159
    %v3352 = vcvt.s32.f32 %v3160
    %v3353 = vcvt.s32.f32 %v3161
    %v3354 = vcvt.s32.f32 %v3162
    %v3355 = vcvt.s32.f32 %v3163
    %v3356 = vcvt.s32.f32 %v3164
    %v3357 = vcvt.s32.f32 %v3165
    %v3358 = vcvt.s32.f32 %v3166
    %v3359 = vcvt.s32.f32 %v3167
    %v3360 = vcvt.s32.f32 %v3168
    %v3361 = vcvt.s32.f32 %v3169
    %v3362 = vcvt.s32.f32 %v3170
    %v3363 = vcvt.s32.f32 %v3171
    %v3364 = vcvt.s32.f32 %v3172
    %v3365 = vcvt.s32.f32 %v3173
    %v3366 = vcvt.s32.f32 %v3174
    %v3367 = vcvt.s32.f32 %v3175
    %v3368 = vcvt.s32.f32 %v3176
    %v3369 = vcvt.s32.f32 %v3177
    %v3370 = vcvt.s32.f32 %v3178
    %v3371 = vcvt.s32.f32 %v3179
    %v3372 = vcvt.s32.f32 %v3180
    %v3373 = vcvt.s32.f32 %v3181
    %v3374 = vcvt.s32.f32 %v3182
    %v3375 = vcvt.s32.f32 %v3183
    %v3376 = vcvt.s32.f32 %v3184
    %v3377 = vcvt.s32.f32 %v3185
    %v3378 = vcvt.s32.f32 %v3186
    %v3379 = vcvt.s32.f32 %v3187
    %v3380 = vcvt.s32.f32 %v3188
    %v3381 = vcvt.s32.f32 %v3189
    %v3382 = vcvt.s32.f32 %v3190
    %v3383 = vcvt.s32.f32 %v3191
    %v3384 = vcvt.s32.f32 %v3192
    %v3385 = vcvt.s32.f32 %v3193
    %v3386 = vcvt.s32.f32 %v3194
    %v3387 = vcvt.s32.f32 %v3195
    %v3388 = vcvt.s32.f32 %v3196
    %v3389 = vcvt.s32.f32 %v3197
    %v3390 = vcvt.s32.f32 %v3198
    %v3391 = vcvt.s32.f32 %v3199
    %v3392 = vcvt.s32.f32 %v3200
    %v3393 = vcvt.s32.f32 %v3201
    %v3394 = vcvt.s32.f32 %v3202
    %v3395 = vcvt.s32.f32 %v3203
    %v3396 = vcvt.s32.f32 %v3204
    %v3397 = vcvt.s32.f32 %v3205
    %v3398 = vcvt.s32.f32 %v3206
    %v3399 = vcvt.s32.f32 %v3207
    %v3400 = vcvt.s32.f32 %v3208
    %v3401 = vcvt.s32.f32 %v3209
    %v3402 = vcvt.s32.f32 %v3210
    %v3403 = vcvt.s32.f32 %v3211
    %v3404 = vcvt.s32.f32 %v3212
    %v3405 = vcvt.s32.f32 %v3213
    %v3406 = vcvt.s32.f32 %v3214
    %v3407 = vcvt.s32.f32 %v3215
    %v3408 = vcvt.s32.f32 %v3216
    %v3409 = vcvt.s32.f32 %v3217
    %v3410 = vcvt.s32.f32 %v3218
    %v3411 = vcvt.s32.f32 %v3219
    %v3412 = vcvt.s32.f32 %v3220
    %v3413 = vcvt.s32.f32 %v3221
    %v3414 = vcvt.s32.f32 %v3222
    %v3415 = vcvt.s32.f32 %v3223
    %v3416 = vcvt.s32.f32 %v3224
    %v3417 = vcvt.s32.f32 %v3225
    %v3418 = vcvt.s32.f32 %v3226
    %v3419 = vcvt.s32.f32 %v3227
    %v3420 = vcvt.s32.f32 %v3228
    %v3421 = vcvt.s32.f32 %v3229
    %v3422 = vcvt.s32.f32 %v3230
    %v3423 = vcvt.s32.f32 %v3231
    %v3424 = vcvt.s32.f32 %v3232
    %v3425 = vcvt.s32.f32 %v3233
    %v3426 = vcvt.s32.f32 %v3234
    %v3427 = vcvt.s32.f32 %v3235
    %v3428 = vcvt.s32.f32 %v3236
    %v3429 = vcvt.s32.f32 %v3237
    %v3430 = vcvt.s32.f32 %v3238
    %v3431 = vcvt.s32.f32 %v3239
    %v3432 = vcvt.s32.f32 %v3240
    %v3433 = vcvt.s32.f32 %v3241
    %v3434 = vcvt.s32.f32 %v3242
    %v3435 = vcvt.s32.f32 %v3243
    %v3436 = vcvt.s32.f32 %v3244
    %v3437 = vcvt.s32.f32 %v3245
    %v3438 = vcvt.s32.f32 %v3246
    %v3439 = vcvt.s32.f32 %v3247
    %v3440 = vcvt.s32.f32 %v3248
    %v3441 = vcvt.s32.f32 %v3249
    %v3442 = vcvt.s32.f32 %v3250
    %v3443 = vcvt.s32.f32 %v3251
    %v3444 = vcvt.s32.f32 %v3252
    %v3445 = vcvt.s32.f32 %v3253
    %v3446 = vcvt.s32.f32 %v3254
    %v3447 = vcvt.s32.f32 %v3255
    %v3448 = vcvt.s32.f32 %v3256
    %v3449 = vcvt.s32.f32 %v3257
    %v3450 = vcvt.s32.f32 %v3258
    %v3451 = vcvt.s32.f32 %v3259
    %v3452 = vcvt.s32.f32 %v3260
    %v3453 = vcvt.s32.f32 %v3261
    %v3454 = vcvt.s32.f32 %v3262
    %v3455 = vcvt.s32.f32 %v3263
    %v3456 = vcvt.s32.f32 %v3264
    %v3457 = vcvt.s32.f32 %v3265
    %v3458 = vcvt.s32.f32 %v3266
    %v3459 = vcvt.s32.f32 %v3267
    %v3460 = vcvt.s32.f32 %v3268
    %v3461 = vcvt.s32.f32 %v3269
    %v3462 = vcvt.s32.f32 %v3270
    %v3463 = vcvt.s32.f32 %v3271
    %v3464 = vcvt.s32.f32 %v3272
    %v3465 = vcvt.s32.f32 %v3273
    %v3466 = vcvt.s32.f32 %v3274
    %v3467 = vcvt.s32.f32 %v3275
    %v3468 = vcvt.s32.f32 %v3276
    %v3469 = vcvt.s32.f32 %v3277
    %v3470 = vcvt.s32.f32 %v3278
    %v3471 = vcvt.s32.f32 %v3279
    %v3472 = vcvt.s32.f32 %v3280
    %v3473 = vcvt.s32.f32 %v3281
    %v3474 = vcvt.s32.f32 %v3282
    %v3475 = vcvt.s32.f32 %v3283
    %v3476 = vcvt.s32.f32 %v3284
    %v3477 = vcvt.s32.f32 %v3285
    %v3478 = vcvt.s32.f32 %v3286
    %v3479 = vcvt.s32.f32 %v3287
    %v3480 = vcvt.s32.f32 %v3288
    %v3481 = vcvt.s32.f32 %v3289
    %v3482 = vcvt.s32.f32 %v3290
    %v3483 = vcvt.s32.f32 %v3291
    %v3484 = vcvt.s32.f32 %v3292
    %v3485 = vcvt.s32.f32 %v3293
    %v3486 = vcvt.s32.f32 %v3294
    %v3487 = vcvt.s32.f32 %v3295
    %v3488 = vcvt.s32.f32 %v3296
    %v3489 = vcvt.s32.f32 %v3297
    %v3490 = vcvt.s32.f32 %v3298
    %v3491 = vcvt.s32.f32 %v3299
    %v3492 = vcvt.s32.f32 %v3300
    %v3493 = vcvt.s32.f32 %v3301
    %v3494 = vcvt.s32.f32 %v3302
    %v3495 = vcvt.s32.f32 %v3303
    %v3496 = vcvt.s32.f32 %v3304
    %v3497 = vcvt.s32.f32 %v3305
    %v3498 = vcvt.s32.f32 %v3306
    %v3499 = vcvt.s32.f32 %v3307
    %v3500 = vcvt.s32.f32 %v3308
    %v3501 = vcvt.s32.f32 %v3309
    %v3502 = vcvt.s32.f32 %v3310
    %v3503 = vcvt.s32.f32 %v3311
    %v3504 = vcvt.s32.f32 %v3312
    %v3505 = vcvt.s32.f32 %v3313
    %v3506 = vcvt.s32.f32 %v3314
    %v3507 = vcvt.s32.f32 %v3315
    %v3508 = vcvt.s32.f32 %v3316
    %v3509 = vcvt.s32.f32 %v3317
    %v3510 = vcvt.s32.f32 %v3318
    %v3511 = vcvt.s32.f32 %v3319
    %v3512 = vcvt.s32.f32 %v3320
    %v3513 = vcvt.s32.f32 %v3321
    %v3514 = vcvt.s32.f32 %v3322
    %v3515 = vcvt.s32.f32 %v3323
    %v3516 = vcvt.s32.f32 %v3324
    %v3517 = vcvt.s32.f32 %v3325
    %v3518 = vcvt.s32.f32 %v3326
    %v3519 = vcvt.s32.f32 %v3327
    %v3520 = vcvt.s32.f32 %v3328
    %v3521 = vcvt.s32.f32 %v3329
    %v3522 = vcvt.s32.f32 %v3330
    %v3523 = vcvt.s32.f32 %v3331
    %v3524 = vcvt.s32.f32 %v3332
    %v3525 = vcvt.s32.f32 %v3333
    %v3526 = vcvt.s32.f32 %v3334
    %v3527 = vcvt.s32.f32 %v3335
    %v3528 = vcvt.s32.f32 %v3336
    %v3529 = vcvt.s32.f32 %v3337
    %v3530 = vcvt.s32.f32 %v3338
    %v3531 = vcvt.s32.f32 %v3339
    %v3532 = vcvt.s32.f32 %v3340
    %v3533 = vcvt.s32.f32 %v3341
    %v3534 = vcvt.s32.f32 %v3342
    %v3535 = vcvt.s32.f32 %v3343
    %v3536 = vcvt.s32.f32 %v3344
    %v3537 = vcvt.s32.f32 %v3345
    %v3538 = vcvt.s32.f32 %v3346
    %v3539 = vcvt.s32.f32 %v3347
    %v3540 = vpack.c.bf16 %v3351, %v3348
    %v3541 = vpack.c.bf16 %v3352, %v3349
    %v3542 = vpack.c.bf16 %v3353, %v3350
    %v3543 = vpack.c.bf16 %v3357, %v3354
    %v3544 = vpack.c.bf16 %v3358, %v3355
    %v3545 = vpack.c.bf16 %v3359, %v3356
    %v3546 = vpack.c.bf16 %v3363, %v3360
    %v3547 = vpack.c.bf16 %v3364, %v3361
    %v3548 = vpack.c.bf16 %v3365, %v3362
    %v3549 = vpack.c.bf16 %v3369, %v3366
    %v3550 = vpack.c.bf16 %v3370, %v3367
    %v3551 = vpack.c.bf16 %v3371, %v3368
    %v3552 = vpack.c.bf16 %v3375, %v3372
    %v3553 = vpack.c.bf16 %v3376, %v3373
    %v3554 = vpack.c.bf16 %v3377, %v3374
    %v3555 = vpack.c.bf16 %v3381, %v3378
    %v3556 = vpack.c.bf16 %v3382, %v3379
    %v3557 = vpack.c.bf16 %v3383, %v3380
    %v3558 = vpack.c.bf16 %v3387, %v3384
    %v3559 = vpack.c.bf16 %v3388, %v3385
    %v3560 = vpack.c.bf16 %v3389, %v3386
    %v3561 = vpack.c.bf16 %v3393, %v3390
    %v3562 = vpack.c.bf16 %v3394, %v3391
    %v3563 = vpack.c.bf16 %v3395, %v3392
    %v3564 = vpack.c.bf16 %v3399, %v3396
    %v3565 = vpack.c.bf16 %v3400, %v3397
    %v3566 = vpack.c.bf16 %v3401, %v3398
    %v3567 = vpack.c.bf16 %v3405, %v3402
    %v3568 = vpack.c.bf16 %v3406, %v3403
    %v3569 = vpack.c.bf16 %v3407, %v3404
    %v3570 = vpack.c.bf16 %v3411, %v3408
    %v3571 = vpack.c.bf16 %v3412, %v3409
    %v3572 = vpack.c.bf16 %v3413, %v3410
    %v3573 = vpack.c.bf16 %v3417, %v3414
    %v3574 = vpack.c.bf16 %v3418, %v3415
    %v3575 = vpack.c.bf16 %v3419, %v3416
    %v3576 = vpack.c.bf16 %v3423, %v3420
    %v3577 = vpack.c.bf16 %v3424, %v3421
    %v3578 = vpack.c.bf16 %v3425, %v3422
    %v3579 = vpack.c.bf16 %v3429, %v3426
    %v3580 = vpack.c.bf16 %v3430, %v3427
    %v3581 = vpack.c.bf16 %v3431, %v3428
    %v3582 = vpack.c.bf16 %v3435, %v3432
    %v3583 = vpack.c.bf16 %v3436, %v3433
    %v3584 = vpack.c.bf16 %v3437, %v3434
    %v3585 = vpack.c.bf16 %v3441, %v3438
    %v3586 = vpack.c.bf16 %v3442, %v3439
    %v3587 = vpack.c.bf16 %v3443, %v3440
    %v3588 = vpack.c.bf16 %v3447, %v3444
    %v3589 = vpack.c.bf16 %v3448, %v3445
    %v3590 = vpack.c.bf16 %v3449, %v3446
    %v3591 = vpack.c.bf16 %v3453, %v3450
    %v3592 = vpack.c.bf16 %v3454, %v3451
    %v3593 = vpack.c.bf16 %v3455, %v3452
    %v3594 = vpack.c.bf16 %v3459, %v3456
    %v3595 = vpack.c.bf16 %v3460, %v3457
    %v3596 = vpack.c.bf16 %v3461, %v3458
    %v3597 = vpack.c.bf16 %v3465, %v3462
    %v3598 = vpack.c.bf16 %v3466, %v3463
    %v3599 = vpack.c.bf16 %v3467, %v3464
    %v3600 = vpack.c.bf16 %v3471, %v3468
    %v3601 = vpack.c.bf16 %v3472, %v3469
    %v3602 = vpack.c.bf16 %v3473, %v3470
    %v3603 = vpack.c.bf16 %v3477, %v3474
    %v3604 = vpack.c.bf16 %v3478, %v3475
    %v3605 = vpack.c.bf16 %v3479, %v3476
    %v3606 = vpack.c.bf16 %v3483, %v3480
    %v3607 = vpack.c.bf16 %v3484, %v3481
    %v3608 = vpack.c.bf16 %v3485, %v3482
    %v3609 = vpack.c.bf16 %v3489, %v3486
    %v3610 = vpack.c.bf16 %v3490, %v3487
    %v3611 = vpack.c.bf16 %v3491, %v3488
    %v3612 = vpack.c.bf16 %v3495, %v3492
    %v3613 = vpack.c.bf16 %v3496, %v3493
    %v3614 = vpack.c.bf16 %v3497, %v3494
    %v3615 = vpack.c.bf16 %v3501, %v3498
    %v3616 = vpack.c.bf16 %v3502, %v3499
    %v3617 = vpack.c.bf16 %v3503, %v3500
    %v3618 = vpack.c.bf16 %v3507, %v3504
    %v3619 = vpack.c.bf16 %v3508, %v3505
    %v3620 = vpack.c.bf16 %v3509, %v3506
    %v3621 = vpack.c.bf16 %v3513, %v3510
    %v3622 = vpack.c.bf16 %v3514, %v3511
    %v3623 = vpack.c.bf16 %v3515, %v3512
    %v3624 = vpack.c.bf16 %v3519, %v3516
    %v3625 = vpack.c.bf16 %v3520, %v3517
    %v3626 = vpack.c.bf16 %v3521, %v3518
    %v3627 = vpack.c.bf16 %v3525, %v3522
    %v3628 = vpack.c.bf16 %v3526, %v3523
    %v3629 = vpack.c.bf16 %v3527, %v3524
    %v3630 = vpack.c.bf16 %v3531, %v3528
    %v3631 = vpack.c.bf16 %v3532, %v3529
    %v3632 = vpack.c.bf16 %v3533, %v3530
    %v3633 = vpack.c.bf16 %v3537, %v3534
    %v3634 = vpack.c.bf16 %v3538, %v3535
    %v3635 = vpack.c.bf16 %v3539, %v3536
    %v3636 = vld [vmem:[%s13] sm:$0xf]
    %v3637 = vld [vmem:[%s13 + $0x4] sm:$0xf]
    %v3638 = vld [vmem:[%s13 + $0x8] sm:$0xf]
    %v3639 = vld [vmem:[%s13 + $0xc] sm:$0xf]
    %v3640 = vld [vmem:[%s13 + $0x10] sm:$0xf]
    %v3641 = vld [vmem:[%s13 + $0x14] sm:$0xf]
    %v3642 = vld [vmem:[%s13 + $0x18] sm:$0xf]
    %v3643 = vld [vmem:[%s13 + $0x1c] sm:$0xf]
    %v3644 = vld [vmem:[%s13 + $0x20] sm:$0xf]
    %v3645 = vld [vmem:[%s13 + $0x24] sm:$0xf]
    %v3646 = vld [vmem:[%s13 + $0x28] sm:$0xf]
    %v3647 = vld [vmem:[%s13 + $0x2c] sm:$0xf]
    %v3648 = vld [vmem:[%s13 + $0x30] sm:$0xf]
    %v3649 = vld [vmem:[%s13 + $0x34] sm:$0xf]
    %v3650 = vld [vmem:[%s13 + $0x38] sm:$0xf]
    %v3651 = vld [vmem:[%s13 + $0x3c] sm:$0xf]
    %v3652 = vld [vmem:[%s13 + $0x40] sm:$0xf]
    %v3653 = vld [vmem:[%s13 + $0x44] sm:$0xf]
    %v3654 = vld [vmem:[%s13 + $0x48] sm:$0xf]
    %v3655 = vld [vmem:[%s13 + $0x4c] sm:$0xf]
    %v3656 = vld [vmem:[%s13 + $0x50] sm:$0xf]
    %v3657 = vld [vmem:[%s13 + $0x54] sm:$0xf]
    %v3658 = vld [vmem:[%s13 + $0x58] sm:$0xf]
    %v3659 = vld [vmem:[%s13 + $0x5c] sm:$0xf]
    %v3660 = vld [vmem:[%s13 + $0x60] sm:$0xf]
    %v3661 = vld [vmem:[%s13 + $0x64] sm:$0xf]
    %v3662 = vld [vmem:[%s13 + $0x68] sm:$0xf]
    %v3663 = vld [vmem:[%s13 + $0x6c] sm:$0xf]
    %v3664 = vld [vmem:[%s13 + $0x70] sm:$0xf]
    %v3665 = vld [vmem:[%s13 + $0x74] sm:$0xf]
    %v3666 = vld [vmem:[%s13 + $0x78] sm:$0xf]
    %v3667 = vld [vmem:[%s13 + $0x7c] sm:$0xf]
    %v3668 = vld [vmem:[%s13 + $0x80] sm:$0xf]
    %v3669 = vld [vmem:[%s13 + $0x84] sm:$0xf]
    %v3670 = vld [vmem:[%s13 + $0x88] sm:$0xf]
    %v3671 = vld [vmem:[%s13 + $0x8c] sm:$0xf]
    %v3672 = vld [vmem:[%s13 + $0x90] sm:$0xf]
    %v3673 = vld [vmem:[%s13 + $0x94] sm:$0x3]
    %v3712 = vunpack.c.l.b16 %v3636
    %v3713 = vunpack.c.l.b16 %v3637
    %v3714 = vunpack.c.l.b16 %v3638
    %v3715 = vunpack.c.l.b16 %v3639
    %v3716 = vunpack.c.l.b16 %v3640
    %v3717 = vunpack.c.l.b16 %v3641
    %v3718 = vunpack.c.l.b16 %v3642
    %v3719 = vunpack.c.l.b16 %v3643
    %v3720 = vunpack.c.l.b16 %v3644
    %v3721 = vunpack.c.l.b16 %v3645
    %v3722 = vunpack.c.l.b16 %v3646
    %v3723 = vunpack.c.l.b16 %v3647
    %v3724 = vunpack.c.l.b16 %v3648
    %v3725 = vunpack.c.l.b16 %v3649
    %v3726 = vunpack.c.l.b16 %v3650
    %v3727 = vunpack.c.l.b16 %v3651
    %v3728 = vunpack.c.l.b16 %v3652
    %v3729 = vunpack.c.l.b16 %v3653
    %v3730 = vunpack.c.l.b16 %v3654
    %v3731 = vunpack.c.l.b16 %v3655
    %v3732 = vunpack.c.l.b16 %v3656
    %v3733 = vunpack.c.l.b16 %v3657
    %v3734 = vunpack.c.l.b16 %v3658
    %v3735 = vunpack.c.l.b16 %v3659
    %v3736 = vunpack.c.l.b16 %v3660
    %v3737 = vunpack.c.l.b16 %v3661
    %v3738 = vunpack.c.l.b16 %v3662
    %v3739 = vunpack.c.l.b16 %v3663
    %v3740 = vunpack.c.l.b16 %v3664
    %v3741 = vunpack.c.l.b16 %v3665
    %v3742 = vunpack.c.l.b16 %v3666
    %v3743 = vunpack.c.l.b16 %v3667
    %v3744 = vunpack.c.l.b16 %v3668
    %v3745 = vunpack.c.l.b16 %v3669
    %v3746 = vunpack.c.l.b16 %v3670
    %v3747 = vunpack.c.l.b16 %v3671
    %v3748 = vunpack.c.l.b16 %v3672
    %v3749 = vunpack.c.l.b16 %v3673
    %v3750 = vpack.c.b16 %v3713, %v3712
    %v3751 = vpack.c.b16 %v3715, %v3714
    %v3752 = vpack.c.b16 %v3717, %v3716
    %v3753 = vpack.c.b16 %v3719, %v3718
    %v3754 = vpack.c.b16 %v3721, %v3720
    %v3755 = vpack.c.b16 %v3723, %v3722
    %v3756 = vpack.c.b16 %v3725, %v3724
    %v3757 = vpack.c.b16 %v3727, %v3726
    %v3758 = vpack.c.b16 %v3729, %v3728
    %v3759 = vpack.c.b16 %v3731, %v3730
    %v3760 = vpack.c.b16 %v3733, %v3732
    %v3761 = vpack.c.b16 %v3735, %v3734
    %v3762 = vpack.c.b16 %v3737, %v3736
    %v3763 = vpack.c.b16 %v3739, %v3738
    %v3764 = vpack.c.b16 %v3741, %v3740
    %v3765 = vpack.c.b16 %v3743, %v3742
    %v3766 = vpack.c.b16 %v3745, %v3744
    %v3767 = vpack.c.b16 %v3747, %v3746
    %v3768 = vpack.c.b16 %v3749, %v3748
    %vm3787 = vcmask 359424
    %v3789 = vsel %vm3787, %v3542, 0
    %v3792 = vsel %vm3787, %v3545, 0
    %v3795 = vsel %vm3787, %v3548, 0
    %v3798 = vsel %vm3787, %v3551, 0
    %v3801 = vsel %vm3787, %v3554, 0
    %v3804 = vsel %vm3787, %v3557, 0
    %v3807 = vsel %vm3787, %v3560, 0
    %v3810 = vsel %vm3787, %v3563, 0
    %v3813 = vsel %vm3787, %v3566, 0
    %v3816 = vsel %vm3787, %v3569, 0
    %v3819 = vsel %vm3787, %v3572, 0
    %v3822 = vsel %vm3787, %v3575, 0
    %v3825 = vsel %vm3787, %v3578, 0
    %v3828 = vsel %vm3787, %v3581, 0
    %v3831 = vsel %vm3787, %v3584, 0
    %v3834 = vsel %vm3787, %v3587, 0
    %v3837 = vsel %vm3787, %v3590, 0
    %v3840 = vsel %vm3787, %v3593, 0
    %v3843 = vsel %vm3787, %v3596, 0
    %v3846 = vsel %vm3787, %v3599, 0
    %v3849 = vsel %vm3787, %v3602, 0
    %v3852 = vsel %vm3787, %v3605, 0
    %v3855 = vsel %vm3787, %v3608, 0
    %v3858 = vsel %vm3787, %v3611, 0
    %v3861 = vsel %vm3787, %v3614, 0
    %v3864 = vsel %vm3787, %v3617, 0
    %v3867 = vsel %vm3787, %v3620, 0
    %v3870 = vsel %vm3787, %v3623, 0
    %v3873 = vsel %vm3787, %v3626, 0
    %v3876 = vsel %vm3787, %v3629, 0
    %v3879 = vsel %vm3787, %v3632, 0
    %v3882 = vsel %vm3787, %v3635, 0
    %vm3884 = vcmask 1045504
    %v3886 = vsel %vm3884, %v3768, 0
    %3888 = vmatprep.subr.bf16.mxu0 0
    %3889 = vmatpush1.bf16.msra.mxu0 %v3750
    %3890 = vmatprep.subr.bf16.mxu0 0
    %3891 = vmatpush1.bf16.msra.mxu0 %v3751
    %3892 = vmatprep.subr.bf16.mxu0 0
    %3893 = vmatpush1.bf16.msra.mxu0 %v3752
    %3894 = vmatprep.subr.bf16.mxu0 0
    %3895 = vmatpush1.bf16.msra.mxu0 %v3753
    %3896 = vmatprep.subr.bf16.mxu0 0
    %3897 = vmatpush1.bf16.msra.mxu0 %v3754
    %3898 = vmatprep.subr.bf16.mxu0 0
    %3899 = vmatpush1.bf16.msra.mxu0 %v3755
    %3900 = vmatprep.subr.bf16.mxu0 0
    %3901 = vmatpush1.bf16.msra.mxu0 %v3756
    %3902 = vmatprep.subr.bf16.mxu0 0
    %3903 = vmatpush1.bf16.msra.mxu0 %v3757
    %3904 = vmatprep.subr.bf16.mxu0 0
    %3905 = vmatpush1.bf16.msra.mxu0 %v3758
    %3906 = vmatprep.subr.bf16.mxu0 0
    %3907 = vmatpush1.bf16.msra.mxu0 %v3759
    %3908 = vmatprep.subr.bf16.mxu0 0
    %3909 = vmatpush1.bf16.msra.mxu0 %v3760
    %3910 = vmatprep.subr.bf16.mxu0 0
    %3911 = vmatpush1.bf16.msra.mxu0 %v3761
    %3912 = vmatprep.subr.bf16.mxu0 0
    %3913 = vmatpush1.bf16.msra.mxu0 %v3762
    %3914 = vmatprep.subr.bf16.mxu0 0
    %3915 = vmatpush1.bf16.msra.mxu0 %v3763
    %3916 = vmatprep.subr.bf16.mxu0 0
    %3917 = vmatpush1.bf16.msra.mxu0 %v3764
    %3918 = vmatprep.subr.bf16.mxu0 0
    %3919 = vmatpush1.bf16.msra.mxu0 %v3765
    %3920 = vmatprep.mubr.bf16.mxu0 %v3541
    %3921 = vmatmul.mubr.bf16.gmra.mrb[0].mxu0 %v3540
    %v3922 = vpop.f32.mrb[0].mxu0
    %v3923 = vadd.f32 0.0, %v3922
    %v3924 = vpop.f32.mrb[0].mxu0
    %v3925 = vpop.f32.mrb[0].mxu0
    %v3926 = vadd.f32 0.0, %v3925
    %v3927 = vpop.f32.mrb[0].mxu0
    %3928 = vmatprep.mubr.bf16.mxu0 %v3544
    %3929 = vmatmul.mubr.bf16.gmra.mrb[0].mxu0 %v3543
    %v3930 = vpop.f32.mrb[0].mxu0
    %v3931 = vadd.f32 0.0, %v3930
    %v3932 = vpop.f32.mrb[0].mxu0
    %v3933 = vpop.f32.mrb[0].mxu0
    %v3934 = vadd.f32 0.0, %v3933
    %v3935 = vpop.f32.mrb[0].mxu0
    %3936 = vmatprep.mubr.bf16.mxu0 %v3547
    %3937 = vmatmul.mubr.bf16.gmra.mrb[0].mxu0 %v3546
    %v3938 = vpop.f32.mrb[0].mxu0
    %v3939 = vadd.f32 0.0, %v3938
    %v3940 = vpop.f32.mrb[0].mxu0
    %v3941 = vpop.f32.mrb[0].mxu0
    %v3942 = vadd.f32 0.0, %v3941
    %v3943 = vpop.f32.mrb[0].mxu0
    %3944 = vmatprep.mubr.bf16.mxu0 %v3550
    %3945 = vmatmul.mubr.bf16.gmra.mrb[0].mxu0 %v3549
    %v3946 = vpop.f32.mrb[0].mxu0
    %v3947 = vadd.f32 0.0, %v3946
    %v3948 = vpop.f32.mrb[0].mxu0
    %v3949 = vpop.f32.mrb[0].mxu0
    %v3950 = vadd.f32 0.0, %v3949
    %v3951 = vpop.f32.mrb[0].mxu0
    %3952 = vmatprep.mubr.bf16.mxu0 %v3553
    %3953 = vmatmul.mubr.bf16.gmra.mrb[0].mxu0 %v3552
    %v3954 = vpop.f32.mrb[0].mxu0
    %v3955 = vadd.f32 0.0, %v3954
    %v3956 = vpop.f32.mrb[0].mxu0
    %v3957 = vpop.f32.mrb[0].mxu0
    %v3958 = vadd.f32 0.0, %v3957
    %v3959 = vpop.f32.mrb[0].mxu0
    %3960 = vmatprep.mubr.bf16.mxu0 %v3556
    %3961 = vmatmul.mubr.bf16.gmra.mrb[0].mxu0 %v3555
    %v3962 = vpop.f32.mrb[0].mxu0
    %v3963 = vadd.f32 0.0, %v3962
    %v3964 = vpop.f32.mrb[0].mxu0
    %v3965 = vpop.f32.mrb[0].mxu0
    %v3966 = vadd.f32 0.0, %v3965
    %v3967 = vpop.f32.mrb[0].mxu0
    %3968 = vmatprep.mubr.bf16.mxu0 %v3559
    %3969 = vmatmul.mubr.bf16.gmra.mrb[0].mxu0 %v3558
    %v3970 = vpop.f32.mrb[0].mxu0
    %v3971 = vadd.f32 0.0, %v3970
    %v3972 = vpop.f32.mrb[0].mxu0
    %v3973 = vpop.f32.mrb[0].mxu0
    %v3974 = vadd.f32 0.0, %v3973
    %v3975 = vpop.f32.mrb[0].mxu0
    %3976 = vmatprep.mubr.bf16.mxu0 %v3562
    %3977 = vmatmul.mubr.bf16.gmra.mrb[0].mxu0 %v3561
    %v3978 = vpop.f32.mrb[0].mxu0
    %v3979 = vadd.f32 0.0, %v3978
    %v3980 = vpop.f32.mrb[0].mxu0
    %v3981 = vpop.f32.mrb[0].mxu0
    %v3982 = vadd.f32 0.0, %v3981
    %v3983 = vpop.f32.mrb[0].mxu0
    %3984 = vmatprep.mubr.bf16.mxu0 %v3565
    %3985 = vmatmul.mubr.bf16.gmra.mrb[0].mxu0 %v3564
    %v3986 = vpop.f32.mrb[0].mxu0
    %v3987 = vadd.f32 0.0, %v3986
    %v3988 = vpop.f32.mrb[0].mxu0
    %v3989 = vpop.f32.mrb[0].mxu0
    %v3990 = vadd.f32 0.0, %v3989
    %v3991 = vpop.f32.mrb[0].mxu0
    %3992 = vmatprep.mubr.bf16.mxu0 %v3568
    %3993 = vmatmul.mubr.bf16.gmra.mrb[0].mxu0 %v3567
    %v3994 = vpop.f32.mrb[0].mxu0
    %v3995 = vadd.f32 0.0, %v3994
    %v3996 = vpop.f32.mrb[0].mxu0
    %v3997 = vpop.f32.mrb[0].mxu0
    %v3998 = vadd.f32 0.0, %v3997
    %v3999 = vpop.f32.mrb[0].mxu0
    %4000 = vmatprep.mubr.bf16.mxu0 %v3571
    %4001 = vmatmul.mubr.bf16.gmra.mrb[0].mxu0 %v3570
    %v4002 = vpop.f32.mrb[0].mxu0
    %v4003 = vadd.f32 0.0, %v4002
    %v4004 = vpop.f32.mrb[0].mxu0
    %v4005 = vpop.f32.mrb[0].mxu0
    %v4006 = vadd.f32 0.0, %v4005
    %v4007 = vpop.f32.mrb[0].mxu0
    %4008 = vmatprep.mubr.bf16.mxu0 %v3574
    %4009 = vmatmul.mubr.bf16.gmra.mrb[0].mxu0 %v3573
    %v4010 = vpop.f32.mrb[0].mxu0
    %v4011 = vadd.f32 0.0, %v4010
    %v4012 = vpop.f32.mrb[0].mxu0
    %v4013 = vpop.f32.mrb[0].mxu0
    %v4014 = vadd.f32 0.0, %v4013
    %v4015 = vpop.f32.mrb[0].mxu0
    %4016 = vmatprep.mubr.bf16.mxu0 %v3577
    %4017 = vmatmul.mubr.bf16.gmra.mrb[0].mxu0 %v3576
    %v4018 = vpop.f32.mrb[0].mxu0
    %v4019 = vadd.f32 0.0, %v4018
    %v4020 = vpop.f32.mrb[0].mxu0
    %v4021 = vpop.f32.mrb[0].mxu0
    %v4022 = vadd.f32 0.0, %v4021
    %v4023 = vpop.f32.mrb[0].mxu0
    %4024 = vmatprep.mubr.bf16.mxu0 %v3580
    %4025 = vmatmul.mubr.bf16.gmra.mrb[0].mxu0 %v3579
    %v4026 = vpop.f32.mrb[0].mxu0
    %v4027 = vadd.f32 0.0, %v4026
    %v4028 = vpop.f32.mrb[0].mxu0
    %v4029 = vpop.f32.mrb[0].mxu0
    %v4030 = vadd.f32 0.0, %v4029
    %v4031 = vpop.f32.mrb[0].mxu0
    %4032 = vmatprep.mubr.bf16.mxu0 %v3583
    %4033 = vmatmul.mubr.bf16.gmra.mrb[0].mxu0 %v3582
    %v4034 = vpop.f32.mrb[0].mxu0
    %v4035 = vadd.f32 0.0, %v4034
    %v4036 = vpop.f32.mrb[0].mxu0
    %v4037 = vpop.f32.mrb[0].mxu0
    %v4038 = vadd.f32 0.0, %v4037
    %v4039 = vpop.f32.mrb[0].mxu0
    %4040 = vmatprep.mubr.bf16.mxu0 %v3586
    %4041 = vmatmul.mubr.bf16.gmra.mrb[0].mxu0 %v3585
    %v4042 = vpop.f32.mrb[0].mxu0
    %v4043 = vadd.f32 0.0, %v4042
    %v4044 = vpop.f32.mrb[0].mxu0
    %v4045 = vpop.f32.mrb[0].mxu0
    %v4046 = vadd.f32 0.0, %v4045
    %v4047 = vpop.f32.mrb[0].mxu0
    %4048 = vmatprep.mubr.bf16.mxu0 %v3589
    %4049 = vmatmul.mubr.bf16.gmra.mrb[0].mxu0 %v3588
    %v4050 = vpop.f32.mrb[0].mxu0
    %v4051 = vadd.f32 0.0, %v4050
    %v4052 = vpop.f32.mrb[0].mxu0
    %v4053 = vpop.f32.mrb[0].mxu0
    %v4054 = vadd.f32 0.0, %v4053
    %v4055 = vpop.f32.mrb[0].mxu0
    %4056 = vmatprep.mubr.bf16.mxu0 %v3592
    %4057 = vmatmul.mubr.bf16.gmra.mrb[0].mxu0 %v3591
    %v4058 = vpop.f32.mrb[0].mxu0
    %v4059 = vadd.f32 0.0, %v4058
    %v4060 = vpop.f32.mrb[0].mxu0
    %v4061 = vpop.f32.mrb[0].mxu0
    %v4062 = vadd.f32 0.0, %v4061
    %v4063 = vpop.f32.mrb[0].mxu0
    %4064 = vmatprep.mubr.bf16.mxu0 %v3595
    %4065 = vmatmul.mubr.bf16.gmra.mrb[0].mxu0 %v3594
    %v4066 = vpop.f32.mrb[0].mxu0
    %v4067 = vadd.f32 0.0, %v4066
    %v4068 = vpop.f32.mrb[0].mxu0
    %v4069 = vpop.f32.mrb[0].mxu0
    %v4070 = vadd.f32 0.0, %v4069
    %v4071 = vpop.f32.mrb[0].mxu0
    %4072 = vmatprep.mubr.bf16.mxu0 %v3598
    %4073 = vmatmul.mubr.bf16.gmra.mrb[0].mxu0 %v3597
    %v4074 = vpop.f32.mrb[0].mxu0
    %v4075 = vadd.f32 0.0, %v4074
    %v4076 = vpop.f32.mrb[0].mxu0
    %v4077 = vpop.f32.mrb[0].mxu0
    %v4078 = vadd.f32 0.0, %v4077
    %v4079 = vpop.f32.mrb[0].mxu0
    %4080 = vmatprep.mubr.bf16.mxu0 %v3601
    %4081 = vmatmul.mubr.bf16.gmra.mrb[0].mxu0 %v3600
    %v4082 = vpop.f32.mrb[0].mxu0
    %v4083 = vadd.f32 0.0, %v4082
    %v4084 = vpop.f32.mrb[0].mxu0
    %v4085 = vpop.f32.mrb[0].mxu0
    %v4086 = vadd.f32 0.0, %v4085
    %v4087 = vpop.f32.mrb[0].mxu0
    %4088 = vmatprep.mubr.bf16.mxu0 %v3604
    %4089 = vmatmul.mubr.bf16.gmra.mrb[0].mxu0 %v3603
    %v4090 = vpop.f32.mrb[0].mxu0
    %v4091 = vadd.f32 0.0, %v4090
    %v4092 = vpop.f32.mrb[0].mxu0
    %v4093 = vpop.f32.mrb[0].mxu0
    %v4094 = vadd.f32 0.0, %v4093
    %v4095 = vpop.f32.mrb[0].mxu0
    %4096 = vmatprep.mubr.bf16.mxu0 %v3607
    %4097 = vmatmul.mubr.bf16.gmra.mrb[0].mxu0 %v3606
    %v4098 = vpop.f32.mrb[0].mxu0
    %v4099 = vadd.f32 0.0, %v4098
    %v4100 = vpop.f32.mrb[0].mxu0
    %v4101 = vpop.f32.mrb[0].mxu0
    %v4102 = vadd.f32 0.0, %v4101
    %v4103 = vpop.f32.mrb[0].mxu0
    %4104 = vmatprep.mubr.bf16.mxu0 %v3610
    %4105 = vmatmul.mubr.bf16.gmra.mrb[0].mxu0 %v3609
    %v4106 = vpop.f32.mrb[0].mxu0
    %v4107 = vadd.f32 0.0, %v4106
    %v4108 = vpop.f32.mrb[0].mxu0
    %v4109 = vpop.f32.mrb[0].mxu0
    %v4110 = vadd.f32 0.0, %v4109
    %v4111 = vpop.f32.mrb[0].mxu0
    %4112 = vmatprep.mubr.bf16.mxu0 %v3613
    %4113 = vmatmul.mubr.bf16.gmra.mrb[0].mxu0 %v3612
    %v4114 = vpop.f32.mrb[0].mxu0
    %v4115 = vadd.f32 0.0, %v4114
    %v4116 = vpop.f32.mrb[0].mxu0
    %v4117 = vpop.f32.mrb[0].mxu0
    %v4118 = vadd.f32 0.0, %v4117
    %v4119 = vpop.f32.mrb[0].mxu0
    %4120 = vmatprep.mubr.bf16.mxu0 %v3616
    %4121 = vmatmul.mubr.bf16.gmra.mrb[0].mxu0 %v3615
    %v4122 = vpop.f32.mrb[0].mxu0
    %v4123 = vadd.f32 0.0, %v4122
    %v4124 = vpop.f32.mrb[0].mxu0
    %v4125 = vpop.f32.mrb[0].mxu0
    %v4126 = vadd.f32 0.0, %v4125
    %v4127 = vpop.f32.mrb[0].mxu0
    %4128 = vmatprep.mubr.bf16.mxu0 %v3619
    %4129 = vmatmul.mubr.bf16.gmra.mrb[0].mxu0 %v3618
    %v4130 = vpop.f32.mrb[0].mxu0
    %v4131 = vadd.f32 0.0, %v4130
    %v4132 = vpop.f32.mrb[0].mxu0
    %v4133 = vpop.f32.mrb[0].mxu0
    %v4134 = vadd.f32 0.0, %v4133
    %v4135 = vpop.f32.mrb[0].mxu0
    %4136 = vmatprep.mubr.bf16.mxu0 %v3622
    %4137 = vmatmul.mubr.bf16.gmra.mrb[0].mxu0 %v3621
    %v4138 = vpop.f32.mrb[0].mxu0
    %v4139 = vadd.f32 0.0, %v4138
    %v4140 = vpop.f32.mrb[0].mxu0
    %v4141 = vpop.f32.mrb[0].mxu0
    %v4142 = vadd.f32 0.0, %v4141
    %v4143 = vpop.f32.mrb[0].mxu0
    %4144 = vmatprep.mubr.bf16.mxu0 %v3625
    %4145 = vmatmul.mubr.bf16.gmra.mrb[0].mxu0 %v3624
    %v4146 = vpop.f32.mrb[0].mxu0
    %v4147 = vadd.f32 0.0, %v4146
    %v4148 = vpop.f32.mrb[0].mxu0
    %v4149 = vpop.f32.mrb[0].mxu0
    %v4150 = vadd.f32 0.0, %v4149
    %v4151 = vpop.f32.mrb[0].mxu0
    %4152 = vmatprep.mubr.bf16.mxu0 %v3628
    %4153 = vmatmul.mubr.bf16.gmra.mrb[0].mxu0 %v3627
    %v4154 = vpop.f32.mrb[0].mxu0
    %v4155 = vadd.f32 0.0, %v4154
    %v4156 = vpop.f32.mrb[0].mxu0
    %v4157 = vpop.f32.mrb[0].mxu0
    %v4158 = vadd.f32 0.0, %v4157
    %v4159 = vpop.f32.mrb[0].mxu0
    %4160 = vmatprep.mubr.bf16.mxu0 %v3631
    %4161 = vmatmul.mubr.bf16.gmra.mrb[0].mxu0 %v3630
    %v4162 = vpop.f32.mrb[0].mxu0
    %v4163 = vadd.f32 0.0, %v4162
    %v4164 = vpop.f32.mrb[0].mxu0
    %v4165 = vpop.f32.mrb[0].mxu0
    %v4166 = vadd.f32 0.0, %v4165
    %v4167 = vpop.f32.mrb[0].mxu0
    %4168 = vmatprep.mubr.bf16.mxu0 %v3634
    %4169 = vmatmul.mubr.bf16.gmra.mrb[0].mxu0 %v3633
    %v4170 = vpop.f32.mrb[0].mxu0
    %v4171 = vadd.f32 0.0, %v4170
    %v4172 = vpop.f32.mrb[0].mxu0
    %v4173 = vpop.f32.mrb[0].mxu0
    %v4174 = vadd.f32 0.0, %v4173
    %v4175 = vpop.f32.mrb[0].mxu0
    %4176 = vdwg.mxu0
    %4177 = vmatprep.subr.bf16.mxu0 0
    %4178 = vmatpush1.bf16.msra.mxu0 %v3766
    %4179 = vmatprep.subr.bf16.mxu0 0
    %4180 = vmatpush1.bf16.msra.mxu0 %v3767
    %4181 = vmatprep.subr.bf16.mxu0 0
    %4182 = vmatpush1.bf16.msra.mxu0 %v3886
    %4183 = vmatprep.subr.bf16.mxu0 0
    %4184 = vmatpush1.bf16.msra.mxu0 0
    %4185 = vmatprep.subr.bf16.mxu0 0
    %4186 = vmatpush1.bf16.msra.mxu0 0
    %4187 = vmatprep.subr.bf16.mxu0 0
    %4188 = vmatpush1.bf16.msra.mxu0 0
    %4189 = vmatprep.subr.bf16.mxu0 0
    %4190 = vmatpush1.bf16.msra.mxu0 0
    %4191 = vmatprep.subr.bf16.mxu0 0
    %4192 = vmatpush1.bf16.msra.mxu0 0
    %4193 = vmatprep.subr.bf16.mxu0 0
    %4194 = vmatpush1.bf16.msra.mxu0 0
    %4195 = vmatprep.subr.bf16.mxu0 0
    %4196 = vmatpush1.bf16.msra.mxu0 0
    %4197 = vmatprep.subr.bf16.mxu0 0
    %4198 = vmatpush1.bf16.msra.mxu0 0
    %4199 = vmatprep.subr.bf16.mxu0 0
    %4200 = vmatpush1.bf16.msra.mxu0 0
    %4201 = vmatprep.subr.bf16.mxu0 0
    %4202 = vmatpush1.bf16.msra.mxu0 0
    %4203 = vmatprep.subr.bf16.mxu0 0
    %4204 = vmatpush1.bf16.msra.mxu0 0
    %4205 = vmatprep.subr.bf16.mxu0 0
    %4206 = vmatpush1.bf16.msra.mxu0 0
    %4207 = vmatprep.subr.bf16.mxu0 0
    %4208 = vmatpush1.bf16.msra.mxu0 0
    %4209 = vmatprep.mubr.bf16.mxu0 0
    %4210 = vmatmul.mubr.bf16.gmra.mrb[0].mxu0 %v3789
    %v4211 = vpop.f32.mrb[0].mxu0
    %v4212 = vadd.f32 %v3923, %v4211
    %v4213 = vpop.f32.mrb[0].mxu0
    %v4214 = vpop.f32.mrb[0].mxu0
    %v4215 = vadd.f32 %v3926, %v4214
    %v4216 = vpop.f32.mrb[0].mxu0
    %4217 = vmatprep.mubr.bf16.mxu0 0
    %4218 = vmatmul.mubr.bf16.gmra.mrb[0].mxu0 %v3792
    %v4219 = vpop.f32.mrb[0].mxu0
    %v4220 = vadd.f32 %v3931, %v4219
    %v4221 = vpop.f32.mrb[0].mxu0
    %v4222 = vpop.f32.mrb[0].mxu0
    %v4223 = vadd.f32 %v3934, %v4222
    %v4224 = vpop.f32.mrb[0].mxu0
    %4225 = vmatprep.mubr.bf16.mxu0 0
    %4226 = vmatmul.mubr.bf16.gmra.mrb[0].mxu0 %v3795
    %v4227 = vpop.f32.mrb[0].mxu0
    %v4228 = vadd.f32 %v3939, %v4227
    %v4229 = vpop.f32.mrb[0].mxu0
    %v4230 = vpop.f32.mrb[0].mxu0
    %v4231 = vadd.f32 %v3942, %v4230
    %v4232 = vpop.f32.mrb[0].mxu0
    %4233 = vmatprep.mubr.bf16.mxu0 0
    %4234 = vmatmul.mubr.bf16.gmra.mrb[0].mxu0 %v3798
    %v4235 = vpop.f32.mrb[0].mxu0
    %v4236 = vadd.f32 %v3947, %v4235
    %v4237 = vpop.f32.mrb[0].mxu0
    %v4238 = vpop.f32.mrb[0].mxu0
    %v4239 = vadd.f32 %v3950, %v4238
    %v4240 = vpop.f32.mrb[0].mxu0
    %4241 = vmatprep.mubr.bf16.mxu0 0
    %4242 = vmatmul.mubr.bf16.gmra.mrb[0].mxu0 %v3801
    %v4243 = vpop.f32.mrb[0].mxu0
    %v4244 = vadd.f32 %v3955, %v4243
    %v4245 = vpop.f32.mrb[0].mxu0
    %v4246 = vpop.f32.mrb[0].mxu0
    %v4247 = vadd.f32 %v3958, %v4246
    %v4248 = vpop.f32.mrb[0].mxu0
    %4249 = vmatprep.mubr.bf16.mxu0 0
    %4250 = vmatmul.mubr.bf16.gmra.mrb[0].mxu0 %v3804
    %v4251 = vpop.f32.mrb[0].mxu0
    %v4252 = vadd.f32 %v3963, %v4251
    %v4253 = vpop.f32.mrb[0].mxu0
    %v4254 = vpop.f32.mrb[0].mxu0
    %v4255 = vadd.f32 %v3966, %v4254
    %v4256 = vpop.f32.mrb[0].mxu0
    %4257 = vmatprep.mubr.bf16.mxu0 0
    %4258 = vmatmul.mubr.bf16.gmra.mrb[0].mxu0 %v3807
    %v4259 = vpop.f32.mrb[0].mxu0
    %v4260 = vadd.f32 %v3971, %v4259
    %v4261 = vpop.f32.mrb[0].mxu0
    %v4262 = vpop.f32.mrb[0].mxu0
    %v4263 = vadd.f32 %v3974, %v4262
    %v4264 = vpop.f32.mrb[0].mxu0
    %4265 = vmatprep.mubr.bf16.mxu0 0
    %4266 = vmatmul.mubr.bf16.gmra.mrb[0].mxu0 %v3810
    %v4267 = vpop.f32.mrb[0].mxu0
    %v4268 = vadd.f32 %v3979, %v4267
    %v4269 = vpop.f32.mrb[0].mxu0
    %v4270 = vpop.f32.mrb[0].mxu0
    %v4271 = vadd.f32 %v3982, %v4270
    %v4272 = vpop.f32.mrb[0].mxu0
    %4273 = vmatprep.mubr.bf16.mxu0 0
    %4274 = vmatmul.mubr.bf16.gmra.mrb[0].mxu0 %v3813
    %v4275 = vpop.f32.mrb[0].mxu0
    %v4276 = vadd.f32 %v3987, %v4275
    %v4277 = vpop.f32.mrb[0].mxu0
    %v4278 = vpop.f32.mrb[0].mxu0
    %v4279 = vadd.f32 %v3990, %v4278
    %v4280 = vpop.f32.mrb[0].mxu0
    %4281 = vmatprep.mubr.bf16.mxu0 0
    %4282 = vmatmul.mubr.bf16.gmra.mrb[0].mxu0 %v3816
    %v4283 = vpop.f32.mrb[0].mxu0
    %v4284 = vadd.f32 %v3995, %v4283
    %v4285 = vpop.f32.mrb[0].mxu0
    %v4286 = vpop.f32.mrb[0].mxu0
    %v4287 = vadd.f32 %v3998, %v4286
    %v4288 = vpop.f32.mrb[0].mxu0
    %4289 = vmatprep.mubr.bf16.mxu0 0
    %4290 = vmatmul.mubr.bf16.gmra.mrb[0].mxu0 %v3819
    %v4291 = vpop.f32.mrb[0].mxu0
    %v4292 = vadd.f32 %v4003, %v4291
    %v4293 = vpop.f32.mrb[0].mxu0
    %v4294 = vpop.f32.mrb[0].mxu0
    %v4295 = vadd.f32 %v4006, %v4294
    %v4296 = vpop.f32.mrb[0].mxu0
    %4297 = vmatprep.mubr.bf16.mxu0 0
    %4298 = vmatmul.mubr.bf16.gmra.mrb[0].mxu0 %v3822
    %v4299 = vpop.f32.mrb[0].mxu0
    %v4300 = vadd.f32 %v4011, %v4299
    %v4301 = vpop.f32.mrb[0].mxu0
    %v4302 = vpop.f32.mrb[0].mxu0
    %v4303 = vadd.f32 %v4014, %v4302
    %v4304 = vpop.f32.mrb[0].mxu0
    %4305 = vmatprep.mubr.bf16.mxu0 0
    %4306 = vmatmul.mubr.bf16.gmra.mrb[0].mxu0 %v3825
    %v4307 = vpop.f32.mrb[0].mxu0
    %v4308 = vadd.f32 %v4019, %v4307
    %v4309 = vpop.f32.mrb[0].mxu0
    %v4310 = vpop.f32.mrb[0].mxu0
    %v4311 = vadd.f32 %v4022, %v4310
    %v4312 = vpop.f32.mrb[0].mxu0
    %4313 = vmatprep.mubr.bf16.mxu0 0
    %4314 = vmatmul.mubr.bf16.gmra.mrb[0].mxu0 %v3828
    %v4315 = vpop.f32.mrb[0].mxu0
    %v4316 = vadd.f32 %v4027, %v4315
    %v4317 = vpop.f32.mrb[0].mxu0
    %v4318 = vpop.f32.mrb[0].mxu0
    %v4319 = vadd.f32 %v4030, %v4318
    %v4320 = vpop.f32.mrb[0].mxu0
    %4321 = vmatprep.mubr.bf16.mxu0 0
    %4322 = vmatmul.mubr.bf16.gmra.mrb[0].mxu0 %v3831
    %v4323 = vpop.f32.mrb[0].mxu0
    %v4324 = vadd.f32 %v4035, %v4323
    %v4325 = vpop.f32.mrb[0].mxu0
    %v4326 = vpop.f32.mrb[0].mxu0
    %v4327 = vadd.f32 %v4038, %v4326
    %v4328 = vpop.f32.mrb[0].mxu0
    %4329 = vmatprep.mubr.bf16.mxu0 0
    %4330 = vmatmul.mubr.bf16.gmra.mrb[0].mxu0 %v3834
    %v4331 = vpop.f32.mrb[0].mxu0
    %v4332 = vadd.f32 %v4043, %v4331
    %v4333 = vpop.f32.mrb[0].mxu0
    %v4334 = vpop.f32.mrb[0].mxu0
    %v4335 = vadd.f32 %v4046, %v4334
    %v4336 = vpop.f32.mrb[0].mxu0
    %4337 = vmatprep.mubr.bf16.mxu0 0
    %4338 = vmatmul.mubr.bf16.gmra.mrb[0].mxu0 %v3837
    %v4339 = vpop.f32.mrb[0].mxu0
    %v4340 = vadd.f32 %v4051, %v4339
    %v4341 = vpop.f32.mrb[0].mxu0
    %v4342 = vpop.f32.mrb[0].mxu0
    %v4343 = vadd.f32 %v4054, %v4342
    %v4344 = vpop.f32.mrb[0].mxu0
    %4345 = vmatprep.mubr.bf16.mxu0 0
    %4346 = vmatmul.mubr.bf16.gmra.mrb[0].mxu0 %v3840
    %v4347 = vpop.f32.mrb[0].mxu0
    %v4348 = vadd.f32 %v4059, %v4347
    %v4349 = vpop.f32.mrb[0].mxu0
    %v4350 = vpop.f32.mrb[0].mxu0
    %v4351 = vadd.f32 %v4062, %v4350
    %v4352 = vpop.f32.mrb[0].mxu0
    %4353 = vmatprep.mubr.bf16.mxu0 0
    %4354 = vmatmul.mubr.bf16.gmra.mrb[0].mxu0 %v3843
    %v4355 = vpop.f32.mrb[0].mxu0
    %v4356 = vadd.f32 %v4067, %v4355
    %v4357 = vpop.f32.mrb[0].mxu0
    %v4358 = vpop.f32.mrb[0].mxu0
    %v4359 = vadd.f32 %v4070, %v4358
    %v4360 = vpop.f32.mrb[0].mxu0
    %4361 = vmatprep.mubr.bf16.mxu0 0
    %4362 = vmatmul.mubr.bf16.gmra.mrb[0].mxu0 %v3846
    %v4363 = vpop.f32.mrb[0].mxu0
    %v4364 = vadd.f32 %v4075, %v4363
    %v4365 = vpop.f32.mrb[0].mxu0
    %v4366 = vpop.f32.mrb[0].mxu0
    %v4367 = vadd.f32 %v4078, %v4366
    %v4368 = vpop.f32.mrb[0].mxu0
    %4369 = vmatprep.mubr.bf16.mxu0 0
    %4370 = vmatmul.mubr.bf16.gmra.mrb[0].mxu0 %v3849
    %v4371 = vpop.f32.mrb[0].mxu0
    %v4372 = vadd.f32 %v4083, %v4371
    %v4373 = vpop.f32.mrb[0].mxu0
    %v4374 = vpop.f32.mrb[0].mxu0
    %v4375 = vadd.f32 %v4086, %v4374
    %v4376 = vpop.f32.mrb[0].mxu0
    %4377 = vmatprep.mubr.bf16.mxu0 0
    %4378 = vmatmul.mubr.bf16.gmra.mrb[0].mxu0 %v3852
    %v4379 = vpop.f32.mrb[0].mxu0
    %v4380 = vadd.f32 %v4091, %v4379
    %v4381 = vpop.f32.mrb[0].mxu0
    %v4382 = vpop.f32.mrb[0].mxu0
    %v4383 = vadd.f32 %v4094, %v4382
    %v4384 = vpop.f32.mrb[0].mxu0
    %4385 = vmatprep.mubr.bf16.mxu0 0
    %4386 = vmatmul.mubr.bf16.gmra.mrb[0].mxu0 %v3855
    %v4387 = vpop.f32.mrb[0].mxu0
    %v4388 = vadd.f32 %v4099, %v4387
    %v4389 = vpop.f32.mrb[0].mxu0
    %v4390 = vpop.f32.mrb[0].mxu0
    %v4391 = vadd.f32 %v4102, %v4390
    %v4392 = vpop.f32.mrb[0].mxu0
    %4393 = vmatprep.mubr.bf16.mxu0 0
    %4394 = vmatmul.mubr.bf16.gmra.mrb[0].mxu0 %v3858
    %v4395 = vpop.f32.mrb[0].mxu0
    %v4396 = vadd.f32 %v4107, %v4395
    %v4397 = vpop.f32.mrb[0].mxu0
    %v4398 = vpop.f32.mrb[0].mxu0
    %v4399 = vadd.f32 %v4110, %v4398
    %v4400 = vpop.f32.mrb[0].mxu0
    %4401 = vmatprep.mubr.bf16.mxu0 0
    %4402 = vmatmul.mubr.bf16.gmra.mrb[0].mxu0 %v3861
    %v4403 = vpop.f32.mrb[0].mxu0
    %v4404 = vadd.f32 %v4115, %v4403
    %v4405 = vpop.f32.mrb[0].mxu0
    %v4406 = vpop.f32.mrb[0].mxu0
    %v4407 = vadd.f32 %v4118, %v4406
    %v4408 = vpop.f32.mrb[0].mxu0
    %4409 = vmatprep.mubr.bf16.mxu0 0
    %4410 = vmatmul.mubr.bf16.gmra.mrb[0].mxu0 %v3864
    %v4411 = vpop.f32.mrb[0].mxu0
    %v4412 = vadd.f32 %v4123, %v4411
    %v4413 = vpop.f32.mrb[0].mxu0
    %v4414 = vpop.f32.mrb[0].mxu0
    %v4415 = vadd.f32 %v4126, %v4414
    %v4416 = vpop.f32.mrb[0].mxu0
    %4417 = vmatprep.mubr.bf16.mxu0 0
    %4418 = vmatmul.mubr.bf16.gmra.mrb[0].mxu0 %v3867
    %v4419 = vpop.f32.mrb[0].mxu0
    %v4420 = vadd.f32 %v4131, %v4419
    %v4421 = vpop.f32.mrb[0].mxu0
    %v4422 = vpop.f32.mrb[0].mxu0
    %v4423 = vadd.f32 %v4134, %v4422
    %v4424 = vpop.f32.mrb[0].mxu0
    %4425 = vmatprep.mubr.bf16.mxu0 0
    %4426 = vmatmul.mubr.bf16.gmra.mrb[0].mxu0 %v3870
    %v4427 = vpop.f32.mrb[0].mxu0
    %v4428 = vadd.f32 %v4139, %v4427
    %v4429 = vpop.f32.mrb[0].mxu0
    %v4430 = vpop.f32.mrb[0].mxu0
    %v4431 = vadd.f32 %v4142, %v4430
    %v4432 = vpop.f32.mrb[0].mxu0
    %4433 = vmatprep.mubr.bf16.mxu0 0
    %4434 = vmatmul.mubr.bf16.gmra.mrb[0].mxu0 %v3873
    %v4435 = vpop.f32.mrb[0].mxu0
    %v4436 = vadd.f32 %v4147, %v4435
    %v4437 = vpop.f32.mrb[0].mxu0
    %v4438 = vpop.f32.mrb[0].mxu0
    %v4439 = vadd.f32 %v4150, %v4438
    %v4440 = vpop.f32.mrb[0].mxu0
    %4441 = vmatprep.mubr.bf16.mxu0 0
    %4442 = vmatmul.mubr.bf16.gmra.mrb[0].mxu0 %v3876
    %v4443 = vpop.f32.mrb[0].mxu0
    %v4444 = vadd.f32 %v4155, %v4443
    %v4445 = vpop.f32.mrb[0].mxu0
    %v4446 = vpop.f32.mrb[0].mxu0
    %v4447 = vadd.f32 %v4158, %v4446
    %v4448 = vpop.f32.mrb[0].mxu0
    %4449 = vmatprep.mubr.bf16.mxu0 0
    %4450 = vmatmul.mubr.bf16.gmra.mrb[0].mxu0 %v3879
    %v4451 = vpop.f32.mrb[0].mxu0
    %v4452 = vadd.f32 %v4163, %v4451
    %v4453 = vpop.f32.mrb[0].mxu0
    %v4454 = vpop.f32.mrb[0].mxu0
    %v4455 = vadd.f32 %v4166, %v4454
    %v4456 = vpop.f32.mrb[0].mxu0
    %4457 = vmatprep.mubr.bf16.mxu0 0
    %4458 = vmatmul.mubr.bf16.gmra.mrb[0].mxu0 %v3882
    %v4459 = vpop.f32.mrb[0].mxu0
    %v4460 = vadd.f32 %v4171, %v4459
    %v4461 = vpop.f32.mrb[0].mxu0
    %v4462 = vpop.f32.mrb[0].mxu0
    %v4463 = vadd.f32 %v4174, %v4462
    %v4464 = vpop.f32.mrb[0].mxu0
    %4465 = vdwg.mxu0
    %v4466 = vand.u32 %v462, 15
    %vm4467 = vcmp.eq.s32.totalorder %v847, %v4466
    %vm4468 = vcmp.eq.s32.totalorder %v848, %v4466
    %vm4469 = vcmp.eq.s32.totalorder %v849, %v4466
    %vm4470 = vcmp.eq.s32.totalorder %v850, %v4466
    %vm4471 = vcmp.eq.s32.totalorder %v851, %v4466
    %vm4472 = vcmp.eq.s32.totalorder %v852, %v4466
    %vm4473 = vcmp.eq.s32.totalorder %v853, %v4466
    %vm4474 = vcmp.eq.s32.totalorder %v854, %v4466
    %vm4475 = vcmp.eq.s32.totalorder %v855, %v4466
    %vm4476 = vcmp.eq.s32.totalorder %v856, %v4466
    %vm4477 = vcmp.eq.s32.totalorder %v857, %v4466
    %vm4478 = vcmp.eq.s32.totalorder %v858, %v4466
    %vm4479 = vcmp.eq.s32.totalorder %v859, %v4466
    %vm4480 = vcmp.eq.s32.totalorder %v860, %v4466
    %vm4481 = vcmp.eq.s32.totalorder %v861, %v4466
    %vm4482 = vcmp.eq.s32.totalorder %v862, %v4466
    %vm4483 = vcmp.eq.s32.totalorder %v863, %v4466
    %vm4484 = vcmp.eq.s32.totalorder %v864, %v4466
    %vm4485 = vcmp.eq.s32.totalorder %v865, %v4466
    %vm4486 = vcmp.eq.s32.totalorder %v866, %v4466
    %vm4487 = vcmp.eq.s32.totalorder %v867, %v4466
    %vm4488 = vcmp.eq.s32.totalorder %v868, %v4466
    %vm4489 = vcmp.eq.s32.totalorder %v869, %v4466
    %vm4490 = vcmp.eq.s32.totalorder %v870, %v4466
    %vm4491 = vcmp.eq.s32.totalorder %v871, %v4466
    %vm4492 = vcmp.eq.s32.totalorder %v872, %v4466
    %vm4493 = vcmp.eq.s32.totalorder %v873, %v4466
    %vm4494 = vcmp.eq.s32.totalorder %v874, %v4466
    %vm4495 = vcmp.eq.s32.totalorder %v875, %v4466
    %vm4496 = vcmp.eq.s32.totalorder %v876, %v4466
    %vm4497 = vcmp.eq.s32.totalorder %v877, %v4466
    %vm4498 = vcmp.eq.s32.totalorder %v878, %v4466
    %vm4499 = vcmp.eq.s32.totalorder %v879, %v4466
    %vm4500 = vcmp.eq.s32.totalorder %v880, %v4466
    %vm4501 = vcmp.eq.s32.totalorder %v881, %v4466
    %vm4502 = vcmp.eq.s32.totalorder %v882, %v4466
    %vm4503 = vcmp.eq.s32.totalorder %v883, %v4466
    %vm4504 = vcmp.eq.s32.totalorder %v884, %v4466
    %vm4505 = vcmp.eq.s32.totalorder %v885, %v4466
    %vm4506 = vcmp.eq.s32.totalorder %v886, %v4466
    %vm4507 = vcmp.eq.s32.totalorder %v887, %v4466
    %vm4508 = vcmp.eq.s32.totalorder %v888, %v4466
    %vm4509 = vcmp.eq.s32.totalorder %v889, %v4466
    %vm4510 = vcmp.eq.s32.totalorder %v890, %v4466
    %vm4511 = vcmp.eq.s32.totalorder %v891, %v4466
    %vm4512 = vcmp.eq.s32.totalorder %v892, %v4466
    %vm4513 = vcmp.eq.s32.totalorder %v893, %v4466
    %vm4514 = vcmp.eq.s32.totalorder %v894, %v4466
    %vm4515 = vcmp.eq.s32.totalorder %v895, %v4466
    %vm4516 = vcmp.eq.s32.totalorder %v896, %v4466
    %vm4517 = vcmp.eq.s32.totalorder %v897, %v4466
    %vm4518 = vcmp.eq.s32.totalorder %v898, %v4466
    %vm4519 = vcmp.eq.s32.totalorder %v899, %v4466
    %vm4520 = vcmp.eq.s32.totalorder %v900, %v4466
    %vm4521 = vcmp.eq.s32.totalorder %v901, %v4466
    %vm4522 = vcmp.eq.s32.totalorder %v902, %v4466
    %vm4523 = vcmp.eq.s32.totalorder %v903, %v4466
    %vm4524 = vcmp.eq.s32.totalorder %v904, %v4466
    %vm4525 = vcmp.eq.s32.totalorder %v905, %v4466
    %vm4526 = vcmp.eq.s32.totalorder %v906, %v4466
    %vm4527 = vcmp.eq.s32.totalorder %v907, %v4466
    %vm4528 = vcmp.eq.s32.totalorder %v908, %v4466
    %vm4529 = vcmp.eq.s32.totalorder %v909, %v4466
    %vm4530 = vcmp.eq.s32.totalorder %v910, %v4466
    %v4531 = vsel %vm4467, 1, 0
    %v4532 = vsel %vm4468, 1, 0
    %v4533 = vsel %vm4469, 1, 0
    %v4534 = vsel %vm4470, 1, 0
    %v4535 = vsel %vm4471, 1, 0
    %v4536 = vsel %vm4472, 1, 0
    %v4537 = vsel %vm4473, 1, 0
    %v4538 = vsel %vm4474, 1, 0
    %v4539 = vsel %vm4475, 1, 0
    %v4540 = vsel %vm4476, 1, 0
    %v4541 = vsel %vm4477, 1, 0
    %v4542 = vsel %vm4478, 1, 0
    %v4543 = vsel %vm4479, 1, 0
    %v4544 = vsel %vm4480, 1, 0
    %v4545 = vsel %vm4481, 1, 0
    %v4546 = vsel %vm4482, 1, 0
    %v4547 = vsel %vm4483, 1, 0
    %v4548 = vsel %vm4484, 1, 0
    %v4549 = vsel %vm4485, 1, 0
    %v4550 = vsel %vm4486, 1, 0
    %v4551 = vsel %vm4487, 1, 0
    %v4552 = vsel %vm4488, 1, 0
    %v4553 = vsel %vm4489, 1, 0
    %v4554 = vsel %vm4490, 1, 0
    %v4555 = vsel %vm4491, 1, 0
    %v4556 = vsel %vm4492, 1, 0
    %v4557 = vsel %vm4493, 1, 0
    %v4558 = vsel %vm4494, 1, 0
    %v4559 = vsel %vm4495, 1, 0
    %v4560 = vsel %vm4496, 1, 0
    %v4561 = vsel %vm4497, 1, 0
    %v4562 = vsel %vm4498, 1, 0
    %v4563 = vsel %vm4499, 1, 0
    %v4564 = vsel %vm4500, 1, 0
    %v4565 = vsel %vm4501, 1, 0
    %v4566 = vsel %vm4502, 1, 0
    %v4567 = vsel %vm4503, 1, 0
    %v4568 = vsel %vm4504, 1, 0
    %v4569 = vsel %vm4505, 1, 0
    %v4570 = vsel %vm4506, 1, 0
    %v4571 = vsel %vm4507, 1, 0
    %v4572 = vsel %vm4508, 1, 0
    %v4573 = vsel %vm4509, 1, 0
    %v4574 = vsel %vm4510, 1, 0
    %v4575 = vsel %vm4511, 1, 0
    %v4576 = vsel %vm4512, 1, 0
    %v4577 = vsel %vm4513, 1, 0
    %v4578 = vsel %vm4514, 1, 0
    %v4579 = vsel %vm4515, 1, 0
    %v4580 = vsel %vm4516, 1, 0
    %v4581 = vsel %vm4517, 1, 0
    %v4582 = vsel %vm4518, 1, 0
    %v4583 = vsel %vm4519, 1, 0
    %v4584 = vsel %vm4520, 1, 0
    %v4585 = vsel %vm4521, 1, 0
    %v4586 = vsel %vm4522, 1, 0
    %v4587 = vsel %vm4523, 1, 0
    %v4588 = vsel %vm4524, 1, 0
    %v4589 = vsel %vm4525, 1, 0
    %v4590 = vsel %vm4526, 1, 0
    %v4591 = vsel %vm4527, 1, 0
    %v4592 = vsel %vm4528, 1, 0
    %v4593 = vsel %vm4529, 1, 0
    %v4594 = vsel %vm4530, 1, 0
    %v4595 = vcvt.s32.f32 %v4531
    %v4596 = vcvt.s32.f32 %v4532
    %v4597 = vcvt.s32.f32 %v4533
    %v4598 = vcvt.s32.f32 %v4534
    %v4599 = vcvt.s32.f32 %v4535
    %v4600 = vcvt.s32.f32 %v4536
    %v4601 = vcvt.s32.f32 %v4537
    %v4602 = vcvt.s32.f32 %v4538
    %v4603 = vcvt.s32.f32 %v4539
    %v4604 = vcvt.s32.f32 %v4540
    %v4605 = vcvt.s32.f32 %v4541
    %v4606 = vcvt.s32.f32 %v4542
    %v4607 = vcvt.s32.f32 %v4543
    %v4608 = vcvt.s32.f32 %v4544
    %v4609 = vcvt.s32.f32 %v4545
    %v4610 = vcvt.s32.f32 %v4546
    %v4611 = vcvt.s32.f32 %v4547
    %v4612 = vcvt.s32.f32 %v4548
    %v4613 = vcvt.s32.f32 %v4549
    %v4614 = vcvt.s32.f32 %v4550
    %v4615 = vcvt.s32.f32 %v4551
    %v4616 = vcvt.s32.f32 %v4552
    %v4617 = vcvt.s32.f32 %v4553
    %v4618 = vcvt.s32.f32 %v4554
    %v4619 = vcvt.s32.f32 %v4555
    %v4620 = vcvt.s32.f32 %v4556
    %v4621 = vcvt.s32.f32 %v4557
    %v4622 = vcvt.s32.f32 %v4558
    %v4623 = vcvt.s32.f32 %v4559
    %v4624 = vcvt.s32.f32 %v4560
    %v4625 = vcvt.s32.f32 %v4561
    %v4626 = vcvt.s32.f32 %v4562
    %v4627 = vcvt.s32.f32 %v4563
    %v4628 = vcvt.s32.f32 %v4564
    %v4629 = vcvt.s32.f32 %v4565
    %v4630 = vcvt.s32.f32 %v4566
    %v4631 = vcvt.s32.f32 %v4567
    %v4632 = vcvt.s32.f32 %v4568
    %v4633 = vcvt.s32.f32 %v4569
    %v4634 = vcvt.s32.f32 %v4570
    %v4635 = vcvt.s32.f32 %v4571
    %v4636 = vcvt.s32.f32 %v4572
    %v4637 = vcvt.s32.f32 %v4573
    %v4638 = vcvt.s32.f32 %v4574
    %v4639 = vcvt.s32.f32 %v4575
    %v4640 = vcvt.s32.f32 %v4576
    %v4641 = vcvt.s32.f32 %v4577
    %v4642 = vcvt.s32.f32 %v4578
    %v4643 = vcvt.s32.f32 %v4579
    %v4644 = vcvt.s32.f32 %v4580
    %v4645 = vcvt.s32.f32 %v4581
    %v4646 = vcvt.s32.f32 %v4582
    %v4647 = vcvt.s32.f32 %v4583
    %v4648 = vcvt.s32.f32 %v4584
    %v4649 = vcvt.s32.f32 %v4585
    %v4650 = vcvt.s32.f32 %v4586
    %v4651 = vcvt.s32.f32 %v4587
    %v4652 = vcvt.s32.f32 %v4588
    %v4653 = vcvt.s32.f32 %v4589
    %v4654 = vcvt.s32.f32 %v4590
    %v4655 = vcvt.s32.f32 %v4591
    %v4656 = vcvt.s32.f32 %v4592
    %v4657 = vcvt.s32.f32 %v4593
    %v4658 = vcvt.s32.f32 %v4594
    %v4659 = vmul.f32 %v4212, %v4595
    %v4660 = vmul.f32 %v4215, %v4596
    %v4661 = vmul.f32 %v4220, %v4597
    %v4662 = vmul.f32 %v4223, %v4598
    %v4663 = vmul.f32 %v4228, %v4599
    %v4664 = vmul.f32 %v4231, %v4600
    %v4665 = vmul.f32 %v4236, %v4601
    %v4666 = vmul.f32 %v4239, %v4602
    %v4667 = vmul.f32 %v4244, %v4603
    %v4668 = vmul.f32 %v4247, %v4604
    %v4669 = vmul.f32 %v4252, %v4605
    %v4670 = vmul.f32 %v4255, %v4606
    %v4671 = vmul.f32 %v4260, %v4607
    %v4672 = vmul.f32 %v4263, %v4608
    %v4673 = vmul.f32 %v4268, %v4609
    %v4674 = vmul.f32 %v4271, %v4610
    %v4675 = vmul.f32 %v4276, %v4611
    %v4676 = vmul.f32 %v4279, %v4612
    %v4677 = vmul.f32 %v4284, %v4613
    %v4678 = vmul.f32 %v4287, %v4614
    %v4679 = vmul.f32 %v4292, %v4615
    %v4680 = vmul.f32 %v4295, %v4616
    %v4681 = vmul.f32 %v4300, %v4617
    %v4682 = vmul.f32 %v4303, %v4618
    %v4683 = vmul.f32 %v4308, %v4619
    %v4684 = vmul.f32 %v4311, %v4620
    %v4685 = vmul.f32 %v4316, %v4621
    %v4686 = vmul.f32 %v4319, %v4622
    %v4687 = vmul.f32 %v4324, %v4623
    %v4688 = vmul.f32 %v4327, %v4624
    %v4689 = vmul.f32 %v4332, %v4625
    %v4690 = vmul.f32 %v4335, %v4626
    %v4691 = vmul.f32 %v4340, %v4627
    %v4692 = vmul.f32 %v4343, %v4628
    %v4693 = vmul.f32 %v4348, %v4629
    %v4694 = vmul.f32 %v4351, %v4630
    %v4695 = vmul.f32 %v4356, %v4631
    %v4696 = vmul.f32 %v4359, %v4632
    %v4697 = vmul.f32 %v4364, %v4633
    %v4698 = vmul.f32 %v4367, %v4634
    %v4699 = vmul.f32 %v4372, %v4635
    %v4700 = vmul.f32 %v4375, %v4636
    %v4701 = vmul.f32 %v4380, %v4637
    %v4702 = vmul.f32 %v4383, %v4638
    %v4703 = vmul.f32 %v4388, %v4639
    %v4704 = vmul.f32 %v4391, %v4640
    %v4705 = vmul.f32 %v4396, %v4641
    %v4706 = vmul.f32 %v4399, %v4642
    %v4707 = vmul.f32 %v4404, %v4643
    %v4708 = vmul.f32 %v4407, %v4644
    %v4709 = vmul.f32 %v4412, %v4645
    %v4710 = vmul.f32 %v4415, %v4646
    %v4711 = vmul.f32 %v4420, %v4647
    %v4712 = vmul.f32 %v4423, %v4648
    %v4713 = vmul.f32 %v4428, %v4649
    %v4714 = vmul.f32 %v4431, %v4650
    %v4715 = vmul.f32 %v4436, %v4651
    %v4716 = vmul.f32 %v4439, %v4652
    %v4717 = vmul.f32 %v4444, %v4653
    %v4718 = vmul.f32 %v4447, %v4654
    %v4719 = vmul.f32 %v4452, %v4655
    %v4720 = vmul.f32 %v4455, %v4656
    %v4721 = vmul.f32 %v4460, %v4657
    %v4722 = vmul.f32 %v4463, %v4658
    %v4723 = vpack.c.bf16 %v4660, %v4659
    %v4724 = vpack.c.bf16 %v4662, %v4661
    %v4725 = vpack.c.bf16 %v4664, %v4663
    %v4726 = vpack.c.bf16 %v4666, %v4665
    %v4727 = vpack.c.bf16 %v4668, %v4667
    %v4728 = vpack.c.bf16 %v4670, %v4669
    %v4729 = vpack.c.bf16 %v4672, %v4671
    %v4730 = vpack.c.bf16 %v4674, %v4673
    %v4731 = vpack.c.bf16 %v4676, %v4675
    %v4732 = vpack.c.bf16 %v4678, %v4677
    %v4733 = vpack.c.bf16 %v4680, %v4679
    %v4734 = vpack.c.bf16 %v4682, %v4681
    %v4735 = vpack.c.bf16 %v4684, %v4683
    %v4736 = vpack.c.bf16 %v4686, %v4685
    %v4737 = vpack.c.bf16 %v4688, %v4687
    %v4738 = vpack.c.bf16 %v4690, %v4689
    %v4739 = vpack.c.bf16 %v4692, %v4691
    %v4740 = vpack.c.bf16 %v4694, %v4693
    %v4741 = vpack.c.bf16 %v4696, %v4695
    %v4742 = vpack.c.bf16 %v4698, %v4697
    %v4743 = vpack.c.bf16 %v4700, %v4699
    %v4744 = vpack.c.bf16 %v4702, %v4701
    %v4745 = vpack.c.bf16 %v4704, %v4703
    %v4746 = vpack.c.bf16 %v4706, %v4705
    %v4747 = vpack.c.bf16 %v4708, %v4707
    %v4748 = vpack.c.bf16 %v4710, %v4709
    %v4749 = vpack.c.bf16 %v4712, %v4711
    %v4750 = vpack.c.bf16 %v4714, %v4713
    %v4751 = vpack.c.bf16 %v4716, %v4715
    %v4752 = vpack.c.bf16 %v4718, %v4717
    %v4753 = vpack.c.bf16 %v4720, %v4719
    %v4754 = vpack.c.bf16 %v4722, %v4721
    %v4755 = vadd.s32 %v462, 384
    %v4756 = vshra.s32 %v462, 4
    %v4757 = vshra.s32 %v2962, 4
    %v4758 = vshra.s32 %v2963, 4
    %v4759 = vshra.s32 %v4755, 4
    %vm4760 = vcmp.eq.s32.totalorder %v4756, %v397
    %vm4761 = vcmp.eq.s32.totalorder %v4757, %v397
    %vm4762 = vcmp.eq.s32.totalorder %v4758, %v397
    %vm4763 = vcmp.eq.s32.totalorder %v4759, %v397
    %vm4764 = vcmp.eq.s32.totalorder %v4756, %v398
    %vm4765 = vcmp.eq.s32.totalorder %v4757, %v398
    %vm4766 = vcmp.eq.s32.totalorder %v4758, %v398
    %vm4767 = vcmp.eq.s32.totalorder %v4759, %v398
    %vm4768 = vcmp.eq.s32.totalorder %v4756, %v399
    %vm4769 = vcmp.eq.s32.totalorder %v4757, %v399
    %vm4770 = vcmp.eq.s32.totalorder %v4758, %v399
    %vm4771 = vcmp.eq.s32.totalorder %v4759, %v399
    %vm4772 = vcmp.eq.s32.totalorder %v4756, %v400
    %vm4773 = vcmp.eq.s32.totalorder %v4757, %v400
    %vm4774 = vcmp.eq.s32.totalorder %v4758, %v400
    %vm4775 = vcmp.eq.s32.totalorder %v4759, %v400
    %v4776 = vsel %vm4760, 1, 0
    %v4777 = vsel %vm4761, 1, 0
    %v4778 = vsel %vm4762, 1, 0
    %v4779 = vsel %vm4763, 1, 0
    %v4780 = vsel %vm4764, 1, 0
    %v4781 = vsel %vm4765, 1, 0
    %v4782 = vsel %vm4766, 1, 0
    %v4783 = vsel %vm4767, 1, 0
    %v4784 = vsel %vm4768, 1, 0
    %v4785 = vsel %vm4769, 1, 0
    %v4786 = vsel %vm4770, 1, 0
    %v4787 = vsel %vm4771, 1, 0
    %v4788 = vsel %vm4772, 1, 0
    %v4789 = vsel %vm4773, 1, 0
    %v4790 = vsel %vm4774, 1, 0
    %v4791 = vsel %vm4775, 1, 0
    %v4792 = vcvt.s32.f32 %v4776
    %v4793 = vcvt.s32.f32 %v4777
    %v4794 = vcvt.s32.f32 %v4778
    %v4795 = vcvt.s32.f32 %v4779
    %v4796 = vcvt.s32.f32 %v4780
    %v4797 = vcvt.s32.f32 %v4781
    %v4798 = vcvt.s32.f32 %v4782
    %v4799 = vcvt.s32.f32 %v4783
    %v4800 = vcvt.s32.f32 %v4784
    %v4801 = vcvt.s32.f32 %v4785
    %v4802 = vcvt.s32.f32 %v4786
    %v4803 = vcvt.s32.f32 %v4787
    %v4804 = vcvt.s32.f32 %v4788
    %v4805 = vcvt.s32.f32 %v4789
    %v4806 = vcvt.s32.f32 %v4790
    %v4807 = vcvt.s32.f32 %v4791
    %v4808 = vpack.c.bf16 %v4796, %v4792
    %v4809 = vpack.c.bf16 %v4797, %v4793
    %v4810 = vpack.c.bf16 %v4798, %v4794
    %v4811 = vpack.c.bf16 %v4799, %v4795
    %v4812 = vpack.c.bf16 %v4804, %v4800
    %v4813 = vpack.c.bf16 %v4805, %v4801
    %v4814 = vpack.c.bf16 %v4806, %v4802
    %v4815 = vpack.c.bf16 %v4807, %v4803
    %4816 = vmatprep.subr.bf16.mxu0 0
    %4817 = vmatpush1.bf16.msra.mxu0 %v4723
    %4818 = vmatprep.subr.bf16.mxu0 0
    %4819 = vmatpush1.bf16.msra.mxu0 %v4724
    %4820 = vmatprep.subr.bf16.mxu0 0
    %4821 = vmatpush1.bf16.msra.mxu0 %v4725
    %4822 = vmatprep.subr.bf16.mxu0 0
    %4823 = vmatpush1.bf16.msra.mxu0 %v4726
    %4824 = vmatprep.subr.bf16.mxu0 0
    %4825 = vmatpush1.bf16.msra.mxu0 %v4727
    %4826 = vmatprep.subr.bf16.mxu0 0
    %4827 = vmatpush1.bf16.msra.mxu0 %v4728
    %4828 = vmatprep.subr.bf16.mxu0 0
    %4829 = vmatpush1.bf16.msra.mxu0 %v4729
    %4830 = vmatprep.subr.bf16.mxu0 0
    %4831 = vmatpush1.bf16.msra.mxu0 %v4730
    %4832 = vmatprep.subr.bf16.mxu0 0
    %4833 = vmatpush1.bf16.msra.mxu0 %v4731
    %4834 = vmatprep.subr.bf16.mxu0 0
    %4835 = vmatpush1.bf16.msra.mxu0 %v4732
    %4836 = vmatprep.subr.bf16.mxu0 0
    %4837 = vmatpush1.bf16.msra.mxu0 %v4733
    %4838 = vmatprep.subr.bf16.mxu0 0
    %4839 = vmatpush1.bf16.msra.mxu0 %v4734
    %4840 = vmatprep.subr.bf16.mxu0 0
    %4841 = vmatpush1.bf16.msra.mxu0 %v4735
    %4842 = vmatprep.subr.bf16.mxu0 0
    %4843 = vmatpush1.bf16.msra.mxu0 %v4736
    %4844 = vmatprep.subr.bf16.mxu0 0
    %4845 = vmatpush1.bf16.msra.mxu0 %v4737
    %4846 = vmatprep.subr.bf16.mxu0 0
    %4847 = vmatpush1.bf16.msra.mxu0 %v4738
    %4848 = vmatprep.mubr.bf16.mxu0 %v4809
    %4849 = vmatmul.mubr.bf16.gmra.mrb[0].mxu0 %v4808
    %v4850 = vpop.f32.mrb[0].mxu0
    %v4851 = vadd.f32 0.0, %v4850
    %v4852 = vpop.f32.mrb[0].mxu0
    %v4853 = vpop.f32.mrb[0].mxu0
    %v4854 = vadd.f32 0.0, %v4853
    %v4855 = vpop.f32.mrb[0].mxu0
    %4856 = vmatprep.mubr.bf16.mxu0 %v4813
    %4857 = vmatmul.mubr.bf16.gmra.mrb[0].mxu0 %v4812
    %v4858 = vpop.f32.mrb[0].mxu0
    %v4859 = vadd.f32 0.0, %v4858
    %v4860 = vpop.f32.mrb[0].mxu0
    %v4861 = vpop.f32.mrb[0].mxu0
    %v4862 = vadd.f32 0.0, %v4861
    %v4863 = vpop.f32.mrb[0].mxu0
    %4864 = vdwg.mxu0
    %4865 = vmatprep.subr.bf16.mxu0 0
    %4866 = vmatpush1.bf16.msra.mxu0 %v4739
    %4867 = vmatprep.subr.bf16.mxu0 0
    %4868 = vmatpush1.bf16.msra.mxu0 %v4740
    %4869 = vmatprep.subr.bf16.mxu0 0
    %4870 = vmatpush1.bf16.msra.mxu0 %v4741
    %4871 = vmatprep.subr.bf16.mxu0 0
    %4872 = vmatpush1.bf16.msra.mxu0 %v4742
    %4873 = vmatprep.subr.bf16.mxu0 0
    %4874 = vmatpush1.bf16.msra.mxu0 %v4743
    %4875 = vmatprep.subr.bf16.mxu0 0
    %4876 = vmatpush1.bf16.msra.mxu0 %v4744
    %4877 = vmatprep.subr.bf16.mxu0 0
    %4878 = vmatpush1.bf16.msra.mxu0 %v4745
    %4879 = vmatprep.subr.bf16.mxu0 0
    %4880 = vmatpush1.bf16.msra.mxu0 %v4746
    %4881 = vmatprep.subr.bf16.mxu0 0
    %4882 = vmatpush1.bf16.msra.mxu0 %v4747
    %4883 = vmatprep.subr.bf16.mxu0 0
    %4884 = vmatpush1.bf16.msra.mxu0 %v4748
    %4885 = vmatprep.subr.bf16.mxu0 0
    %4886 = vmatpush1.bf16.msra.mxu0 %v4749
    %4887 = vmatprep.subr.bf16.mxu0 0
    %4888 = vmatpush1.bf16.msra.mxu0 %v4750
    %4889 = vmatprep.subr.bf16.mxu0 0
    %4890 = vmatpush1.bf16.msra.mxu0 %v4751
    %4891 = vmatprep.subr.bf16.mxu0 0
    %4892 = vmatpush1.bf16.msra.mxu0 %v4752
    %4893 = vmatprep.subr.bf16.mxu0 0
    %4894 = vmatpush1.bf16.msra.mxu0 %v4753
    %4895 = vmatprep.subr.bf16.mxu0 0
    %4896 = vmatpush1.bf16.msra.mxu0 %v4754
    %4897 = vmatprep.mubr.bf16.mxu0 %v4811
    %4898 = vmatmul.mubr.bf16.gmra.mrb[0].mxu0 %v4810
    %v4899 = vpop.f32.mrb[0].mxu0
    %v4900 = vadd.f32 %v4851, %v4899
    %v4901 = vpop.f32.mrb[0].mxu0
    %v4902 = vpop.f32.mrb[0].mxu0
    %v4903 = vadd.f32 %v4854, %v4902
    %v4904 = vpop.f32.mrb[0].mxu0
    %4905 = vmatprep.mubr.bf16.mxu0 %v4815
    %4906 = vmatmul.mubr.bf16.gmra.mrb[0].mxu0 %v4814
    %v4907 = vpop.f32.mrb[0].mxu0
    %v4908 = vadd.f32 %v4859, %v4907
    %v4909 = vpop.f32.mrb[0].mxu0
    %v4910 = vpop.f32.mrb[0].mxu0
    %v4911 = vadd.f32 %v4862, %v4910
    %v4912 = vpop.f32.mrb[0].mxu0
    %4913 = vdwg.mxu0
    %v4914 = vshra.s32 %v462, 3
    %vm4915 = vcmp.eq.s32.totalorder %v463, %v4914
    %vm4916 = vcmp.eq.s32.totalorder %v464, %v4914
    %vm4917 = vcmp.eq.s32.totalorder %v465, %v4914
    %vm4918 = vcmp.eq.s32.totalorder %v466, %v4914
    %vm4919 = vcmp.eq.s32.totalorder %v467, %v4914
    %vm4920 = vcmp.eq.s32.totalorder %v468, %v4914
    %vm4921 = vcmp.eq.s32.totalorder %v469, %v4914
    %vm4922 = vcmp.eq.s32.totalorder %v470, %v4914
    %v4923 = vsel %vm4915, 1, 0
    %v4924 = vsel %vm4916, 1, 0
    %v4925 = vsel %vm4917, 1, 0
    %v4926 = vsel %vm4918, 1, 0
    %v4927 = vsel %vm4919, 1, 0
    %v4928 = vsel %vm4920, 1, 0
    %v4929 = vsel %vm4921, 1, 0
    %v4930 = vsel %vm4922, 1, 0
    %v4931 = vcvt.s32.f32 %v4923
    %v4932 = vcvt.s32.f32 %v4924
    %v4933 = vcvt.s32.f32 %v4925
    %v4934 = vcvt.s32.f32 %v4926
    %v4935 = vcvt.s32.f32 %v4927
    %v4936 = vcvt.s32.f32 %v4928
    %v4937 = vcvt.s32.f32 %v4929
    %v4938 = vcvt.s32.f32 %v4930
    %v4939 = vld [vmem:[%s3] sm:$0x3]
    %v4940 = vmul.f32 %v388, %v4931
    %v4941 = vmul.f32 %v389, %v4932
    %v4942 = vmul.f32 %v388, %v4933
    %v4943 = vmul.f32 %v389, %v4934
    %v4944 = vmul.f32 %v388, %v4935
    %v4945 = vmul.f32 %v389, %v4936
    %v4946 = vmul.f32 %v388, %v4937
    %v4947 = vmul.f32 %v389, %v4938
    %v4948 = vmul.f32 %v392, %v4931
    %v4949 = vmul.f32 %v393, %v4932
    %v4950 = vmul.f32 %v392, %v4933
    %v4951 = vmul.f32 %v393, %v4934
    %v4952 = vmul.f32 %v392, %v4935
    %v4953 = vmul.f32 %v393, %v4936
    %v4954 = vmul.f32 %v392, %v4937
    %v4955 = vmul.f32 %v393, %v4938
    %v4957 = vsel %vm1167, %v384, 0
    %v4960 = vsel %vm1167, %v385, 0
    %v4963 = vsel %vm1167, %v4940, 0
    %v4966 = vsel %vm1167, %v4941, 0
    %v4969 = vsel %vm1167, %v4942, 0
    %v4972 = vsel %vm1167, %v4943, 0
    %v4975 = vsel %vm1167, %v4944, 0
    %v4978 = vsel %vm1167, %v4945, 0
    %v4981 = vsel %vm1167, %v4946, 0
    %v4984 = vsel %vm1167, %v4947, 0
    %4986 = vmatprep.subr.mxu0 0.0
    %4987 = vmatpush1.xpose.msra.mxu0 %v4963
    %4988 = vmatprep.subr.mxu0 0.0
    %4989 = vmatpush1.xpose.msra.mxu0 %v4966
    %4990 = vmatprep.subr.mxu0 0.0
    %4991 = vmatpush1.xpose.msra.mxu0 %v4969
    %4992 = vmatprep.subr.mxu0 0.0
    %4993 = vmatpush1.xpose.msra.mxu0 %v4972
    %4994 = vmatprep.subr.mxu0 0.0
    %4995 = vmatpush1.xpose.msra.mxu0 %v4975
    %4996 = vmatprep.subr.mxu0 0.0
    %4997 = vmatpush1.xpose.msra.mxu0 %v4978
    %4998 = vmatprep.subr.mxu0 0.0
    %4999 = vmatpush1.xpose.msra.mxu0 %v4981
    %5000 = vmatprep.subr.mxu0 0.0
    %5001 = vmatpush1.xpose.msra.mxu0 %v4984
    %5002 = vmatprep.subr.mxu0 0.0
    %5003 = vmatpush1.xpose.msra.mxu0 0.0
    %5004 = vmatprep.subr.mxu0 0.0
    %5005 = vmatpush1.xpose.msra.mxu0 0.0
    %5006 = vmatprep.subr.mxu0 0.0
    %5007 = vmatpush1.xpose.msra.mxu0 0.0
    %5008 = vmatprep.subr.mxu0 0.0
    %5009 = vmatpush1.xpose.msra.mxu0 0.0
    %5010 = vmatprep.subr.mxu0 0.0
    %5011 = vmatpush1.xpose.msra.mxu0 0.0
    %5012 = vmatprep.subr.mxu0 0.0
    %5013 = vmatpush1.xpose.msra.mxu0 0.0
    %5014 = vmatprep.subr.mxu0 0.0
    %5015 = vmatpush1.xpose.msra.mxu0 0.0
    %5016 = vmatprep.subr.mxu0 0.0
    %5017 = vmatpush1.xpose.msra.mxu0 0.0
    %5018 = vmatprep.subr.mxu0 0.0
    %5019 = vmatpush1.xpose.msra.mxu0 0.0
    %5020 = vmatprep.subr.mxu0 0.0
    %5021 = vmatpush1.xpose.msra.mxu0 0.0
    %5022 = vmatprep.subr.mxu0 0.0
    %5023 = vmatpush1.xpose.msra.mxu0 0.0
    %5024 = vmatprep.subr.mxu0 0.0
    %5025 = vmatpush1.xpose.msra.mxu0 0.0
    %5026 = vmatprep.subr.mxu0 0.0
    %5027 = vmatpush1.xpose.msra.mxu0 0.0
    %5028 = vmatprep.subr.mxu0 0.0
    %5029 = vmatpush1.xpose.msra.mxu0 0.0
    %5030 = vmatprep.subr.mxu0 0.0
    %5031 = vmatpush1.xpose.msra.mxu0 0.0
    %5032 = vmatprep.subr.mxu0 0.0
    %5033 = vmatpush1.xpose.msra.mxu0 0.0
    %5034 = vmatprep.subr.mxu0 0.0
    %5035 = vmatpush1.xpose.msra.mxu0 0.0
    %5036 = vmatprep.subr.mxu0 0.0
    %5037 = vmatpush1.xpose.msra.mxu0 0.0
    %5038 = vmatprep.subr.mxu0 0.0
    %5039 = vmatpush1.xpose.msra.mxu0 0.0
    %5040 = vmatprep.subr.mxu0 0.0
    %5041 = vmatpush1.xpose.msra.mxu0 0.0
    %5042 = vmatprep.subr.mxu0 0.0
    %5043 = vmatpush1.xpose.msra.mxu0 0.0
    %5044 = vmatprep.subr.mxu0 0.0
    %5045 = vmatpush1.xpose.msra.mxu0 0.0
    %5046 = vmatprep.subr.mxu0 0.0
    %5047 = vmatpush1.xpose.msra.mxu0 0.0
    %5048 = vmatprep.subr.mxu0 0.0
    %5049 = vmatpush1.xpose.msra.mxu0 0.0
    %5050 = vmatprep.mubr.f32.mxu0 0.0
    %5051 = vmatmul.mubr.f32.gmra.mrb[0].mxu0 %v4957
    %v5052 = vpop.f32.mrb[0].mxu0
    %v5053 = vadd.f32 %v4900, %v5052
    %v5054 = vpop.f32.mrb[0].mxu0
    %5055 = vmatprep.mubr.f32.mxu0 0.0
    %5056 = vmatmul.mubr.f32.gmra.mrb[0].mxu0 %v4960
    %v5057 = vpop.f32.mrb[0].mxu0
    %v5058 = vadd.f32 %v4903, %v5057
    %v5059 = vpop.f32.mrb[0].mxu0
    %5060 = vdwg.mxu0
    %v5061 = vlaneseq
    %v5062 = vshrl.u32 %v5061, 7
    %v5063 = vsub.s32 0, %v5062
    %v5064 = vrot.slane %v4939, %v5063
    %v5065 = vadd.f32 %v5053, %v5064
    %v5066 = vadd.f32 %v5058, %v5064
    %v5067 = vsel %vm74, %v5065, -inf
    %5068 = vmax.xlane.f32.xlu0 %v5067
    %v5069 = vpop.xlane.xlu0 %5068
    %v5070 = vsel %vm74, %v5066, -inf
    %5071 = vmax.xlane.f32.xlu0 %v5070
    %v5072 = vpop.xlane.xlu0 %5071
    %v5073 = vsub.f32 %v5065, %v5069
    %v5074 = vsub.f32 %v5066, %v5072
    %v5075 = vmul.f32 %v5073, 1.442695
    %v5076 = vpow.pop %v5075
    %v5077 = vmul.f32 %v5074, 1.442695
    %v5078 = vpow.pop %v5077
    %v5079 = vsel %vm74, %v5076, 0.0
    %5080 = vadd.xlane.f32.xlu0 %v5079
    %v5081 = vpop.xlane.xlu0 %5080
    %v5082 = vsel %vm74, %v5078, 0.0
    %5083 = vadd.xlane.f32.xlu0 %v5082
    %v5084 = vpop.xlane.xlu0 %5083
    %v5085 = vrcp.pop %v5081
    %v5086 = vrcp.pop %v5084
    %v5087 = vmul.f32 %v5076, %v5085
    %v5088 = vmul.f32 %v5078, %v5086
    %vm5089 = vcmask 261248
    %v5090 = vsel %vm5089, %v5065, -inf
    %5091 = vmax.xlane.f32.xlu0 %v5090
    %v5092 = vpop.xlane.xlu0 %5091
    %v5093 = vsel %vm5089, %v5066, -inf
    %5094 = vmax.xlane.f32.xlu0 %v5093
    %v5095 = vpop.xlane.xlu0 %5094
    %v5096 = vsub.f32 %v5065, %v5092
    %v5097 = vsub.f32 %v5066, %v5095
    %v5098 = vmul.f32 %v5096, 1.442695
    %v5099 = vpow.pop %v5098
    %v5100 = vmul.f32 %v5097, 1.442695
    %v5101 = vpow.pop %v5100
    %5104 = vrot.lane.b32.xlu0 %v5099, 112
    %v5105 = vpop.permute.xlu0 %5104
    %5106 = vrot.lane.b32.xlu0 %v5101, 112
    %v5107 = vpop.permute.xlu0 %5106
    %v5110 = vsel %vm74, %v5105, 0.0
    %5111 = vadd.xlane.f32.xlu0 %v5110
    %v5112 = vpop.xlane.xlu0 %5111
    %v5113 = vsel %vm74, %v5107, 0.0
    %5114 = vadd.xlane.f32.xlu0 %v5113
    %v5115 = vpop.xlane.xlu0 %5114
    %v5116 = vrcp.pop %v5112
    %v5117 = vrcp.pop %v5115
    %v5118 = vmul.f32 %v5099, %v5116
    %v5119 = vmul.f32 %v5101, %v5117
    %vm5120 = vcmask 392448
    %v5121 = vsel %vm5120, %v5065, -inf
    %5122 = vmax.xlane.f32.xlu0 %v5121
    %v5123 = vpop.xlane.xlu0 %5122
    %v5124 = vsel %vm5120, %v5066, -inf
    %5125 = vmax.xlane.f32.xlu0 %v5124
    %v5126 = vpop.xlane.xlu0 %5125
    %v5127 = vsub.f32 %v5065, %v5123
    %v5128 = vsub.f32 %v5066, %v5126
    %v5129 = vmul.f32 %v5127, 1.442695
    %v5130 = vpow.pop %v5129
    %v5131 = vmul.f32 %v5128, 1.442695
    %v5132 = vpow.pop %v5131
    %5135 = vrot.lane.b32.xlu0 %v5130, 96
    %v5136 = vpop.permute.xlu0 %5135
    %5137 = vrot.lane.b32.xlu0 %v5132, 96
    %v5138 = vpop.permute.xlu0 %5137
    %v5141 = vsel %vm74, %v5136, 0.0
    %5142 = vadd.xlane.f32.xlu0 %v5141
    %v5143 = vpop.xlane.xlu0 %5142
    %v5144 = vsel %vm74, %v5138, 0.0
    %5145 = vadd.xlane.f32.xlu0 %v5144
    %v5146 = vpop.xlane.xlu0 %5145
    %v5147 = vrcp.pop %v5143
    %v5148 = vrcp.pop %v5146
    %v5149 = vmul.f32 %v5130, %v5147
    %v5150 = vmul.f32 %v5132, %v5148
    %vm5151 = vcmask 523648
    %v5152 = vsel %vm5151, %v5065, -inf
    %5153 = vmax.xlane.f32.xlu0 %v5152
    %v5154 = vpop.xlane.xlu0 %5153
    %v5155 = vsel %vm5151, %v5066, -inf
    %5156 = vmax.xlane.f32.xlu0 %v5155
    %v5157 = vpop.xlane.xlu0 %5156
    %v5158 = vsub.f32 %v5065, %v5154
    %v5159 = vsub.f32 %v5066, %v5157
    %v5160 = vmul.f32 %v5158, 1.442695
    %v5161 = vpow.pop %v5160
    %v5162 = vmul.f32 %v5159, 1.442695
    %v5163 = vpow.pop %v5162
    %5166 = vrot.lane.b32.xlu0 %v5161, 80
    %v5167 = vpop.permute.xlu0 %5166
    %5168 = vrot.lane.b32.xlu0 %v5163, 80
    %v5169 = vpop.permute.xlu0 %5168
    %v5172 = vsel %vm74, %v5167, 0.0
    %5173 = vadd.xlane.f32.xlu0 %v5172
    %v5174 = vpop.xlane.xlu0 %5173
    %v5175 = vsel %vm74, %v5169, 0.0
    %5176 = vadd.xlane.f32.xlu0 %v5175
    %v5177 = vpop.xlane.xlu0 %5176
    %v5178 = vrcp.pop %v5174
    %v5179 = vrcp.pop %v5177
    %v5180 = vmul.f32 %v5161, %v5178
    %v5181 = vmul.f32 %v5163, %v5179
    %v5182 = vsel %vm74, %v5087, %v5118
    %v5183 = vsel %vm74, %v5088, %v5119
    %v5184 = vsel %vm1167, %v5182, %v5149
    %v5185 = vsel %vm1167, %v5183, %v5150
    %vm5186 = vcmask 392192
    %v5187 = vsel %vm5186, %v5184, %v5180
    %v5188 = vsel %vm5186, %v5185, %v5181
    %vm5189 = vcmask 523264
    %v5191 = vsel %vm5189, %v5187, 0
    %v5194 = vsel %vm5189, %v5188, 0
    %5196 = vmatprep.subr.mxu0 0.0
    %5197 = vmatpush1.msra.mxu0 %v4948
    %5198 = vmatprep.subr.mxu0 0.0
    %5199 = vmatpush1.msra.mxu0 %v4949
    %5200 = vmatprep.subr.mxu0 0.0
    %5201 = vmatpush1.msra.mxu0 %v4950
    %5202 = vmatprep.subr.mxu0 0.0
    %5203 = vmatpush1.msra.mxu0 %v4951
    %5204 = vmatprep.subr.mxu0 0.0
    %5205 = vmatpush1.msra.mxu0 %v4952
    %5206 = vmatprep.subr.mxu0 0.0
    %5207 = vmatpush1.msra.mxu0 %v4953
    %5208 = vmatprep.subr.mxu0 0.0
    %5209 = vmatpush1.msra.mxu0 %v4954
    %5210 = vmatprep.subr.mxu0 0.0
    %5211 = vmatpush1.msra.mxu0 %v4955
    %5212 = vmatprep.subr.mxu0 0.0
    %5213 = vmatpush1.msra.mxu0 0.0
    %5214 = vmatprep.subr.mxu0 0.0
    %5215 = vmatpush1.msra.mxu0 0.0
    %5216 = vmatprep.subr.mxu0 0.0
    %5217 = vmatpush1.msra.mxu0 0.0
    %5218 = vmatprep.subr.mxu0 0.0
    %5219 = vmatpush1.msra.mxu0 0.0
    %5220 = vmatprep.subr.mxu0 0.0
    %5221 = vmatpush1.msra.mxu0 0.0
    %5222 = vmatprep.subr.mxu0 0.0
    %5223 = vmatpush1.msra.mxu0 0.0
    %5224 = vmatprep.subr.mxu0 0.0
    %5225 = vmatpush1.msra.mxu0 0.0
    %5226 = vmatprep.subr.mxu0 0.0
    %5227 = vmatpush1.msra.mxu0 0.0
    %5228 = vmatprep.subr.mxu0 0.0
    %5229 = vmatpush1.msra.mxu0 0.0
    %5230 = vmatprep.subr.mxu0 0.0
    %5231 = vmatpush1.msra.mxu0 0.0
    %5232 = vmatprep.subr.mxu0 0.0
    %5233 = vmatpush1.msra.mxu0 0.0
    %5234 = vmatprep.subr.mxu0 0.0
    %5235 = vmatpush1.msra.mxu0 0.0
    %5236 = vmatprep.subr.mxu0 0.0
    %5237 = vmatpush1.msra.mxu0 0.0
    %5238 = vmatprep.subr.mxu0 0.0
    %5239 = vmatpush1.msra.mxu0 0.0
    %5240 = vmatprep.subr.mxu0 0.0
    %5241 = vmatpush1.msra.mxu0 0.0
    %5242 = vmatprep.subr.mxu0 0.0
    %5243 = vmatpush1.msra.mxu0 0.0
    %5244 = vmatprep.subr.mxu0 0.0
    %5245 = vmatpush1.msra.mxu0 0.0
    %5246 = vmatprep.subr.mxu0 0.0
    %5247 = vmatpush1.msra.mxu0 0.0
    %5248 = vmatprep.subr.mxu0 0.0
    %5249 = vmatpush1.msra.mxu0 0.0
    %5250 = vmatprep.subr.mxu0 0.0
    %5251 = vmatpush1.msra.mxu0 0.0
    %5252 = vmatprep.subr.mxu0 0.0
    %5253 = vmatpush1.msra.mxu0 0.0
    %5254 = vmatprep.subr.mxu0 0.0
    %5255 = vmatpush1.msra.mxu0 0.0
    %5256 = vmatprep.subr.mxu0 0.0
    %5257 = vmatpush1.msra.mxu0 0.0
    %5258 = vmatprep.subr.mxu0 0.0
    %5259 = vmatpush1.msra.mxu0 0.0
    %5260 = vmatprep.mubr.f32.mxu0 0.0
    %5261 = vmatmul.mubr.f32.gmra.mrb[0].mxu0 %v5191
    %v5262 = vpop.f32.mrb[0].mxu0
    %v5263 = vadd.f32 0.0, %v5262
    %v5264 = vpop.f32.mrb[0].mxu0
    %5265 = vmatprep.mubr.f32.mxu0 0.0
    %5266 = vmatmul.mubr.f32.gmra.mrb[0].mxu0 %v5194
    %v5267 = vpop.f32.mrb[0].mxu0
    %v5268 = vadd.f32 0.0, %v5267
    %v5269 = vpop.f32.mrb[0].mxu0
    %5270 = vdwg.mxu0
    %v5271 = vmul.f32 %v390, %v4931
    %v5272 = vmul.f32 %v391, %v4932
    %v5273 = vmul.f32 %v390, %v4933
    %v5274 = vmul.f32 %v391, %v4934
    %v5275 = vmul.f32 %v390, %v4935
    %v5276 = vmul.f32 %v391, %v4936
    %v5277 = vmul.f32 %v390, %v4937
    %v5278 = vmul.f32 %v391, %v4938
    %v5279 = vmul.f32 %v394, %v4931
    %v5280 = vmul.f32 %v395, %v4932
    %v5281 = vmul.f32 %v394, %v4933
    %v5282 = vmul.f32 %v395, %v4934
    %v5283 = vmul.f32 %v394, %v4935
    %v5284 = vmul.f32 %v395, %v4936
    %v5285 = vmul.f32 %v394, %v4937
    %v5286 = vmul.f32 %v395, %v4938
    %v5288 = vsel %vm1167, %v386, 0
    %v5291 = vsel %vm1167, %v387, 0
    %v5294 = vsel %vm1167, %v5271, 0
    %v5297 = vsel %vm1167, %v5272, 0
    %v5300 = vsel %vm1167, %v5273, 0
    %v5303 = vsel %vm1167, %v5274, 0
    %v5306 = vsel %vm1167, %v5275, 0
    %v5309 = vsel %vm1167, %v5276, 0
    %v5312 = vsel %vm1167, %v5277, 0
    %v5315 = vsel %vm1167, %v5278, 0
    %5317 = vmatprep.subr.mxu0 0.0
    %5318 = vmatpush1.xpose.msra.mxu0 %v5294
    %5319 = vmatprep.subr.mxu0 0.0
    %5320 = vmatpush1.xpose.msra.mxu0 %v5297
    %5321 = vmatprep.subr.mxu0 0.0
    %5322 = vmatpush1.xpose.msra.mxu0 %v5300
    %5323 = vmatprep.subr.mxu0 0.0
    %5324 = vmatpush1.xpose.msra.mxu0 %v5303
    %5325 = vmatprep.subr.mxu0 0.0
    %5326 = vmatpush1.xpose.msra.mxu0 %v5306
    %5327 = vmatprep.subr.mxu0 0.0
    %5328 = vmatpush1.xpose.msra.mxu0 %v5309
    %5329 = vmatprep.subr.mxu0 0.0
    %5330 = vmatpush1.xpose.msra.mxu0 %v5312
    %5331 = vmatprep.subr.mxu0 0.0
    %5332 = vmatpush1.xpose.msra.mxu0 %v5315
    %5333 = vmatprep.subr.mxu0 0.0
    %5334 = vmatpush1.xpose.msra.mxu0 0.0
    %5335 = vmatprep.subr.mxu0 0.0
    %5336 = vmatpush1.xpose.msra.mxu0 0.0
    %5337 = vmatprep.subr.mxu0 0.0
    %5338 = vmatpush1.xpose.msra.mxu0 0.0
    %5339 = vmatprep.subr.mxu0 0.0
    %5340 = vmatpush1.xpose.msra.mxu0 0.0
    %5341 = vmatprep.subr.mxu0 0.0
    %5342 = vmatpush1.xpose.msra.mxu0 0.0
    %5343 = vmatprep.subr.mxu0 0.0
    %5344 = vmatpush1.xpose.msra.mxu0 0.0
    %5345 = vmatprep.subr.mxu0 0.0
    %5346 = vmatpush1.xpose.msra.mxu0 0.0
    %5347 = vmatprep.subr.mxu0 0.0
    %5348 = vmatpush1.xpose.msra.mxu0 0.0
    %5349 = vmatprep.subr.mxu0 0.0
    %5350 = vmatpush1.xpose.msra.mxu0 0.0
    %5351 = vmatprep.subr.mxu0 0.0
    %5352 = vmatpush1.xpose.msra.mxu0 0.0
    %5353 = vmatprep.subr.mxu0 0.0
    %5354 = vmatpush1.xpose.msra.mxu0 0.0
    %5355 = vmatprep.subr.mxu0 0.0
    %5356 = vmatpush1.xpose.msra.mxu0 0.0
    %5357 = vmatprep.subr.mxu0 0.0
    %5358 = vmatpush1.xpose.msra.mxu0 0.0
    %5359 = vmatprep.subr.mxu0 0.0
    %5360 = vmatpush1.xpose.msra.mxu0 0.0
    %5361 = vmatprep.subr.mxu0 0.0
    %5362 = vmatpush1.xpose.msra.mxu0 0.0
    %5363 = vmatprep.subr.mxu0 0.0
    %5364 = vmatpush1.xpose.msra.mxu0 0.0
    %5365 = vmatprep.subr.mxu0 0.0
    %5366 = vmatpush1.xpose.msra.mxu0 0.0
    %5367 = vmatprep.subr.mxu0 0.0
    %5368 = vmatpush1.xpose.msra.mxu0 0.0
    %5369 = vmatprep.subr.mxu0 0.0
    %5370 = vmatpush1.xpose.msra.mxu0 0.0
    %5371 = vmatprep.subr.mxu0 0.0
    %5372 = vmatpush1.xpose.msra.mxu0 0.0
    %5373 = vmatprep.subr.mxu0 0.0
    %5374 = vmatpush1.xpose.msra.mxu0 0.0
    %5375 = vmatprep.subr.mxu0 0.0
    %5376 = vmatpush1.xpose.msra.mxu0 0.0
    %5377 = vmatprep.subr.mxu0 0.0
    %5378 = vmatpush1.xpose.msra.mxu0 0.0
    %5379 = vmatprep.subr.mxu0 0.0
    %5380 = vmatpush1.xpose.msra.mxu0 0.0
    %5381 = vmatprep.mubr.f32.mxu0 0.0
    %5382 = vmatmul.mubr.f32.gmra.mrb[0].mxu0 %v5288
    %v5383 = vpop.f32.mrb[0].mxu0
    %v5384 = vadd.f32 %v4908, %v5383
    %v5385 = vpop.f32.mrb[0].mxu0
    %5386 = vmatprep.mubr.f32.mxu0 0.0
    %5387 = vmatmul.mubr.f32.gmra.mrb[0].mxu0 %v5291
    %v5388 = vpop.f32.mrb[0].mxu0
    %v5389 = vadd.f32 %v4911, %v5388
    %v5390 = vpop.f32.mrb[0].mxu0
    %5391 = vdwg.mxu0
    %v5392 = vlaneseq
    %v5393 = vshrl.u32 %v5392, 7
    %v5394 = vsub.s32 1, %v5393
    %v5395 = vrot.slane %v4939, %v5394
    %v5396 = vadd.f32 %v5384, %v5395
    %v5397 = vadd.f32 %v5389, %v5395
    %v5398 = vsel %vm74, %v5396, -inf
    %5399 = vmax.xlane.f32.xlu0 %v5398
    %v5400 = vpop.xlane.xlu0 %5399
    %v5401 = vsel %vm74, %v5397, -inf
    %5402 = vmax.xlane.f32.xlu0 %v5401
    %v5403 = vpop.xlane.xlu0 %5402
    %v5404 = vsub.f32 %v5396, %v5400
    %v5405 = vsub.f32 %v5397, %v5403
    %v5406 = vmul.f32 %v5404, 1.442695
    %v5407 = vpow.pop %v5406
    %v5408 = vmul.f32 %v5405, 1.442695
    %v5409 = vpow.pop %v5408
    %v5410 = vsel %vm74, %v5407, 0.0
    %5411 = vadd.xlane.f32.xlu0 %v5410
    %v5412 = vpop.xlane.xlu0 %5411
    %v5413 = vsel %vm74, %v5409, 0.0
    %5414 = vadd.xlane.f32.xlu0 %v5413
    %v5415 = vpop.xlane.xlu0 %5414
    %v5416 = vrcp.pop %v5412
    %v5417 = vrcp.pop %v5415
    %v5418 = vmul.f32 %v5407, %v5416
    %v5419 = vmul.f32 %v5409, %v5417
    %v5420 = vsel %vm5089, %v5396, -inf
    %5421 = vmax.xlane.f32.xlu0 %v5420
    %v5422 = vpop.xlane.xlu0 %5421
    %v5423 = vsel %vm5089, %v5397, -inf
    %5424 = vmax.xlane.f32.xlu0 %v5423
    %v5425 = vpop.xlane.xlu0 %5424
    %v5426 = vsub.f32 %v5396, %v5422
    %v5427 = vsub.f32 %v5397, %v5425
    %v5428 = vmul.f32 %v5426, 1.442695
    %v5429 = vpow.pop %v5428
    %v5430 = vmul.f32 %v5427, 1.442695
    %v5431 = vpow.pop %v5430
    %5434 = vrot.lane.b32.xlu0 %v5429, 112
    %v5435 = vpop.permute.xlu0 %5434
    %5436 = vrot.lane.b32.xlu0 %v5431, 112
    %v5437 = vpop.permute.xlu0 %5436
    %v5440 = vsel %vm74, %v5435, 0.0
    %5441 = vadd.xlane.f32.xlu0 %v5440
    %v5442 = vpop.xlane.xlu0 %5441
    %v5443 = vsel %vm74, %v5437, 0.0
    %5444 = vadd.xlane.f32.xlu0 %v5443
    %v5445 = vpop.xlane.xlu0 %5444
    %v5446 = vrcp.pop %v5442
    %v5447 = vrcp.pop %v5445
    %v5448 = vmul.f32 %v5429, %v5446
    %v5449 = vmul.f32 %v5431, %v5447
    %v5450 = vsel %vm5120, %v5396, -inf
    %5451 = vmax.xlane.f32.xlu0 %v5450
    %v5452 = vpop.xlane.xlu0 %5451
    %v5453 = vsel %vm5120, %v5397, -inf
    %5454 = vmax.xlane.f32.xlu0 %v5453
    %v5455 = vpop.xlane.xlu0 %5454
    %v5456 = vsub.f32 %v5396, %v5452
    %v5457 = vsub.f32 %v5397, %v5455
    %v5458 = vmul.f32 %v5456, 1.442695
    %v5459 = vpow.pop %v5458
    %v5460 = vmul.f32 %v5457, 1.442695
    %v5461 = vpow.pop %v5460
    %5464 = vrot.lane.b32.xlu0 %v5459, 96
    %v5465 = vpop.permute.xlu0 %5464
    %5466 = vrot.lane.b32.xlu0 %v5461, 96
    %v5467 = vpop.permute.xlu0 %5466
    %v5470 = vsel %vm74, %v5465, 0.0
    %5471 = vadd.xlane.f32.xlu0 %v5470
    %v5472 = vpop.xlane.xlu0 %5471
    %v5473 = vsel %vm74, %v5467, 0.0
    %5474 = vadd.xlane.f32.xlu0 %v5473
    %v5475 = vpop.xlane.xlu0 %5474
    %v5476 = vrcp.pop %v5472
    %v5477 = vrcp.pop %v5475
    %v5478 = vmul.f32 %v5459, %v5476
    %v5479 = vmul.f32 %v5461, %v5477
    %v5480 = vsel %vm5151, %v5396, -inf
    %5481 = vmax.xlane.f32.xlu0 %v5480
    %v5482 = vpop.xlane.xlu0 %5481
    %v5483 = vsel %vm5151, %v5397, -inf
    %5484 = vmax.xlane.f32.xlu0 %v5483
    %v5485 = vpop.xlane.xlu0 %5484
    %v5486 = vsub.f32 %v5396, %v5482
    %v5487 = vsub.f32 %v5397, %v5485
    %v5488 = vmul.f32 %v5486, 1.442695
    %v5489 = vpow.pop %v5488
    %v5490 = vmul.f32 %v5487, 1.442695
    %v5491 = vpow.pop %v5490
    %5494 = vrot.lane.b32.xlu0 %v5489, 80
    %v5495 = vpop.permute.xlu0 %5494
    %5496 = vrot.lane.b32.xlu0 %v5491, 80
    %v5497 = vpop.permute.xlu0 %5496
    %v5500 = vsel %vm74, %v5495, 0.0
    %5501 = vadd.xlane.f32.xlu0 %v5500
    %v5502 = vpop.xlane.xlu0 %5501
    %v5503 = vsel %vm74, %v5497, 0.0
    %5504 = vadd.xlane.f32.xlu0 %v5503
    %v5505 = vpop.xlane.xlu0 %5504
    %v5506 = vrcp.pop %v5502
    %v5507 = vrcp.pop %v5505
    %v5508 = vmul.f32 %v5489, %v5506
    %v5509 = vmul.f32 %v5491, %v5507
    %v5510 = vsel %vm74, %v5418, %v5448
    %v5511 = vsel %vm74, %v5419, %v5449
    %v5512 = vsel %vm1167, %v5510, %v5478
    %v5513 = vsel %vm1167, %v5511, %v5479
    %v5514 = vsel %vm5186, %v5512, %v5508
    %v5515 = vsel %vm5186, %v5513, %v5509
    %v5517 = vsel %vm5189, %v5514, 0
    %v5520 = vsel %vm5189, %v5515, 0
    %5522 = vmatprep.subr.mxu0 0.0
    %5523 = vmatpush1.msra.mxu0 %v5279
    %5524 = vmatprep.subr.mxu0 0.0
    %5525 = vmatpush1.msra.mxu0 %v5280
    %5526 = vmatprep.subr.mxu0 0.0
    %5527 = vmatpush1.msra.mxu0 %v5281
    %5528 = vmatprep.subr.mxu0 0.0
    %5529 = vmatpush1.msra.mxu0 %v5282
    %5530 = vmatprep.subr.mxu0 0.0
    %5531 = vmatpush1.msra.mxu0 %v5283
    %5532 = vmatprep.subr.mxu0 0.0
    %5533 = vmatpush1.msra.mxu0 %v5284
    %5534 = vmatprep.subr.mxu0 0.0
    %5535 = vmatpush1.msra.mxu0 %v5285
    %5536 = vmatprep.subr.mxu0 0.0
    %5537 = vmatpush1.msra.mxu0 %v5286
    %5538 = vmatprep.subr.mxu0 0.0
    %5539 = vmatpush1.msra.mxu0 0.0
    %5540 = vmatprep.subr.mxu0 0.0
    %5541 = vmatpush1.msra.mxu0 0.0
    %5542 = vmatprep.subr.mxu0 0.0
    %5543 = vmatpush1.msra.mxu0 0.0
    %5544 = vmatprep.subr.mxu0 0.0
    %5545 = vmatpush1.msra.mxu0 0.0
    %5546 = vmatprep.subr.mxu0 0.0
    %5547 = vmatpush1.msra.mxu0 0.0
    %5548 = vmatprep.subr.mxu0 0.0
    %5549 = vmatpush1.msra.mxu0 0.0
    %5550 = vmatprep.subr.mxu0 0.0
    %5551 = vmatpush1.msra.mxu0 0.0
    %5552 = vmatprep.subr.mxu0 0.0
    %5553 = vmatpush1.msra.mxu0 0.0
    %5554 = vmatprep.subr.mxu0 0.0
    %5555 = vmatpush1.msra.mxu0 0.0
    %5556 = vmatprep.subr.mxu0 0.0
    %5557 = vmatpush1.msra.mxu0 0.0
    %5558 = vmatprep.subr.mxu0 0.0
    %5559 = vmatpush1.msra.mxu0 0.0
    %5560 = vmatprep.subr.mxu0 0.0
    %5561 = vmatpush1.msra.mxu0 0.0
    %5562 = vmatprep.subr.mxu0 0.0
    %5563 = vmatpush1.msra.mxu0 0.0
    %5564 = vmatprep.subr.mxu0 0.0
    %5565 = vmatpush1.msra.mxu0 0.0
    %5566 = vmatprep.subr.mxu0 0.0
    %5567 = vmatpush1.msra.mxu0 0.0
    %5568 = vmatprep.subr.mxu0 0.0
    %5569 = vmatpush1.msra.mxu0 0.0
    %5570 = vmatprep.subr.mxu0 0.0
    %5571 = vmatpush1.msra.mxu0 0.0
    %5572 = vmatprep.subr.mxu0 0.0
    %5573 = vmatpush1.msra.mxu0 0.0
    %5574 = vmatprep.subr.mxu0 0.0
    %5575 = vmatpush1.msra.mxu0 0.0
    %5576 = vmatprep.subr.mxu0 0.0
    %5577 = vmatpush1.msra.mxu0 0.0
    %5578 = vmatprep.subr.mxu0 0.0
    %5579 = vmatpush1.msra.mxu0 0.0
    %5580 = vmatprep.subr.mxu0 0.0
    %5581 = vmatpush1.msra.mxu0 0.0
    %5582 = vmatprep.subr.mxu0 0.0
    %5583 = vmatpush1.msra.mxu0 0.0
    %5584 = vmatprep.subr.mxu0 0.0
    %5585 = vmatpush1.msra.mxu0 0.0
    %5586 = vmatprep.mubr.f32.mxu0 0.0
    %5587 = vmatmul.mubr.f32.gmra.mrb[0].mxu0 %v5517
    %v5588 = vpop.f32.mrb[0].mxu0
    %v5589 = vadd.f32 0.0, %v5588
    %v5590 = vpop.f32.mrb[0].mxu0
    %5591 = vmatprep.mubr.f32.mxu0 0.0
    %5592 = vmatmul.mubr.f32.gmra.mrb[0].mxu0 %v5520
    %v5593 = vpop.f32.mrb[0].mxu0
    %v5594 = vadd.f32 0.0, %v5593
    %v5595 = vpop.f32.mrb[0].mxu0
    %5596 = vdwg.mxu0
    %v5597 = vld [vmem:[%s11] sm:$0xff]
    %v5598 = vld [vmem:[%s11 + $0x8] sm:$0xff]
    %v5599 = vld [vmem:[%s11 + $0x10] sm:$0xff]
    %v5600 = vld [vmem:[%s11 + $0x18] sm:$0xff]
    %v5601 = vld [vmem:[%s12] sm:$0x1]
    %v5603 = vlaneseq
    %v5604 = vshrl.u32 %v5603, 7
    %v5605 = vsub.s32 0, %v5604
    %v5606 = vrot.slane %v5601, %v5605
    %v5609 = vsel %vm1167, %v5263, 0
    %v5612 = vsel %vm1167, %v5268, 0
    %v5615 = vsel %vm1167, %v5589, 0
    %v5618 = vsel %vm1167, %v5594, 0
    %5620 = vmatprep.subr.mxu0 0.0
    %5621 = vmatpush1.msra.mxu0 %v5597
    %5622 = vmatprep.subr.mxu0 0.0
    %5623 = vmatpush1.msra.mxu0 %v5598
    %5624 = vmatprep.subr.mxu0 0.0
    %5625 = vmatpush1.msra.mxu0 %v5599
    %5626 = vmatprep.subr.mxu0 0.0
    %5627 = vmatpush1.msra.mxu0 %v5600
    %5628 = vmatprep.subr.mxu0 0.0
    %5629 = vmatpush1.msra.mxu0 0.0
    %5630 = vmatprep.subr.mxu0 0.0
    %5631 = vmatpush1.msra.mxu0 0.0
    %5632 = vmatprep.subr.mxu0 0.0
    %5633 = vmatpush1.msra.mxu0 0.0
    %5634 = vmatprep.subr.mxu0 0.0
    %5635 = vmatpush1.msra.mxu0 0.0
    %5636 = vmatprep.subr.mxu0 0.0
    %5637 = vmatpush1.msra.mxu0 0.0
    %5638 = vmatprep.subr.mxu0 0.0
    %5639 = vmatpush1.msra.mxu0 0.0
    %5640 = vmatprep.subr.mxu0 0.0
    %5641 = vmatpush1.msra.mxu0 0.0
    %5642 = vmatprep.subr.mxu0 0.0
    %5643 = vmatpush1.msra.mxu0 0.0
    %5644 = vmatprep.subr.mxu0 0.0
    %5645 = vmatpush1.msra.mxu0 0.0
    %5646 = vmatprep.subr.mxu0 0.0
    %5647 = vmatpush1.msra.mxu0 0.0
    %5648 = vmatprep.subr.mxu0 0.0
    %5649 = vmatpush1.msra.mxu0 0.0
    %5650 = vmatprep.subr.mxu0 0.0
    %5651 = vmatpush1.msra.mxu0 0.0
    %5652 = vmatprep.subr.mxu0 0.0
    %5653 = vmatpush1.msra.mxu0 0.0
    %5654 = vmatprep.subr.mxu0 0.0
    %5655 = vmatpush1.msra.mxu0 0.0
    %5656 = vmatprep.subr.mxu0 0.0
    %5657 = vmatpush1.msra.mxu0 0.0
    %5658 = vmatprep.subr.mxu0 0.0
    %5659 = vmatpush1.msra.mxu0 0.0
    %5660 = vmatprep.subr.mxu0 0.0
    %5661 = vmatpush1.msra.mxu0 0.0
    %5662 = vmatprep.subr.mxu0 0.0
    %5663 = vmatpush1.msra.mxu0 0.0
    %5664 = vmatprep.subr.mxu0 0.0
    %5665 = vmatpush1.msra.mxu0 0.0
    %5666 = vmatprep.subr.mxu0 0.0
    %5667 = vmatpush1.msra.mxu0 0.0
    %5668 = vmatprep.subr.mxu0 0.0
    %5669 = vmatpush1.msra.mxu0 0.0
    %5670 = vmatprep.subr.mxu0 0.0
    %5671 = vmatpush1.msra.mxu0 0.0
    %5672 = vmatprep.subr.mxu0 0.0
    %5673 = vmatpush1.msra.mxu0 0.0
    %5674 = vmatprep.subr.mxu0 0.0
    %5675 = vmatpush1.msra.mxu0 0.0
    %5676 = vmatprep.subr.mxu0 0.0
    %5677 = vmatpush1.msra.mxu0 0.0
    %5678 = vmatprep.subr.mxu0 0.0
    %5679 = vmatpush1.msra.mxu0 0.0
    %5680 = vmatprep.subr.mxu0 0.0
    %5681 = vmatpush1.msra.mxu0 0.0
    %5682 = vmatprep.subr.mxu0 0.0
    %5683 = vmatpush1.msra.mxu0 0.0
    %5684 = vmatprep.mubr.f32.mxu0 0.0
    %5685 = vmatmul.mubr.f32.gmra.mrb[0].mxu0 %v5609
    %v5686 = vpop.f32.mrb[0].mxu0
    %v5687 = vadd.f32 %v5606, %v5686
    %v5688 = vpop.f32.mrb[0].mxu0
    %5689 = vmatprep.mubr.f32.mxu0 0.0
    %5690 = vmatmul.mubr.f32.gmra.mrb[0].mxu0 %v5612
    %v5691 = vpop.f32.mrb[0].mxu0
    %v5692 = vadd.f32 %v5606, %v5691
    %v5693 = vpop.f32.mrb[0].mxu0
    %5694 = vmatprep.mubr.f32.mxu0 0.0
    %5695 = vmatmul.mubr.f32.gmra.mrb[0].mxu0 %v5615
    %v5696 = vpop.f32.mrb[0].mxu0
    %v5697 = vadd.f32 %v5606, %v5696
    %v5698 = vpop.f32.mrb[0].mxu0
    %5699 = vmatprep.mubr.f32.mxu0 0.0
    %5700 = vmatmul.mubr.f32.gmra.mrb[0].mxu0 %v5618
    %v5701 = vpop.f32.mrb[0].mxu0
    %v5702 = vadd.f32 %v5606, %v5701
    %v5703 = vpop.f32.mrb[0].mxu0
    %5704 = vdwg.mxu0
    %5705 = vst.msk [vmem:[#allocation2] sm:$0xff] %vm1167, %v5687
    %5706 = vst.msk [vmem:[#allocation2 + $0x8] sm:$0xff] %vm1167, %v5692
    %5707 = vst.msk [vmem:[#allocation2 + $0x10] sm:$0xff] %vm1167, %v5697
    %5708 = vst.msk [vmem:[#allocation2 + $0x18] sm:$0xff] %vm1167, %v5702
    // Predicated region
    $region58: #{_lambda_.1} parent=1 // pred_check
      _
    $region59: #{_lambda_.1} parent=1 // pred_check_branch
      %5710 = sbr.rel (0) target = $region61
    $region60: #{_lambda_.1} parent=1 // pred_region
      %s5712 = ssub.s32 512, 512
      %5713 = vsyncadd [#allocation3], %s5712
      %s5714 = sshll.u32 [#allocation2], 4
      %s5715 = int_to_ptr.vmem [resolvable:$true] %s5714
      %5720 = dma.vmem_to_hbm [thread:$0]  %s5715, 512, %s14, [#allocation3], 128, 128, 8
    $region61: #{_lambda_.1} parent=1 // pred_fallthru
      _
    // Predicated region
    $region62: #{_lambda_.1} parent=1 // pred_check
      _
    $region63: #{_lambda_.1} parent=1 // pred_check_branch
      %5722 = sbr.rel (0) target = $region65
    $region64: #{_lambda_.1} parent=1 // pred_region
      %5723 = dma.done [#allocation3], 512
    $region65: #{_lambda_.1} parent=1 // pred_fallthru
      _
    %5724 = vsyncpa [#allocation3], 1

</llo_original>
